<compile_context>
chip_gen: v5e
topology: v5e:2x2
jax: 0.10.0
libtpu: 0.0.40
codegen_flags: <defaults>
</compile_context>

<pallas_src>
import functools
import math

import jax
import jax.numpy as jnp
from jax.experimental import pallas as pl
from jax.experimental.pallas import tpu as pltpu

MM_DTYPE = jnp.bfloat16   # MXU input dtype; accumulation stays f32
LN_EPS = 1e-5
NEG_INF = -1e9


# ----------------------------- in-kernel helpers ----------------------------

def _mm(a, b):
    """a @ b (contract (1,0)) on the MXU, bf16 inputs, f32 accumulation."""
    return jnp.dot(a.astype(MM_DTYPE), b.astype(MM_DTYPE),
                   preferred_element_type=jnp.float32)


def _mm_tb(a, b):
    """a @ b.T (contract last dims, (1,1)) on the MXU, bf16 in, f32 acc."""
    return jax.lax.dot_general(a.astype(MM_DTYPE), b.astype(MM_DTYPE),
                               (((1,), (1,)), ((), ())),
                               preferred_element_type=jnp.float32)


def _layernorm_f32(y, g, b):
    # PyTorch nn.LayerNorm semantics: biased variance, eps=1e-5, f32 math.
    mu = jnp.mean(y, axis=-1, keepdims=True)
    var = jnp.mean((y - mu) ** 2, axis=-1, keepdims=True)
    return (y - mu) * jax.lax.rsqrt(var + LN_EPS) * g + b


# ------------------------------ fused kernel --------------------------------

def _decoder_layer_kernel(*refs, T, d_model, nhead, dk, k, kv, rg,
                          has_mask, causal):
    """Whole DecoderLayer forward in one kernel invocation (grid=())."""
    it = iter(refs)
    tgt_ref = next(it)
    mem_ref = next(it)
    mask_ref = next(it) if has_mask else None

    def take_mha():
        return dict(wqT=next(it), bqT=next(it), wk=next(it), bk=next(it),
                    wvT=next(it), bvT=next(it), wo=next(it), bo=next(it),
                    g=next(it), b=next(it))

    m1 = take_mha()
    m2 = take_mha()
    w1_ref = next(it); b1_ref = next(it)
    w2_ref = next(it); b2_ref = next(it)
    g3_ref = next(it); b3_ref = next(it)
    out_ref = next(it)
    x1_scr = next(it)          # (T, d_model) f32 VMEM scratch for block-1 output

    scale = 1.0 / math.sqrt(dk)

    # Additive attention mask for the self-attention block, built ONCE.
    if has_mask:
        mask_add = mask_ref[...].astype(jnp.float32)
    elif causal:
        rows = jax.lax.broadcasted_iota(jnp.int32, (T, T), 0)
        cols = jax.lax.broadcasted_iota(jnp.int32, (T, T), 1)
        mask_add = jnp.where(rows >= cols, 0.0, NEG_INF).astype(jnp.float32)
    else:
        mask_add = None

    def mha_block(p, xqk_ref, xv_ref, residual, mask):
        """LayerNorm(MHA(xqk, xqk, xv) + residual) with the reference's
        scrambled head split: head h reads tokens [h*rg, (h+1)*rg) only."""
        y = residual + p["bo"][...].astype(jnp.float32)       # (T, d_model) f32
        for h in range(nhead):                                 # static unroll
            r0, r1 = h * rg, (h + 1) * rg
            xq = xqk_ref[r0:r1, :].astype(MM_DTYPE)            # (rg, d_model)
            xv = xv_ref[r0:r1, :].astype(MM_DTYPE)             # (rg, d_model)

            # scores: S = sum_j (Q block_j)^T @ (K block_j), K dim = dk total
            s = jnp.zeros((T, T), jnp.float32)
            for j in range(k):
                q_t = _mm_tb(p["wqT"][j], xq) + p["bqT"][j]    # (T, rg)
                k_b = _mm(xq, p["wk"][j]) + p["bk"][j]         # (rg, T)
                s = s + _mm(q_t, k_b)                          # (T, T) f32
            s = s * scale
            if mask is not None:
                s = s + mask

            # exact softmax over the key dim (reference semantics), f32 math
            s = s - jnp.max(s, axis=-1, keepdims=True)
            e = jnp.exp(s)
            probs = e / jnp.sum(e, axis=-1, keepdims=True)

            # fold Wo into the value path: W~_h = V_h^T @ Wo_h   (T, d_model)
            wt = jnp.zeros((T, d_model), jnp.float32)
            for j in range(kv):
                v_t = _mm_tb(p["wvT"][j], xv) + p["bvT"][j]    # (T, rg)
                wt = wt + _mm(v_t, p["wo"][h * kv + j])        # (T, d_model)

            y = y + _mm(probs, wt)                             # P_h @ W~_h
        return _layernorm_f32(y, p["g"][...].astype(jnp.float32),
                              p["b"][...].astype(jnp.float32))

    # --- block 1: self-attention (mask) + residual(tgt) + LayerNorm1 --------
    tgt_f32 = tgt_ref[...].astype(jnp.float32)
    x1 = mha_block(m1, tgt_ref, tgt_ref, tgt_f32, mask_add)
    x1_scr[...] = x1                     # scratch so block 2 can ref-slice V rows

    # --- block 2: cross-attention (Q=K=memory, V=x1, no mask) + LN2 ---------
    x2 = mha_block(m2, mem_ref, x1_scr, x1, None)

    # --- block 3: FFN (Linear2(ReLU(Linear1(x2)))) + residual + LN3 ---------
    hdn = _mm(x2, w1_ref[...]) + b1_ref[...].astype(jnp.float32)
    hdn = jnp.maximum(hdn, 0.0)
    y = _mm(hdn, w2_ref[...]) + b2_ref[...].astype(jnp.float32) + x2
    out_ref[...] = _layernorm_f32(
        y, g3_ref[...].astype(jnp.float32),
        b3_ref[...].astype(jnp.float32)).astype(out_ref.dtype)


# ------------------------------ wrapper --------------------------------------

def decoder_layer_forward(p, memory, tgt, mask=None, *, causal=False,
                          nhead, dk, dv):
    T, d_model = tgt.shape
    nk, nv = nhead * dk, nhead * dv
    assert T % nhead == 0 and nk % T == 0 and nv % T == 0, (
        "weight pre-split decomposition needs nhead | T, T | nhead*dk, T | nhead*dv")
    k, kv, rg = nk // T, nv // T, T // nhead
    has_mask = mask is not None

    kernel = functools.partial(
        _decoder_layer_kernel, T=T, d_model=d_model, nhead=nhead, dk=dk,
        k=k, kv=kv, rg=rg, has_mask=has_mask, causal=causal)

    args = [tgt, memory]
    if has_mask:
        args.append(mask)
    for m in (p["mha1"], p["mha2"]):
        args += [m["wqT"], m["bqT"], m["wk"], m["bk"],
                 m["wvT"], m["bvT"], m["wo"], m["bo"], m["g"], m["b"]]
    f = p["ffn"]
    args += [f["w1"], f["b1"], f["w2"], f["b2"], f["g"], f["b"]]

    return pl.pallas_call(
        kernel,
        out_shape=jax.ShapeDtypeStruct((T, d_model), tgt.dtype),
        scratch_shapes=[pltpu.VMEM((T, d_model), jnp.float32)],
    )(*args)


# ----------------- parameter init + static weight preparation ---------------

def _init_linear(key, d_in, d_out, scale=0.02):
    kw, kb = jax.random.split(key)
    # Weights stored bf16 (MXU-native, halves weight HBM traffic); biases f32.
    w = (jax.random.normal(kw, (d_in, d_out), jnp.float32) * scale).astype(MM_DTYPE)
    b = jax.random.normal(kb, (d_out,), jnp.float32) * scale
    return w, b


def _init_mha(key, d_model, nhead, dk, dv):
    k1, k2, k3, k4 = jax.random.split(key, 4)
    wq, bq = _init_linear(k1, d_model, dk * nhead)
    wk, bk = _init_linear(k2, d_model, dk * nhead)
    wv, bv = _init_linear(k3, d_model, dv * nhead)
    wo, bo = _init_linear(k4, dv * nhead, d_model)
    return dict(wq=wq, bq=bq, wk=wk, bk=bk, wv=wv, bv=bv, wo=wo, bo=bo)


def init_decoder_layer_params(key, d_model, nhead, d_ff, dk, dv):
    k1, k2, k3, k4 = jax.random.split(key, 4)
    w1, b1 = _init_linear(k3, d_model, d_ff)
    w2, b2 = _init_linear(k4, d_ff, d_model)
    return dict(
        mha1=_init_mha(k1, d_model, nhead, dk, dv),
        mha2=_init_mha(k2, d_model, nhead, dk, dv),
        ln1_g=jnp.ones((d_model,), jnp.float32), ln1_b=jnp.zeros((d_model,), jnp.float32),
        ln2_g=jnp.ones((d_model,), jnp.float32), ln2_b=jnp.zeros((d_model,), jnp.float32),
        ln3_g=jnp.ones((d_model,), jnp.float32), ln3_b=jnp.zeros((d_model,), jnp.float32),
        ff_w1=w1, ff_b1=b1, ff_w2=w2, ff_b2=b2,
    )


def prepare_decoder_params(raw, *, T, d_model, nhead, dk, dv):
    """Static (one-off) weight relayout so the kernel needs no in-kernel
    relayout/transpose to reproduce the reference's scrambled head split."""
    nk, nv = nhead * dk, nhead * dv
    k, kv, rg = nk // T, nv // T, T // nhead

    def prep_mha(m, g, b):
        wqT = m["wq"].reshape(d_model, k, T).transpose(1, 2, 0)    # (k, T, d_model)
        wkb = m["wk"].reshape(d_model, k, T).transpose(1, 0, 2)    # (k, d_model, T)
        wvT = m["wv"].reshape(d_model, kv, T).transpose(1, 2, 0)   # (kv, T, d_model)
        bqT = m["bq"].reshape(k, T, 1)
        bkb = m["bk"].reshape(k, 1, T)
        bvT = m["bv"].reshape(kv, T, 1)
        # Wo rows re-grouped so block (h, j) (needed by the folded value path)
        # is a contiguous (rg, d_model) slab: row r of block (h,j) is
        # Wo[h*dv + r*kv + j, :].
        wo_re = (m["wo"].reshape(nhead, rg, kv, d_model)
                 .transpose(0, 2, 1, 3).reshape(nhead * kv, rg, d_model))
        return dict(wqT=wqT, bqT=bqT, wk=wkb, bk=bkb, wvT=wvT, bvT=bvT,
                    wo=wo_re, bo=m["bo"].reshape(1, d_model),
                    g=g.reshape(1, d_model), b=b.reshape(1, d_model))

    d_ff = raw["ff_w1"].shape[1]
    return dict(
        mha1=prep_mha(raw["mha1"], raw["ln1_g"], raw["ln1_b"]),
        mha2=prep_mha(raw["mha2"], raw["ln2_g"], raw["ln2_b"]),
        ffn=dict(w1=raw["ff_w1"], b1=raw["ff_b1"].reshape(1, d_ff),
                 w2=raw["ff_w2"], b2=raw["ff_b2"].reshape(1, d_model),
                 g=raw["ln3_g"].reshape(1, d_model),
                 b=raw["ln3_b"].reshape(1, d_model)),
    )


# ---------------------------------- main ------------------------------------

if __name__ == "__main__":
    T, d_model, nhead, d_ff, dk, dv = 8, 32, 2, 64, 16, 16

    key = jax.random.PRNGKey(0)
    k_params, k_mem, k_tgt = jax.random.split(key, 3)

    raw_params = init_decoder_layer_params(k_params, d_model, nhead, d_ff, dk, dv)
    params = prepare_decoder_params(raw_params, T=T, d_model=d_model,
                                    nhead=nhead, dk=dk, dv=dv)

    memory = jax.random.normal(k_mem, (T, d_model), jnp.float32)
    tgt = jax.random.normal(k_tgt, (T, d_model), jnp.float32)

    # Self-attention uses an additive causal mask, generated IN-KERNEL via iota
    # (no (T,T) mask operand); cross-attention runs unmasked (reference wiring).
    fwd = jax.jit(functools.partial(decoder_layer_forward,
                                    nhead=nhead, dk=dk, dv=dv, causal=True))
    out = fwd(params, memory, tgt)
    out = jax.block_until_ready(out)

    assert out.shape == (T, d_model) and out.dtype == jnp.float32
    assert bool(jnp.all(jnp.isfinite(out)))
    print("KERNEL_OK")
</pallas_src>

<mosaic_0001>
module attributes {stable_mosaic.version = 11 : i64} {
  func.func @_decoder_layer_kernel(%arg0: memref<8x32xf32, #tpu.memory_space<vmem>>, %arg1: memref<8x32xf32, #tpu.memory_space<vmem>>, %arg2: memref<4x8x32xbf16, #tpu.memory_space<vmem>>, %arg3: memref<4x8x1xf32, #tpu.memory_space<vmem>>, %arg4: memref<4x32x8xbf16, #tpu.memory_space<vmem>>, %arg5: memref<4x1x8xf32, #tpu.memory_space<vmem>>, %arg6: memref<4x8x32xbf16, #tpu.memory_space<vmem>>, %arg7: memref<4x8x1xf32, #tpu.memory_space<vmem>>, %arg8: memref<8x4x32xbf16, #tpu.memory_space<vmem>>, %arg9: memref<1x32xf32, #tpu.memory_space<vmem>>, %arg10: memref<1x32xf32, #tpu.memory_space<vmem>>, %arg11: memref<1x32xf32, #tpu.memory_space<vmem>>, %arg12: memref<4x8x32xbf16, #tpu.memory_space<vmem>>, %arg13: memref<4x8x1xf32, #tpu.memory_space<vmem>>, %arg14: memref<4x32x8xbf16, #tpu.memory_space<vmem>>, %arg15: memref<4x1x8xf32, #tpu.memory_space<vmem>>, %arg16: memref<4x8x32xbf16, #tpu.memory_space<vmem>>, %arg17: memref<4x8x1xf32, #tpu.memory_space<vmem>>, %arg18: memref<8x4x32xbf16, #tpu.memory_space<vmem>>, %arg19: memref<1x32xf32, #tpu.memory_space<vmem>>, %arg20: memref<1x32xf32, #tpu.memory_space<vmem>>, %arg21: memref<1x32xf32, #tpu.memory_space<vmem>>, %arg22: memref<32x64xbf16, #tpu.memory_space<vmem>>, %arg23: memref<1x64xf32, #tpu.memory_space<vmem>>, %arg24: memref<64x32xbf16, #tpu.memory_space<vmem>>, %arg25: memref<1x32xf32, #tpu.memory_space<vmem>>, %arg26: memref<1x32xf32, #tpu.memory_space<vmem>>, %arg27: memref<1x32xf32, #tpu.memory_space<vmem>>, %arg28: memref<8x32xf32, #tpu.memory_space<vmem>>, %arg29: memref<8x32xf32, #tpu.memory_space<vmem>>) attributes {dimension_semantics = [], scalar_prefetch = 0 : i64, scratch_operands = 1 : i64, tpu.core_type = #tpu.core_type<tc>} {
    %0 = tpu.iota {dimensions = array<i32: 0>} : vector<8x8xi32>
    %1 = tpu.iota {dimensions = array<i32: 1>} : vector<8x8xi32>
    %2 = arith.cmpi sge, %0, %1 : vector<8x8xi32>
    %cst = arith.constant 0.000000e+00 : f32
    %cst_0 = arith.constant -1.000000e+09 : f32
    %3 = vector.broadcast %cst : f32 to vector<8x8xf32>
    %4 = vector.broadcast %cst_0 : f32 to vector<8x8xf32>
    %5 = arith.select %2, %3, %4 : vector<8x8xi1>, vector<8x8xf32>
    %c0 = arith.constant 0 : index
    %c0_1 = arith.constant 0 : index
    %6 = vector.load %arg0[%c0, %c0_1] : memref<8x32xf32, #tpu.memory_space<vmem>>, vector<8x32xf32>
    %c0_2 = arith.constant 0 : index
    %c0_3 = arith.constant 0 : index
    %7 = vector.load %arg9[%c0_2, %c0_3] : memref<1x32xf32, #tpu.memory_space<vmem>>, vector<1x32xf32>
    %8 = vector.broadcast %7 : vector<1x32xf32> to vector<8x32xf32>
    %9 = arith.addf %6, %8 : vector<8x32xf32>
    %c0_4 = arith.constant 0 : index
    %c0_5 = arith.constant 0 : index
    %10 = vector.load %arg0[%c0_4, %c0_5] : memref<8x32xf32, #tpu.memory_space<vmem>>, vector<4x32xf32>
    %11 = arith.truncf %10 : vector<4x32xf32> to vector<4x32xbf16>
    %c0_6 = arith.constant 0 : index
    %c0_7 = arith.constant 0 : index
    %12 = vector.load %arg0[%c0_6, %c0_7] : memref<8x32xf32, #tpu.memory_space<vmem>>, vector<4x32xf32>
    %13 = arith.truncf %12 : vector<4x32xf32> to vector<4x32xbf16>
    %cst_8 = arith.constant 0.000000e+00 : f32
    %14 = vector.broadcast %cst_8 : f32 to vector<8x8xf32>
    %c0_9 = arith.constant 0 : index
    %c0_10 = arith.constant 0 : index
    %c0_11 = arith.constant 0 : index
    %15 = vector.load %arg2[%c0_9, %c0_10, %c0_11] : memref<4x8x32xbf16, #tpu.memory_space<vmem>>, vector<1x8x32xbf16>
    %16 = vector.shape_cast %15 : vector<1x8x32xbf16> to vector<8x32xbf16>
    %cst_12 = arith.constant dense<0.000000e+00> : vector<8x4xf32>
    %17 = tpu.matmul %16, %11, %cst_12 {dimension_numbers = #tpu.dot_dimension_numbers<[1], [1], [0], [0], [0, 0, 1, 0], [], []>} : vector<8x32xbf16>, vector<4x32xbf16>, vector<8x4xf32> -> vector<8x4xf32>
    %c0_13 = arith.constant 0 : index
    %c0_14 = arith.constant 0 : index
    %c0_15 = arith.constant 0 : index
    %18 = vector.load %arg3[%c0_13, %c0_14, %c0_15] : memref<4x8x1xf32, #tpu.memory_space<vmem>>, vector<1x8x1xf32>
    %19 = vector.shape_cast %18 : vector<1x8x1xf32> to vector<8x1xf32>
    %20 = vector.broadcast %19 : vector<8x1xf32> to vector<8x4xf32>
    %21 = arith.addf %17, %20 : vector<8x4xf32>
    %c0_16 = arith.constant 0 : index
    %c0_17 = arith.constant 0 : index
    %c0_18 = arith.constant 0 : index
    %22 = vector.load %arg4[%c0_16, %c0_17, %c0_18] : memref<4x32x8xbf16, #tpu.memory_space<vmem>>, vector<1x32x8xbf16>
    %23 = vector.shape_cast %22 : vector<1x32x8xbf16> to vector<32x8xbf16>
    %cst_19 = arith.constant dense<0.000000e+00> : vector<4x8xf32>
    %24 = tpu.matmul %11, %23, %cst_19 {dimension_numbers = #tpu.dot_dimension_numbers<[1], [0], [0], [1], [0, 0, 1, 1], [], []>} : vector<4x32xbf16>, vector<32x8xbf16>, vector<4x8xf32> -> vector<4x8xf32>
    %c0_20 = arith.constant 0 : index
    %c0_21 = arith.constant 0 : index
    %c0_22 = arith.constant 0 : index
    %25 = vector.load %arg5[%c0_20, %c0_21, %c0_22] : memref<4x1x8xf32, #tpu.memory_space<vmem>>, vector<1x1x8xf32>
    %26 = vector.shape_cast %25 : vector<1x1x8xf32> to vector<1x8xf32>
    %27 = vector.broadcast %26 : vector<1x8xf32> to vector<4x8xf32>
    %28 = arith.addf %24, %27 : vector<4x8xf32>
    %29 = arith.truncf %21 : vector<8x4xf32> to vector<8x4xbf16>
    %30 = arith.truncf %28 : vector<4x8xf32> to vector<4x8xbf16>
    %cst_23 = arith.constant dense<0.000000e+00> : vector<8x8xf32>
    %31 = tpu.matmul %29, %30, %cst_23 {dimension_numbers = #tpu.dot_dimension_numbers<[1], [0], [0], [1], [0, 0, 1, 1], [], []>} : vector<8x4xbf16>, vector<4x8xbf16>, vector<8x8xf32> -> vector<8x8xf32>
    %32 = arith.addf %14, %31 : vector<8x8xf32>
    %c1 = arith.constant 1 : index
    %c0_24 = arith.constant 0 : index
    %c0_25 = arith.constant 0 : index
    %33 = vector.load %arg2[%c1, %c0_24, %c0_25] : memref<4x8x32xbf16, #tpu.memory_space<vmem>>, vector<1x8x32xbf16>
    %34 = vector.shape_cast %33 : vector<1x8x32xbf16> to vector<8x32xbf16>
    %cst_26 = arith.constant dense<0.000000e+00> : vector<8x4xf32>
    %35 = tpu.matmul %34, %11, %cst_26 {dimension_numbers = #tpu.dot_dimension_numbers<[1], [1], [0], [0], [0, 0, 1, 0], [], []>} : vector<8x32xbf16>, vector<4x32xbf16>, vector<8x4xf32> -> vector<8x4xf32>
    %c1_27 = arith.constant 1 : index
    %c0_28 = arith.constant 0 : index
    %c0_29 = arith.constant 0 : index
    %36 = vector.load %arg3[%c1_27, %c0_28, %c0_29] : memref<4x8x1xf32, #tpu.memory_space<vmem>>, vector<1x8x1xf32>
    %37 = vector.shape_cast %36 : vector<1x8x1xf32> to vector<8x1xf32>
    %38 = vector.broadcast %37 : vector<8x1xf32> to vector<8x4xf32>
    %39 = arith.addf %35, %38 : vector<8x4xf32>
    %c1_30 = arith.constant 1 : index
    %c0_31 = arith.constant 0 : index
    %c0_32 = arith.constant 0 : index
    %40 = vector.load %arg4[%c1_30, %c0_31, %c0_32] : memref<4x32x8xbf16, #tpu.memory_space<vmem>>, vector<1x32x8xbf16>
    %41 = vector.shape_cast %40 : vector<1x32x8xbf16> to vector<32x8xbf16>
    %cst_33 = arith.constant dense<0.000000e+00> : vector<4x8xf32>
    %42 = tpu.matmul %11, %41, %cst_33 {dimension_numbers = #tpu.dot_dimension_numbers<[1], [0], [0], [1], [0, 0, 1, 1], [], []>} : vector<4x32xbf16>, vector<32x8xbf16>, vector<4x8xf32> -> vector<4x8xf32>
    %c1_34 = arith.constant 1 : index
    %c0_35 = arith.constant 0 : index
    %c0_36 = arith.constant 0 : index
    %43 = vector.load %arg5[%c1_34, %c0_35, %c0_36] : memref<4x1x8xf32, #tpu.memory_space<vmem>>, vector<1x1x8xf32>
    %44 = vector.shape_cast %43 : vector<1x1x8xf32> to vector<1x8xf32>
    %45 = vector.broadcast %44 : vector<1x8xf32> to vector<4x8xf32>
    %46 = arith.addf %42, %45 : vector<4x8xf32>
    %47 = arith.truncf %39 : vector<8x4xf32> to vector<8x4xbf16>
    %48 = arith.truncf %46 : vector<4x8xf32> to vector<4x8xbf16>
    %cst_37 = arith.constant dense<0.000000e+00> : vector<8x8xf32>
    %49 = tpu.matmul %47, %48, %cst_37 {dimension_numbers = #tpu.dot_dimension_numbers<[1], [0], [0], [1], [0, 0, 1, 1], [], []>} : vector<8x4xbf16>, vector<4x8xbf16>, vector<8x8xf32> -> vector<8x8xf32>
    %50 = arith.addf %32, %49 : vector<8x8xf32>
    %c2 = arith.constant 2 : index
    %c0_38 = arith.constant 0 : index
    %c0_39 = arith.constant 0 : index
    %51 = vector.load %arg2[%c2, %c0_38, %c0_39] : memref<4x8x32xbf16, #tpu.memory_space<vmem>>, vector<1x8x32xbf16>
    %52 = vector.shape_cast %51 : vector<1x8x32xbf16> to vector<8x32xbf16>
    %cst_40 = arith.constant dense<0.000000e+00> : vector<8x4xf32>
    %53 = tpu.matmul %52, %11, %cst_40 {dimension_numbers = #tpu.dot_dimension_numbers<[1], [1], [0], [0], [0, 0, 1, 0], [], []>} : vector<8x32xbf16>, vector<4x32xbf16>, vector<8x4xf32> -> vector<8x4xf32>
    %c2_41 = arith.constant 2 : index
    %c0_42 = arith.constant 0 : index
    %c0_43 = arith.constant 0 : index
    %54 = vector.load %arg3[%c2_41, %c0_42, %c0_43] : memref<4x8x1xf32, #tpu.memory_space<vmem>>, vector<1x8x1xf32>
    %55 = vector.shape_cast %54 : vector<1x8x1xf32> to vector<8x1xf32>
    %56 = vector.broadcast %55 : vector<8x1xf32> to vector<8x4xf32>
    %57 = arith.addf %53, %56 : vector<8x4xf32>
    %c2_44 = arith.constant 2 : index
    %c0_45 = arith.constant 0 : index
    %c0_46 = arith.constant 0 : index
    %58 = vector.load %arg4[%c2_44, %c0_45, %c0_46] : memref<4x32x8xbf16, #tpu.memory_space<vmem>>, vector<1x32x8xbf16>
    %59 = vector.shape_cast %58 : vector<1x32x8xbf16> to vector<32x8xbf16>
    %cst_47 = arith.constant dense<0.000000e+00> : vector<4x8xf32>
    %60 = tpu.matmul %11, %59, %cst_47 {dimension_numbers = #tpu.dot_dimension_numbers<[1], [0], [0], [1], [0, 0, 1, 1], [], []>} : vector<4x32xbf16>, vector<32x8xbf16>, vector<4x8xf32> -> vector<4x8xf32>
    %c2_48 = arith.constant 2 : index
    %c0_49 = arith.constant 0 : index
    %c0_50 = arith.constant 0 : index
    %61 = vector.load %arg5[%c2_48, %c0_49, %c0_50] : memref<4x1x8xf32, #tpu.memory_space<vmem>>, vector<1x1x8xf32>
    %62 = vector.shape_cast %61 : vector<1x1x8xf32> to vector<1x8xf32>
    %63 = vector.broadcast %62 : vector<1x8xf32> to vector<4x8xf32>
    %64 = arith.addf %60, %63 : vector<4x8xf32>
    %65 = arith.truncf %57 : vector<8x4xf32> to vector<8x4xbf16>
    %66 = arith.truncf %64 : vector<4x8xf32> to vector<4x8xbf16>
    %cst_51 = arith.constant dense<0.000000e+00> : vector<8x8xf32>
    %67 = tpu.matmul %65, %66, %cst_51 {dimension_numbers = #tpu.dot_dimension_numbers<[1], [0], [0], [1], [0, 0, 1, 1], [], []>} : vector<8x4xbf16>, vector<4x8xbf16>, vector<8x8xf32> -> vector<8x8xf32>
    %68 = arith.addf %50, %67 : vector<8x8xf32>
    %c3 = arith.constant 3 : index
    %c0_52 = arith.constant 0 : index
    %c0_53 = arith.constant 0 : index
    %69 = vector.load %arg2[%c3, %c0_52, %c0_53] : memref<4x8x32xbf16, #tpu.memory_space<vmem>>, vector<1x8x32xbf16>
    %70 = vector.shape_cast %69 : vector<1x8x32xbf16> to vector<8x32xbf16>
    %cst_54 = arith.constant dense<0.000000e+00> : vector<8x4xf32>
    %71 = tpu.matmul %70, %11, %cst_54 {dimension_numbers = #tpu.dot_dimension_numbers<[1], [1], [0], [0], [0, 0, 1, 0], [], []>} : vector<8x32xbf16>, vector<4x32xbf16>, vector<8x4xf32> -> vector<8x4xf32>
    %c3_55 = arith.constant 3 : index
    %c0_56 = arith.constant 0 : index
    %c0_57 = arith.constant 0 : index
    %72 = vector.load %arg3[%c3_55, %c0_56, %c0_57] : memref<4x8x1xf32, #tpu.memory_space<vmem>>, vector<1x8x1xf32>
    %73 = vector.shape_cast %72 : vector<1x8x1xf32> to vector<8x1xf32>
    %74 = vector.broadcast %73 : vector<8x1xf32> to vector<8x4xf32>
    %75 = arith.addf %71, %74 : vector<8x4xf32>
    %c3_58 = arith.constant 3 : index
    %c0_59 = arith.constant 0 : index
    %c0_60 = arith.constant 0 : index
    %76 = vector.load %arg4[%c3_58, %c0_59, %c0_60] : memref<4x32x8xbf16, #tpu.memory_space<vmem>>, vector<1x32x8xbf16>
    %77 = vector.shape_cast %76 : vector<1x32x8xbf16> to vector<32x8xbf16>
    %cst_61 = arith.constant dense<0.000000e+00> : vector<4x8xf32>
    %78 = tpu.matmul %11, %77, %cst_61 {dimension_numbers = #tpu.dot_dimension_numbers<[1], [0], [0], [1], [0, 0, 1, 1], [], []>} : vector<4x32xbf16>, vector<32x8xbf16>, vector<4x8xf32> -> vector<4x8xf32>
    %c3_62 = arith.constant 3 : index
    %c0_63 = arith.constant 0 : index
    %c0_64 = arith.constant 0 : index
    %79 = vector.load %arg5[%c3_62, %c0_63, %c0_64] : memref<4x1x8xf32, #tpu.memory_space<vmem>>, vector<1x1x8xf32>
    %80 = vector.shape_cast %79 : vector<1x1x8xf32> to vector<1x8xf32>
    %81 = vector.broadcast %80 : vector<1x8xf32> to vector<4x8xf32>
    %82 = arith.addf %78, %81 : vector<4x8xf32>
    %83 = arith.truncf %75 : vector<8x4xf32> to vector<8x4xbf16>
    %84 = arith.truncf %82 : vector<4x8xf32> to vector<4x8xbf16>
    %cst_65 = arith.constant dense<0.000000e+00> : vector<8x8xf32>
    %85 = tpu.matmul %83, %84, %cst_65 {dimension_numbers = #tpu.dot_dimension_numbers<[1], [0], [0], [1], [0, 0, 1, 1], [], []>} : vector<8x4xbf16>, vector<4x8xbf16>, vector<8x8xf32> -> vector<8x8xf32>
    %86 = arith.addf %68, %85 : vector<8x8xf32>
    %cst_66 = arith.constant 2.500000e-01 : f32
    %87 = vector.broadcast %cst_66 : f32 to vector<8x8xf32>
    %88 = arith.mulf %86, %87 : vector<8x8xf32>
    %89 = arith.addf %88, %5 : vector<8x8xf32>
    %cst_67 = arith.constant dense<0xFF800000> : vector<8xf32>
    %90 = vector.multi_reduction <maximumf>, %89, %cst_67 [1] : vector<8x8xf32> to vector<8xf32>
    %91 = vector.shape_cast %90 : vector<8xf32> to vector<8x1xf32>
    %92 = vector.broadcast %91 : vector<8x1xf32> to vector<8x8xf32>
    %93 = arith.subf %89, %92 : vector<8x8xf32>
    %94 = math.exp %93 : vector<8x8xf32>
    %cst_68 = arith.constant dense<0.000000e+00> : vector<8xf32>
    %95 = vector.multi_reduction <add>, %94, %cst_68 [1] : vector<8x8xf32> to vector<8xf32>
    %96 = vector.shape_cast %95 : vector<8xf32> to vector<8x1xf32>
    %97 = vector.broadcast %96 : vector<8x1xf32> to vector<8x8xf32>
    %98 = arith.divf %94, %97 : vector<8x8xf32>
    %cst_69 = arith.constant 0.000000e+00 : f32
    %99 = vector.broadcast %cst_69 : f32 to vector<8x32xf32>
    %c0_70 = arith.constant 0 : index
    %c0_71 = arith.constant 0 : index
    %c0_72 = arith.constant 0 : index
    %100 = vector.load %arg6[%c0_70, %c0_71, %c0_72] : memref<4x8x32xbf16, #tpu.memory_space<vmem>>, vector<1x8x32xbf16>
    %101 = vector.shape_cast %100 : vector<1x8x32xbf16> to vector<8x32xbf16>
    %cst_73 = arith.constant dense<0.000000e+00> : vector<8x4xf32>
    %102 = tpu.matmul %101, %13, %cst_73 {dimension_numbers = #tpu.dot_dimension_numbers<[1], [1], [0], [0], [0, 0, 1, 0], [], []>} : vector<8x32xbf16>, vector<4x32xbf16>, vector<8x4xf32> -> vector<8x4xf32>
    %c0_74 = arith.constant 0 : index
    %c0_75 = arith.constant 0 : index
    %c0_76 = arith.constant 0 : index
    %103 = vector.load %arg7[%c0_74, %c0_75, %c0_76] : memref<4x8x1xf32, #tpu.memory_space<vmem>>, vector<1x8x1xf32>
    %104 = vector.shape_cast %103 : vector<1x8x1xf32> to vector<8x1xf32>
    %105 = vector.broadcast %104 : vector<8x1xf32> to vector<8x4xf32>
    %106 = arith.addf %102, %105 : vector<8x4xf32>
    %c0_77 = arith.constant 0 : index
    %c0_78 = arith.constant 0 : index
    %c0_79 = arith.constant 0 : index
    %107 = vector.load %arg8[%c0_77, %c0_78, %c0_79] : memref<8x4x32xbf16, #tpu.memory_space<vmem>>, vector<1x4x32xbf16>
    %108 = vector.shape_cast %107 : vector<1x4x32xbf16> to vector<4x32xbf16>
    %109 = arith.truncf %106 : vector<8x4xf32> to vector<8x4xbf16>
    %cst_80 = arith.constant dense<0.000000e+00> : vector<8x32xf32>
    %110 = tpu.matmul %109, %108, %cst_80 {dimension_numbers = #tpu.dot_dimension_numbers<[1], [0], [0], [1], [0, 0, 1, 1], [], []>} : vector<8x4xbf16>, vector<4x32xbf16>, vector<8x32xf32> -> vector<8x32xf32>
    %111 = arith.addf %99, %110 : vector<8x32xf32>
    %c1_81 = arith.constant 1 : index
    %c0_82 = arith.constant 0 : index
    %c0_83 = arith.constant 0 : index
    %112 = vector.load %arg6[%c1_81, %c0_82, %c0_83] : memref<4x8x32xbf16, #tpu.memory_space<vmem>>, vector<1x8x32xbf16>
    %113 = vector.shape_cast %112 : vector<1x8x32xbf16> to vector<8x32xbf16>
    %cst_84 = arith.constant dense<0.000000e+00> : vector<8x4xf32>
    %114 = tpu.matmul %113, %13, %cst_84 {dimension_numbers = #tpu.dot_dimension_numbers<[1], [1], [0], [0], [0, 0, 1, 0], [], []>} : vector<8x32xbf16>, vector<4x32xbf16>, vector<8x4xf32> -> vector<8x4xf32>
    %c1_85 = arith.constant 1 : index
    %c0_86 = arith.constant 0 : index
    %c0_87 = arith.constant 0 : index
    %115 = vector.load %arg7[%c1_85, %c0_86, %c0_87] : memref<4x8x1xf32, #tpu.memory_space<vmem>>, vector<1x8x1xf32>
    %116 = vector.shape_cast %115 : vector<1x8x1xf32> to vector<8x1xf32>
    %117 = vector.broadcast %116 : vector<8x1xf32> to vector<8x4xf32>
    %118 = arith.addf %114, %117 : vector<8x4xf32>
    %c1_88 = arith.constant 1 : index
    %c0_89 = arith.constant 0 : index
    %c0_90 = arith.constant 0 : index
    %119 = vector.load %arg8[%c1_88, %c0_89, %c0_90] : memref<8x4x32xbf16, #tpu.memory_space<vmem>>, vector<1x4x32xbf16>
    %120 = vector.shape_cast %119 : vector<1x4x32xbf16> to vector<4x32xbf16>
    %121 = arith.truncf %118 : vector<8x4xf32> to vector<8x4xbf16>
    %cst_91 = arith.constant dense<0.000000e+00> : vector<8x32xf32>
    %122 = tpu.matmul %121, %120, %cst_91 {dimension_numbers = #tpu.dot_dimension_numbers<[1], [0], [0], [1], [0, 0, 1, 1], [], []>} : vector<8x4xbf16>, vector<4x32xbf16>, vector<8x32xf32> -> vector<8x32xf32>
    %123 = arith.addf %111, %122 : vector<8x32xf32>
    %c2_92 = arith.constant 2 : index
    %c0_93 = arith.constant 0 : index
    %c0_94 = arith.constant 0 : index
    %124 = vector.load %arg6[%c2_92, %c0_93, %c0_94] : memref<4x8x32xbf16, #tpu.memory_space<vmem>>, vector<1x8x32xbf16>
    %125 = vector.shape_cast %124 : vector<1x8x32xbf16> to vector<8x32xbf16>
    %cst_95 = arith.constant dense<0.000000e+00> : vector<8x4xf32>
    %126 = tpu.matmul %125, %13, %cst_95 {dimension_numbers = #tpu.dot_dimension_numbers<[1], [1], [0], [0], [0, 0, 1, 0], [], []>} : vector<8x32xbf16>, vector<4x32xbf16>, vector<8x4xf32> -> vector<8x4xf32>
    %c2_96 = arith.constant 2 : index
    %c0_97 = arith.constant 0 : index
    %c0_98 = arith.constant 0 : index
    %127 = vector.load %arg7[%c2_96, %c0_97, %c0_98] : memref<4x8x1xf32, #tpu.memory_space<vmem>>, vector<1x8x1xf32>
    %128 = vector.shape_cast %127 : vector<1x8x1xf32> to vector<8x1xf32>
    %129 = vector.broadcast %128 : vector<8x1xf32> to vector<8x4xf32>
    %130 = arith.addf %126, %129 : vector<8x4xf32>
    %c2_99 = arith.constant 2 : index
    %c0_100 = arith.constant 0 : index
    %c0_101 = arith.constant 0 : index
    %131 = vector.load %arg8[%c2_99, %c0_100, %c0_101] : memref<8x4x32xbf16, #tpu.memory_space<vmem>>, vector<1x4x32xbf16>
    %132 = vector.shape_cast %131 : vector<1x4x32xbf16> to vector<4x32xbf16>
    %133 = arith.truncf %130 : vector<8x4xf32> to vector<8x4xbf16>
    %cst_102 = arith.constant dense<0.000000e+00> : vector<8x32xf32>
    %134 = tpu.matmul %133, %132, %cst_102 {dimension_numbers = #tpu.dot_dimension_numbers<[1], [0], [0], [1], [0, 0, 1, 1], [], []>} : vector<8x4xbf16>, vector<4x32xbf16>, vector<8x32xf32> -> vector<8x32xf32>
    %135 = arith.addf %123, %134 : vector<8x32xf32>
    %c3_103 = arith.constant 3 : index
    %c0_104 = arith.constant 0 : index
    %c0_105 = arith.constant 0 : index
    %136 = vector.load %arg6[%c3_103, %c0_104, %c0_105] : memref<4x8x32xbf16, #tpu.memory_space<vmem>>, vector<1x8x32xbf16>
    %137 = vector.shape_cast %136 : vector<1x8x32xbf16> to vector<8x32xbf16>
    %cst_106 = arith.constant dense<0.000000e+00> : vector<8x4xf32>
    %138 = tpu.matmul %137, %13, %cst_106 {dimension_numbers = #tpu.dot_dimension_numbers<[1], [1], [0], [0], [0, 0, 1, 0], [], []>} : vector<8x32xbf16>, vector<4x32xbf16>, vector<8x4xf32> -> vector<8x4xf32>
    %c3_107 = arith.constant 3 : index
    %c0_108 = arith.constant 0 : index
    %c0_109 = arith.constant 0 : index
    %139 = vector.load %arg7[%c3_107, %c0_108, %c0_109] : memref<4x8x1xf32, #tpu.memory_space<vmem>>, vector<1x8x1xf32>
    %140 = vector.shape_cast %139 : vector<1x8x1xf32> to vector<8x1xf32>
    %141 = vector.broadcast %140 : vector<8x1xf32> to vector<8x4xf32>
    %142 = arith.addf %138, %141 : vector<8x4xf32>
    %c3_110 = arith.constant 3 : index
    %c0_111 = arith.constant 0 : index
    %c0_112 = arith.constant 0 : index
    %143 = vector.load %arg8[%c3_110, %c0_111, %c0_112] : memref<8x4x32xbf16, #tpu.memory_space<vmem>>, vector<1x4x32xbf16>
    %144 = vector.shape_cast %143 : vector<1x4x32xbf16> to vector<4x32xbf16>
    %145 = arith.truncf %142 : vector<8x4xf32> to vector<8x4xbf16>
    %cst_113 = arith.constant dense<0.000000e+00> : vector<8x32xf32>
    %146 = tpu.matmul %145, %144, %cst_113 {dimension_numbers = #tpu.dot_dimension_numbers<[1], [0], [0], [1], [0, 0, 1, 1], [], []>} : vector<8x4xbf16>, vector<4x32xbf16>, vector<8x32xf32> -> vector<8x32xf32>
    %147 = arith.addf %135, %146 : vector<8x32xf32>
    %148 = arith.truncf %98 : vector<8x8xf32> to vector<8x8xbf16>
    %149 = arith.truncf %147 : vector<8x32xf32> to vector<8x32xbf16>
    %cst_114 = arith.constant dense<0.000000e+00> : vector<8x32xf32>
    %150 = tpu.matmul %148, %149, %cst_114 {dimension_numbers = #tpu.dot_dimension_numbers<[1], [0], [0], [1], [0, 0, 1, 1], [], []>} : vector<8x8xbf16>, vector<8x32xbf16>, vector<8x32xf32> -> vector<8x32xf32>
    %151 = arith.addf %9, %150 : vector<8x32xf32>
    %c4 = arith.constant 4 : index
    %c0_115 = arith.constant 0 : index
    %152 = vector.load %arg0[%c4, %c0_115] : memref<8x32xf32, #tpu.memory_space<vmem>>, vector<4x32xf32>
    %153 = arith.truncf %152 : vector<4x32xf32> to vector<4x32xbf16>
    %c4_116 = arith.constant 4 : index
    %c0_117 = arith.constant 0 : index
    %154 = vector.load %arg0[%c4_116, %c0_117] : memref<8x32xf32, #tpu.memory_space<vmem>>, vector<4x32xf32>
    %155 = arith.truncf %154 : vector<4x32xf32> to vector<4x32xbf16>
    %cst_118 = arith.constant 0.000000e+00 : f32
    %156 = vector.broadcast %cst_118 : f32 to vector<8x8xf32>
    %c0_119 = arith.constant 0 : index
    %c0_120 = arith.constant 0 : index
    %c0_121 = arith.constant 0 : index
    %157 = vector.load %arg2[%c0_119, %c0_120, %c0_121] : memref<4x8x32xbf16, #tpu.memory_space<vmem>>, vector<1x8x32xbf16>
    %158 = vector.shape_cast %157 : vector<1x8x32xbf16> to vector<8x32xbf16>
    %cst_122 = arith.constant dense<0.000000e+00> : vector<8x4xf32>
    %159 = tpu.matmul %158, %153, %cst_122 {dimension_numbers = #tpu.dot_dimension_numbers<[1], [1], [0], [0], [0, 0, 1, 0], [], []>} : vector<8x32xbf16>, vector<4x32xbf16>, vector<8x4xf32> -> vector<8x4xf32>
    %c0_123 = arith.constant 0 : index
    %c0_124 = arith.constant 0 : index
    %c0_125 = arith.constant 0 : index
    %160 = vector.load %arg3[%c0_123, %c0_124, %c0_125] : memref<4x8x1xf32, #tpu.memory_space<vmem>>, vector<1x8x1xf32>
    %161 = vector.shape_cast %160 : vector<1x8x1xf32> to vector<8x1xf32>
    %162 = vector.broadcast %161 : vector<8x1xf32> to vector<8x4xf32>
    %163 = arith.addf %159, %162 : vector<8x4xf32>
    %c0_126 = arith.constant 0 : index
    %c0_127 = arith.constant 0 : index
    %c0_128 = arith.constant 0 : index
    %164 = vector.load %arg4[%c0_126, %c0_127, %c0_128] : memref<4x32x8xbf16, #tpu.memory_space<vmem>>, vector<1x32x8xbf16>
    %165 = vector.shape_cast %164 : vector<1x32x8xbf16> to vector<32x8xbf16>
    %cst_129 = arith.constant dense<0.000000e+00> : vector<4x8xf32>
    %166 = tpu.matmul %153, %165, %cst_129 {dimension_numbers = #tpu.dot_dimension_numbers<[1], [0], [0], [1], [0, 0, 1, 1], [], []>} : vector<4x32xbf16>, vector<32x8xbf16>, vector<4x8xf32> -> vector<4x8xf32>
    %c0_130 = arith.constant 0 : index
    %c0_131 = arith.constant 0 : index
    %c0_132 = arith.constant 0 : index
    %167 = vector.load %arg5[%c0_130, %c0_131, %c0_132] : memref<4x1x8xf32, #tpu.memory_space<vmem>>, vector<1x1x8xf32>
    %168 = vector.shape_cast %167 : vector<1x1x8xf32> to vector<1x8xf32>
    %169 = vector.broadcast %168 : vector<1x8xf32> to vector<4x8xf32>
    %170 = arith.addf %166, %169 : vector<4x8xf32>
    %171 = arith.truncf %163 : vector<8x4xf32> to vector<8x4xbf16>
    %172 = arith.truncf %170 : vector<4x8xf32> to vector<4x8xbf16>
    %cst_133 = arith.constant dense<0.000000e+00> : vector<8x8xf32>
    %173 = tpu.matmul %171, %172, %cst_133 {dimension_numbers = #tpu.dot_dimension_numbers<[1], [0], [0], [1], [0, 0, 1, 1], [], []>} : vector<8x4xbf16>, vector<4x8xbf16>, vector<8x8xf32> -> vector<8x8xf32>
    %174 = arith.addf %156, %173 : vector<8x8xf32>
    %c1_134 = arith.constant 1 : index
    %c0_135 = arith.constant 0 : index
    %c0_136 = arith.constant 0 : index
    %175 = vector.load %arg2[%c1_134, %c0_135, %c0_136] : memref<4x8x32xbf16, #tpu.memory_space<vmem>>, vector<1x8x32xbf16>
    %176 = vector.shape_cast %175 : vector<1x8x32xbf16> to vector<8x32xbf16>
    %cst_137 = arith.constant dense<0.000000e+00> : vector<8x4xf32>
    %177 = tpu.matmul %176, %153, %cst_137 {dimension_numbers = #tpu.dot_dimension_numbers<[1], [1], [0], [0], [0, 0, 1, 0], [], []>} : vector<8x32xbf16>, vector<4x32xbf16>, vector<8x4xf32> -> vector<8x4xf32>
    %c1_138 = arith.constant 1 : index
    %c0_139 = arith.constant 0 : index
    %c0_140 = arith.constant 0 : index
    %178 = vector.load %arg3[%c1_138, %c0_139, %c0_140] : memref<4x8x1xf32, #tpu.memory_space<vmem>>, vector<1x8x1xf32>
    %179 = vector.shape_cast %178 : vector<1x8x1xf32> to vector<8x1xf32>
    %180 = vector.broadcast %179 : vector<8x1xf32> to vector<8x4xf32>
    %181 = arith.addf %177, %180 : vector<8x4xf32>
    %c1_141 = arith.constant 1 : index
    %c0_142 = arith.constant 0 : index
    %c0_143 = arith.constant 0 : index
    %182 = vector.load %arg4[%c1_141, %c0_142, %c0_143] : memref<4x32x8xbf16, #tpu.memory_space<vmem>>, vector<1x32x8xbf16>
    %183 = vector.shape_cast %182 : vector<1x32x8xbf16> to vector<32x8xbf16>
    %cst_144 = arith.constant dense<0.000000e+00> : vector<4x8xf32>
    %184 = tpu.matmul %153, %183, %cst_144 {dimension_numbers = #tpu.dot_dimension_numbers<[1], [0], [0], [1], [0, 0, 1, 1], [], []>} : vector<4x32xbf16>, vector<32x8xbf16>, vector<4x8xf32> -> vector<4x8xf32>
    %c1_145 = arith.constant 1 : index
    %c0_146 = arith.constant 0 : index
    %c0_147 = arith.constant 0 : index
    %185 = vector.load %arg5[%c1_145, %c0_146, %c0_147] : memref<4x1x8xf32, #tpu.memory_space<vmem>>, vector<1x1x8xf32>
    %186 = vector.shape_cast %185 : vector<1x1x8xf32> to vector<1x8xf32>
    %187 = vector.broadcast %186 : vector<1x8xf32> to vector<4x8xf32>
    %188 = arith.addf %184, %187 : vector<4x8xf32>
    %189 = arith.truncf %181 : vector<8x4xf32> to vector<8x4xbf16>
    %190 = arith.truncf %188 : vector<4x8xf32> to vector<4x8xbf16>
    %cst_148 = arith.constant dense<0.000000e+00> : vector<8x8xf32>
    %191 = tpu.matmul %189, %190, %cst_148 {dimension_numbers = #tpu.dot_dimension_numbers<[1], [0], [0], [1], [0, 0, 1, 1], [], []>} : vector<8x4xbf16>, vector<4x8xbf16>, vector<8x8xf32> -> vector<8x8xf32>
    %192 = arith.addf %174, %191 : vector<8x8xf32>
    %c2_149 = arith.constant 2 : index
    %c0_150 = arith.constant 0 : index
    %c0_151 = arith.constant 0 : index
    %193 = vector.load %arg2[%c2_149, %c0_150, %c0_151] : memref<4x8x32xbf16, #tpu.memory_space<vmem>>, vector<1x8x32xbf16>
    %194 = vector.shape_cast %193 : vector<1x8x32xbf16> to vector<8x32xbf16>
    %cst_152 = arith.constant dense<0.000000e+00> : vector<8x4xf32>
    %195 = tpu.matmul %194, %153, %cst_152 {dimension_numbers = #tpu.dot_dimension_numbers<[1], [1], [0], [0], [0, 0, 1, 0], [], []>} : vector<8x32xbf16>, vector<4x32xbf16>, vector<8x4xf32> -> vector<8x4xf32>
    %c2_153 = arith.constant 2 : index
    %c0_154 = arith.constant 0 : index
    %c0_155 = arith.constant 0 : index
    %196 = vector.load %arg3[%c2_153, %c0_154, %c0_155] : memref<4x8x1xf32, #tpu.memory_space<vmem>>, vector<1x8x1xf32>
    %197 = vector.shape_cast %196 : vector<1x8x1xf32> to vector<8x1xf32>
    %198 = vector.broadcast %197 : vector<8x1xf32> to vector<8x4xf32>
    %199 = arith.addf %195, %198 : vector<8x4xf32>
    %c2_156 = arith.constant 2 : index
    %c0_157 = arith.constant 0 : index
    %c0_158 = arith.constant 0 : index
    %200 = vector.load %arg4[%c2_156, %c0_157, %c0_158] : memref<4x32x8xbf16, #tpu.memory_space<vmem>>, vector<1x32x8xbf16>
    %201 = vector.shape_cast %200 : vector<1x32x8xbf16> to vector<32x8xbf16>
    %cst_159 = arith.constant dense<0.000000e+00> : vector<4x8xf32>
    %202 = tpu.matmul %153, %201, %cst_159 {dimension_numbers = #tpu.dot_dimension_numbers<[1], [0], [0], [1], [0, 0, 1, 1], [], []>} : vector<4x32xbf16>, vector<32x8xbf16>, vector<4x8xf32> -> vector<4x8xf32>
    %c2_160 = arith.constant 2 : index
    %c0_161 = arith.constant 0 : index
    %c0_162 = arith.constant 0 : index
    %203 = vector.load %arg5[%c2_160, %c0_161, %c0_162] : memref<4x1x8xf32, #tpu.memory_space<vmem>>, vector<1x1x8xf32>
    %204 = vector.shape_cast %203 : vector<1x1x8xf32> to vector<1x8xf32>
    %205 = vector.broadcast %204 : vector<1x8xf32> to vector<4x8xf32>
    %206 = arith.addf %202, %205 : vector<4x8xf32>
    %207 = arith.truncf %199 : vector<8x4xf32> to vector<8x4xbf16>
    %208 = arith.truncf %206 : vector<4x8xf32> to vector<4x8xbf16>
    %cst_163 = arith.constant dense<0.000000e+00> : vector<8x8xf32>
    %209 = tpu.matmul %207, %208, %cst_163 {dimension_numbers = #tpu.dot_dimension_numbers<[1], [0], [0], [1], [0, 0, 1, 1], [], []>} : vector<8x4xbf16>, vector<4x8xbf16>, vector<8x8xf32> -> vector<8x8xf32>
    %210 = arith.addf %192, %209 : vector<8x8xf32>
    %c3_164 = arith.constant 3 : index
    %c0_165 = arith.constant 0 : index
    %c0_166 = arith.constant 0 : index
    %211 = vector.load %arg2[%c3_164, %c0_165, %c0_166] : memref<4x8x32xbf16, #tpu.memory_space<vmem>>, vector<1x8x32xbf16>
    %212 = vector.shape_cast %211 : vector<1x8x32xbf16> to vector<8x32xbf16>
    %cst_167 = arith.constant dense<0.000000e+00> : vector<8x4xf32>
    %213 = tpu.matmul %212, %153, %cst_167 {dimension_numbers = #tpu.dot_dimension_numbers<[1], [1], [0], [0], [0, 0, 1, 0], [], []>} : vector<8x32xbf16>, vector<4x32xbf16>, vector<8x4xf32> -> vector<8x4xf32>
    %c3_168 = arith.constant 3 : index
    %c0_169 = arith.constant 0 : index
    %c0_170 = arith.constant 0 : index
    %214 = vector.load %arg3[%c3_168, %c0_169, %c0_170] : memref<4x8x1xf32, #tpu.memory_space<vmem>>, vector<1x8x1xf32>
    %215 = vector.shape_cast %214 : vector<1x8x1xf32> to vector<8x1xf32>
    %216 = vector.broadcast %215 : vector<8x1xf32> to vector<8x4xf32>
    %217 = arith.addf %213, %216 : vector<8x4xf32>
    %c3_171 = arith.constant 3 : index
    %c0_172 = arith.constant 0 : index
    %c0_173 = arith.constant 0 : index
    %218 = vector.load %arg4[%c3_171, %c0_172, %c0_173] : memref<4x32x8xbf16, #tpu.memory_space<vmem>>, vector<1x32x8xbf16>
    %219 = vector.shape_cast %218 : vector<1x32x8xbf16> to vector<32x8xbf16>
    %cst_174 = arith.constant dense<0.000000e+00> : vector<4x8xf32>
    %220 = tpu.matmul %153, %219, %cst_174 {dimension_numbers = #tpu.dot_dimension_numbers<[1], [0], [0], [1], [0, 0, 1, 1], [], []>} : vector<4x32xbf16>, vector<32x8xbf16>, vector<4x8xf32> -> vector<4x8xf32>
    %c3_175 = arith.constant 3 : index
    %c0_176 = arith.constant 0 : index
    %c0_177 = arith.constant 0 : index
    %221 = vector.load %arg5[%c3_175, %c0_176, %c0_177] : memref<4x1x8xf32, #tpu.memory_space<vmem>>, vector<1x1x8xf32>
    %222 = vector.shape_cast %221 : vector<1x1x8xf32> to vector<1x8xf32>
    %223 = vector.broadcast %222 : vector<1x8xf32> to vector<4x8xf32>
    %224 = arith.addf %220, %223 : vector<4x8xf32>
    %225 = arith.truncf %217 : vector<8x4xf32> to vector<8x4xbf16>
    %226 = arith.truncf %224 : vector<4x8xf32> to vector<4x8xbf16>
    %cst_178 = arith.constant dense<0.000000e+00> : vector<8x8xf32>
    %227 = tpu.matmul %225, %226, %cst_178 {dimension_numbers = #tpu.dot_dimension_numbers<[1], [0], [0], [1], [0, 0, 1, 1], [], []>} : vector<8x4xbf16>, vector<4x8xbf16>, vector<8x8xf32> -> vector<8x8xf32>
    %228 = arith.addf %210, %227 : vector<8x8xf32>
    %cst_179 = arith.constant 2.500000e-01 : f32
    %229 = vector.broadcast %cst_179 : f32 to vector<8x8xf32>
    %230 = arith.mulf %228, %229 : vector<8x8xf32>
    %231 = arith.addf %230, %5 : vector<8x8xf32>
    %cst_180 = arith.constant dense<0xFF800000> : vector<8xf32>
    %232 = vector.multi_reduction <maximumf>, %231, %cst_180 [1] : vector<8x8xf32> to vector<8xf32>
    %233 = vector.shape_cast %232 : vector<8xf32> to vector<8x1xf32>
    %234 = vector.broadcast %233 : vector<8x1xf32> to vector<8x8xf32>
    %235 = arith.subf %231, %234 : vector<8x8xf32>
    %236 = math.exp %235 : vector<8x8xf32>
    %cst_181 = arith.constant dense<0.000000e+00> : vector<8xf32>
    %237 = vector.multi_reduction <add>, %236, %cst_181 [1] : vector<8x8xf32> to vector<8xf32>
    %238 = vector.shape_cast %237 : vector<8xf32> to vector<8x1xf32>
    %239 = vector.broadcast %238 : vector<8x1xf32> to vector<8x8xf32>
    %240 = arith.divf %236, %239 : vector<8x8xf32>
    %cst_182 = arith.constant 0.000000e+00 : f32
    %241 = vector.broadcast %cst_182 : f32 to vector<8x32xf32>
    %c0_183 = arith.constant 0 : index
    %c0_184 = arith.constant 0 : index
    %c0_185 = arith.constant 0 : index
    %242 = vector.load %arg6[%c0_183, %c0_184, %c0_185] : memref<4x8x32xbf16, #tpu.memory_space<vmem>>, vector<1x8x32xbf16>
    %243 = vector.shape_cast %242 : vector<1x8x32xbf16> to vector<8x32xbf16>
    %cst_186 = arith.constant dense<0.000000e+00> : vector<8x4xf32>
    %244 = tpu.matmul %243, %155, %cst_186 {dimension_numbers = #tpu.dot_dimension_numbers<[1], [1], [0], [0], [0, 0, 1, 0], [], []>} : vector<8x32xbf16>, vector<4x32xbf16>, vector<8x4xf32> -> vector<8x4xf32>
    %c0_187 = arith.constant 0 : index
    %c0_188 = arith.constant 0 : index
    %c0_189 = arith.constant 0 : index
    %245 = vector.load %arg7[%c0_187, %c0_188, %c0_189] : memref<4x8x1xf32, #tpu.memory_space<vmem>>, vector<1x8x1xf32>
    %246 = vector.shape_cast %245 : vector<1x8x1xf32> to vector<8x1xf32>
    %247 = vector.broadcast %246 : vector<8x1xf32> to vector<8x4xf32>
    %248 = arith.addf %244, %247 : vector<8x4xf32>
    %c4_190 = arith.constant 4 : index
    %c0_191 = arith.constant 0 : index
    %c0_192 = arith.constant 0 : index
    %249 = vector.load %arg8[%c4_190, %c0_191, %c0_192] : memref<8x4x32xbf16, #tpu.memory_space<vmem>>, vector<1x4x32xbf16>
    %250 = vector.shape_cast %249 : vector<1x4x32xbf16> to vector<4x32xbf16>
    %251 = arith.truncf %248 : vector<8x4xf32> to vector<8x4xbf16>
    %cst_193 = arith.constant dense<0.000000e+00> : vector<8x32xf32>
    %252 = tpu.matmul %251, %250, %cst_193 {dimension_numbers = #tpu.dot_dimension_numbers<[1], [0], [0], [1], [0, 0, 1, 1], [], []>} : vector<8x4xbf16>, vector<4x32xbf16>, vector<8x32xf32> -> vector<8x32xf32>
    %253 = arith.addf %241, %252 : vector<8x32xf32>
    %c1_194 = arith.constant 1 : index
    %c0_195 = arith.constant 0 : index
    %c0_196 = arith.constant 0 : index
    %254 = vector.load %arg6[%c1_194, %c0_195, %c0_196] : memref<4x8x32xbf16, #tpu.memory_space<vmem>>, vector<1x8x32xbf16>
    %255 = vector.shape_cast %254 : vector<1x8x32xbf16> to vector<8x32xbf16>
    %cst_197 = arith.constant dense<0.000000e+00> : vector<8x4xf32>
    %256 = tpu.matmul %255, %155, %cst_197 {dimension_numbers = #tpu.dot_dimension_numbers<[1], [1], [0], [0], [0, 0, 1, 0], [], []>} : vector<8x32xbf16>, vector<4x32xbf16>, vector<8x4xf32> -> vector<8x4xf32>
    %c1_198 = arith.constant 1 : index
    %c0_199 = arith.constant 0 : index
    %c0_200 = arith.constant 0 : index
    %257 = vector.load %arg7[%c1_198, %c0_199, %c0_200] : memref<4x8x1xf32, #tpu.memory_space<vmem>>, vector<1x8x1xf32>
    %258 = vector.shape_cast %257 : vector<1x8x1xf32> to vector<8x1xf32>
    %259 = vector.broadcast %258 : vector<8x1xf32> to vector<8x4xf32>
    %260 = arith.addf %256, %259 : vector<8x4xf32>
    %c5 = arith.constant 5 : index
    %c0_201 = arith.constant 0 : index
    %c0_202 = arith.constant 0 : index
    %261 = vector.load %arg8[%c5, %c0_201, %c0_202] : memref<8x4x32xbf16, #tpu.memory_space<vmem>>, vector<1x4x32xbf16>
    %262 = vector.shape_cast %261 : vector<1x4x32xbf16> to vector<4x32xbf16>
    %263 = arith.truncf %260 : vector<8x4xf32> to vector<8x4xbf16>
    %cst_203 = arith.constant dense<0.000000e+00> : vector<8x32xf32>
    %264 = tpu.matmul %263, %262, %cst_203 {dimension_numbers = #tpu.dot_dimension_numbers<[1], [0], [0], [1], [0, 0, 1, 1], [], []>} : vector<8x4xbf16>, vector<4x32xbf16>, vector<8x32xf32> -> vector<8x32xf32>
    %265 = arith.addf %253, %264 : vector<8x32xf32>
    %c2_204 = arith.constant 2 : index
    %c0_205 = arith.constant 0 : index
    %c0_206 = arith.constant 0 : index
    %266 = vector.load %arg6[%c2_204, %c0_205, %c0_206] : memref<4x8x32xbf16, #tpu.memory_space<vmem>>, vector<1x8x32xbf16>
    %267 = vector.shape_cast %266 : vector<1x8x32xbf16> to vector<8x32xbf16>
    %cst_207 = arith.constant dense<0.000000e+00> : vector<8x4xf32>
    %268 = tpu.matmul %267, %155, %cst_207 {dimension_numbers = #tpu.dot_dimension_numbers<[1], [1], [0], [0], [0, 0, 1, 0], [], []>} : vector<8x32xbf16>, vector<4x32xbf16>, vector<8x4xf32> -> vector<8x4xf32>
    %c2_208 = arith.constant 2 : index
    %c0_209 = arith.constant 0 : index
    %c0_210 = arith.constant 0 : index
    %269 = vector.load %arg7[%c2_208, %c0_209, %c0_210] : memref<4x8x1xf32, #tpu.memory_space<vmem>>, vector<1x8x1xf32>
    %270 = vector.shape_cast %269 : vector<1x8x1xf32> to vector<8x1xf32>
    %271 = vector.broadcast %270 : vector<8x1xf32> to vector<8x4xf32>
    %272 = arith.addf %268, %271 : vector<8x4xf32>
    %c6 = arith.constant 6 : index
    %c0_211 = arith.constant 0 : index
    %c0_212 = arith.constant 0 : index
    %273 = vector.load %arg8[%c6, %c0_211, %c0_212] : memref<8x4x32xbf16, #tpu.memory_space<vmem>>, vector<1x4x32xbf16>
    %274 = vector.shape_cast %273 : vector<1x4x32xbf16> to vector<4x32xbf16>
    %275 = arith.truncf %272 : vector<8x4xf32> to vector<8x4xbf16>
    %cst_213 = arith.constant dense<0.000000e+00> : vector<8x32xf32>
    %276 = tpu.matmul %275, %274, %cst_213 {dimension_numbers = #tpu.dot_dimension_numbers<[1], [0], [0], [1], [0, 0, 1, 1], [], []>} : vector<8x4xbf16>, vector<4x32xbf16>, vector<8x32xf32> -> vector<8x32xf32>
    %277 = arith.addf %265, %276 : vector<8x32xf32>
    %c3_214 = arith.constant 3 : index
    %c0_215 = arith.constant 0 : index
    %c0_216 = arith.constant 0 : index
    %278 = vector.load %arg6[%c3_214, %c0_215, %c0_216] : memref<4x8x32xbf16, #tpu.memory_space<vmem>>, vector<1x8x32xbf16>
    %279 = vector.shape_cast %278 : vector<1x8x32xbf16> to vector<8x32xbf16>
    %cst_217 = arith.constant dense<0.000000e+00> : vector<8x4xf32>
    %280 = tpu.matmul %279, %155, %cst_217 {dimension_numbers = #tpu.dot_dimension_numbers<[1], [1], [0], [0], [0, 0, 1, 0], [], []>} : vector<8x32xbf16>, vector<4x32xbf16>, vector<8x4xf32> -> vector<8x4xf32>
    %c3_218 = arith.constant 3 : index
    %c0_219 = arith.constant 0 : index
    %c0_220 = arith.constant 0 : index
    %281 = vector.load %arg7[%c3_218, %c0_219, %c0_220] : memref<4x8x1xf32, #tpu.memory_space<vmem>>, vector<1x8x1xf32>
    %282 = vector.shape_cast %281 : vector<1x8x1xf32> to vector<8x1xf32>
    %283 = vector.broadcast %282 : vector<8x1xf32> to vector<8x4xf32>
    %284 = arith.addf %280, %283 : vector<8x4xf32>
    %c7 = arith.constant 7 : index
    %c0_221 = arith.constant 0 : index
    %c0_222 = arith.constant 0 : index
    %285 = vector.load %arg8[%c7, %c0_221, %c0_222] : memref<8x4x32xbf16, #tpu.memory_space<vmem>>, vector<1x4x32xbf16>
    %286 = vector.shape_cast %285 : vector<1x4x32xbf16> to vector<4x32xbf16>
    %287 = arith.truncf %284 : vector<8x4xf32> to vector<8x4xbf16>
    %cst_223 = arith.constant dense<0.000000e+00> : vector<8x32xf32>
    %288 = tpu.matmul %287, %286, %cst_223 {dimension_numbers = #tpu.dot_dimension_numbers<[1], [0], [0], [1], [0, 0, 1, 1], [], []>} : vector<8x4xbf16>, vector<4x32xbf16>, vector<8x32xf32> -> vector<8x32xf32>
    %289 = arith.addf %277, %288 : vector<8x32xf32>
    %290 = arith.truncf %240 : vector<8x8xf32> to vector<8x8xbf16>
    %291 = arith.truncf %289 : vector<8x32xf32> to vector<8x32xbf16>
    %cst_224 = arith.constant dense<0.000000e+00> : vector<8x32xf32>
    %292 = tpu.matmul %290, %291, %cst_224 {dimension_numbers = #tpu.dot_dimension_numbers<[1], [0], [0], [1], [0, 0, 1, 1], [], []>} : vector<8x8xbf16>, vector<8x32xbf16>, vector<8x32xf32> -> vector<8x32xf32>
    %293 = arith.addf %151, %292 : vector<8x32xf32>
    %c0_225 = arith.constant 0 : index
    %c0_226 = arith.constant 0 : index
    %294 = vector.load %arg10[%c0_225, %c0_226] : memref<1x32xf32, #tpu.memory_space<vmem>>, vector<1x32xf32>
    %c0_227 = arith.constant 0 : index
    %c0_228 = arith.constant 0 : index
    %295 = vector.load %arg11[%c0_227, %c0_228] : memref<1x32xf32, #tpu.memory_space<vmem>>, vector<1x32xf32>
    %cst_229 = arith.constant dense<0.000000e+00> : vector<8xf32>
    %296 = vector.multi_reduction <add>, %293, %cst_229 [1] : vector<8x32xf32> to vector<8xf32>
    %297 = vector.shape_cast %296 : vector<8xf32> to vector<8x1xf32>
    %cst_230 = arith.constant 3.200000e+01 : f32
    %298 = vector.broadcast %cst_230 : f32 to vector<8x1xf32>
    %299 = arith.divf %297, %298 : vector<8x1xf32>
    %300 = vector.broadcast %299 : vector<8x1xf32> to vector<8x32xf32>
    %301 = arith.subf %293, %300 : vector<8x32xf32>
    %302 = arith.mulf %301, %301 : vector<8x32xf32>
    %cst_231 = arith.constant dense<0.000000e+00> : vector<8xf32>
    %303 = vector.multi_reduction <add>, %302, %cst_231 [1] : vector<8x32xf32> to vector<8xf32>
    %304 = vector.shape_cast %303 : vector<8xf32> to vector<8x1xf32>
    %cst_232 = arith.constant 3.200000e+01 : f32
    %305 = vector.broadcast %cst_232 : f32 to vector<8x1xf32>
    %306 = arith.divf %304, %305 : vector<8x1xf32>
    %307 = vector.broadcast %299 : vector<8x1xf32> to vector<8x32xf32>
    %308 = arith.subf %293, %307 : vector<8x32xf32>
    %cst_233 = arith.constant 9.99999974E-6 : f32
    %309 = vector.broadcast %cst_233 : f32 to vector<8x1xf32>
    %310 = arith.addf %306, %309 : vector<8x1xf32>
    %311 = math.rsqrt %310 : vector<8x1xf32>
    %312 = vector.broadcast %311 : vector<8x1xf32> to vector<8x32xf32>
    %313 = arith.mulf %308, %312 : vector<8x32xf32>
    %314 = vector.broadcast %294 : vector<1x32xf32> to vector<8x32xf32>
    %315 = arith.mulf %313, %314 : vector<8x32xf32>
    %316 = vector.broadcast %295 : vector<1x32xf32> to vector<8x32xf32>
    %317 = arith.addf %315, %316 : vector<8x32xf32>
    %c0_234 = arith.constant 0 : index
    %c0_235 = arith.constant 0 : index
    %318 = vector.load %arg29[%c0_234, %c0_235] : memref<8x32xf32, #tpu.memory_space<vmem>>, vector<8x32xf32>
    tpu.vector_store %arg29[%c0_234, %c0_235], %317 {strides = array<i32>} : memref<8x32xf32, #tpu.memory_space<vmem>>, vector<8x32xf32>,
    %c0_236 = arith.constant 0 : index
    %c0_237 = arith.constant 0 : index
    %319 = vector.load %arg19[%c0_236, %c0_237] : memref<1x32xf32, #tpu.memory_space<vmem>>, vector<1x32xf32>
    %320 = vector.broadcast %319 : vector<1x32xf32> to vector<8x32xf32>
    %321 = arith.addf %317, %320 : vector<8x32xf32>
    %c0_238 = arith.constant 0 : index
    %c0_239 = arith.constant 0 : index
    %322 = vector.load %arg1[%c0_238, %c0_239] : memref<8x32xf32, #tpu.memory_space<vmem>>, vector<4x32xf32>
    %323 = arith.truncf %322 : vector<4x32xf32> to vector<4x32xbf16>
    %c0_240 = arith.constant 0 : index
    %c0_241 = arith.constant 0 : index
    %324 = vector.load %arg29[%c0_240, %c0_241] : memref<8x32xf32, #tpu.memory_space<vmem>>, vector<4x32xf32>
    %325 = arith.truncf %324 : vector<4x32xf32> to vector<4x32xbf16>
    %cst_242 = arith.constant 0.000000e+00 : f32
    %326 = vector.broadcast %cst_242 : f32 to vector<8x8xf32>
    %c0_243 = arith.constant 0 : index
    %c0_244 = arith.constant 0 : index
    %c0_245 = arith.constant 0 : index
    %327 = vector.load %arg12[%c0_243, %c0_244, %c0_245] : memref<4x8x32xbf16, #tpu.memory_space<vmem>>, vector<1x8x32xbf16>
    %328 = vector.shape_cast %327 : vector<1x8x32xbf16> to vector<8x32xbf16>
    %cst_246 = arith.constant dense<0.000000e+00> : vector<8x4xf32>
    %329 = tpu.matmul %328, %323, %cst_246 {dimension_numbers = #tpu.dot_dimension_numbers<[1], [1], [0], [0], [0, 0, 1, 0], [], []>} : vector<8x32xbf16>, vector<4x32xbf16>, vector<8x4xf32> -> vector<8x4xf32>
    %c0_247 = arith.constant 0 : index
    %c0_248 = arith.constant 0 : index
    %c0_249 = arith.constant 0 : index
    %330 = vector.load %arg13[%c0_247, %c0_248, %c0_249] : memref<4x8x1xf32, #tpu.memory_space<vmem>>, vector<1x8x1xf32>
    %331 = vector.shape_cast %330 : vector<1x8x1xf32> to vector<8x1xf32>
    %332 = vector.broadcast %331 : vector<8x1xf32> to vector<8x4xf32>
    %333 = arith.addf %329, %332 : vector<8x4xf32>
    %c0_250 = arith.constant 0 : index
    %c0_251 = arith.constant 0 : index
    %c0_252 = arith.constant 0 : index
    %334 = vector.load %arg14[%c0_250, %c0_251, %c0_252] : memref<4x32x8xbf16, #tpu.memory_space<vmem>>, vector<1x32x8xbf16>
    %335 = vector.shape_cast %334 : vector<1x32x8xbf16> to vector<32x8xbf16>
    %cst_253 = arith.constant dense<0.000000e+00> : vector<4x8xf32>
    %336 = tpu.matmul %323, %335, %cst_253 {dimension_numbers = #tpu.dot_dimension_numbers<[1], [0], [0], [1], [0, 0, 1, 1], [], []>} : vector<4x32xbf16>, vector<32x8xbf16>, vector<4x8xf32> -> vector<4x8xf32>
    %c0_254 = arith.constant 0 : index
    %c0_255 = arith.constant 0 : index
    %c0_256 = arith.constant 0 : index
    %337 = vector.load %arg15[%c0_254, %c0_255, %c0_256] : memref<4x1x8xf32, #tpu.memory_space<vmem>>, vector<1x1x8xf32>
    %338 = vector.shape_cast %337 : vector<1x1x8xf32> to vector<1x8xf32>
    %339 = vector.broadcast %338 : vector<1x8xf32> to vector<4x8xf32>
    %340 = arith.addf %336, %339 : vector<4x8xf32>
    %341 = arith.truncf %333 : vector<8x4xf32> to vector<8x4xbf16>
    %342 = arith.truncf %340 : vector<4x8xf32> to vector<4x8xbf16>
    %cst_257 = arith.constant dense<0.000000e+00> : vector<8x8xf32>
    %343 = tpu.matmul %341, %342, %cst_257 {dimension_numbers = #tpu.dot_dimension_numbers<[1], [0], [0], [1], [0, 0, 1, 1], [], []>} : vector<8x4xbf16>, vector<4x8xbf16>, vector<8x8xf32> -> vector<8x8xf32>
    %344 = arith.addf %326, %343 : vector<8x8xf32>
    %c1_258 = arith.constant 1 : index
    %c0_259 = arith.constant 0 : index
    %c0_260 = arith.constant 0 : index
    %345 = vector.load %arg12[%c1_258, %c0_259, %c0_260] : memref<4x8x32xbf16, #tpu.memory_space<vmem>>, vector<1x8x32xbf16>
    %346 = vector.shape_cast %345 : vector<1x8x32xbf16> to vector<8x32xbf16>
    %cst_261 = arith.constant dense<0.000000e+00> : vector<8x4xf32>
    %347 = tpu.matmul %346, %323, %cst_261 {dimension_numbers = #tpu.dot_dimension_numbers<[1], [1], [0], [0], [0, 0, 1, 0], [], []>} : vector<8x32xbf16>, vector<4x32xbf16>, vector<8x4xf32> -> vector<8x4xf32>
    %c1_262 = arith.constant 1 : index
    %c0_263 = arith.constant 0 : index
    %c0_264 = arith.constant 0 : index
    %348 = vector.load %arg13[%c1_262, %c0_263, %c0_264] : memref<4x8x1xf32, #tpu.memory_space<vmem>>, vector<1x8x1xf32>
    %349 = vector.shape_cast %348 : vector<1x8x1xf32> to vector<8x1xf32>
    %350 = vector.broadcast %349 : vector<8x1xf32> to vector<8x4xf32>
    %351 = arith.addf %347, %350 : vector<8x4xf32>
    %c1_265 = arith.constant 1 : index
    %c0_266 = arith.constant 0 : index
    %c0_267 = arith.constant 0 : index
    %352 = vector.load %arg14[%c1_265, %c0_266, %c0_267] : memref<4x32x8xbf16, #tpu.memory_space<vmem>>, vector<1x32x8xbf16>
    %353 = vector.shape_cast %352 : vector<1x32x8xbf16> to vector<32x8xbf16>
    %cst_268 = arith.constant dense<0.000000e+00> : vector<4x8xf32>
    %354 = tpu.matmul %323, %353, %cst_268 {dimension_numbers = #tpu.dot_dimension_numbers<[1], [0], [0], [1], [0, 0, 1, 1], [], []>} : vector<4x32xbf16>, vector<32x8xbf16>, vector<4x8xf32> -> vector<4x8xf32>
    %c1_269 = arith.constant 1 : index
    %c0_270 = arith.constant 0 : index
    %c0_271 = arith.constant 0 : index
    %355 = vector.load %arg15[%c1_269, %c0_270, %c0_271] : memref<4x1x8xf32, #tpu.memory_space<vmem>>, vector<1x1x8xf32>
    %356 = vector.shape_cast %355 : vector<1x1x8xf32> to vector<1x8xf32>
    %357 = vector.broadcast %356 : vector<1x8xf32> to vector<4x8xf32>
    %358 = arith.addf %354, %357 : vector<4x8xf32>
    %359 = arith.truncf %351 : vector<8x4xf32> to vector<8x4xbf16>
    %360 = arith.truncf %358 : vector<4x8xf32> to vector<4x8xbf16>
    %cst_272 = arith.constant dense<0.000000e+00> : vector<8x8xf32>
    %361 = tpu.matmul %359, %360, %cst_272 {dimension_numbers = #tpu.dot_dimension_numbers<[1], [0], [0], [1], [0, 0, 1, 1], [], []>} : vector<8x4xbf16>, vector<4x8xbf16>, vector<8x8xf32> -> vector<8x8xf32>
    %362 = arith.addf %344, %361 : vector<8x8xf32>
    %c2_273 = arith.constant 2 : index
    %c0_274 = arith.constant 0 : index
    %c0_275 = arith.constant 0 : index
    %363 = vector.load %arg12[%c2_273, %c0_274, %c0_275] : memref<4x8x32xbf16, #tpu.memory_space<vmem>>, vector<1x8x32xbf16>
    %364 = vector.shape_cast %363 : vector<1x8x32xbf16> to vector<8x32xbf16>
    %cst_276 = arith.constant dense<0.000000e+00> : vector<8x4xf32>
    %365 = tpu.matmul %364, %323, %cst_276 {dimension_numbers = #tpu.dot_dimension_numbers<[1], [1], [0], [0], [0, 0, 1, 0], [], []>} : vector<8x32xbf16>, vector<4x32xbf16>, vector<8x4xf32> -> vector<8x4xf32>
    %c2_277 = arith.constant 2 : index
    %c0_278 = arith.constant 0 : index
    %c0_279 = arith.constant 0 : index
    %366 = vector.load %arg13[%c2_277, %c0_278, %c0_279] : memref<4x8x1xf32, #tpu.memory_space<vmem>>, vector<1x8x1xf32>
    %367 = vector.shape_cast %366 : vector<1x8x1xf32> to vector<8x1xf32>
    %368 = vector.broadcast %367 : vector<8x1xf32> to vector<8x4xf32>
    %369 = arith.addf %365, %368 : vector<8x4xf32>
    %c2_280 = arith.constant 2 : index
    %c0_281 = arith.constant 0 : index
    %c0_282 = arith.constant 0 : index
    %370 = vector.load %arg14[%c2_280, %c0_281, %c0_282] : memref<4x32x8xbf16, #tpu.memory_space<vmem>>, vector<1x32x8xbf16>
    %371 = vector.shape_cast %370 : vector<1x32x8xbf16> to vector<32x8xbf16>
    %cst_283 = arith.constant dense<0.000000e+00> : vector<4x8xf32>
    %372 = tpu.matmul %323, %371, %cst_283 {dimension_numbers = #tpu.dot_dimension_numbers<[1], [0], [0], [1], [0, 0, 1, 1], [], []>} : vector<4x32xbf16>, vector<32x8xbf16>, vector<4x8xf32> -> vector<4x8xf32>
    %c2_284 = arith.constant 2 : index
    %c0_285 = arith.constant 0 : index
    %c0_286 = arith.constant 0 : index
    %373 = vector.load %arg15[%c2_284, %c0_285, %c0_286] : memref<4x1x8xf32, #tpu.memory_space<vmem>>, vector<1x1x8xf32>
    %374 = vector.shape_cast %373 : vector<1x1x8xf32> to vector<1x8xf32>
    %375 = vector.broadcast %374 : vector<1x8xf32> to vector<4x8xf32>
    %376 = arith.addf %372, %375 : vector<4x8xf32>
    %377 = arith.truncf %369 : vector<8x4xf32> to vector<8x4xbf16>
    %378 = arith.truncf %376 : vector<4x8xf32> to vector<4x8xbf16>
    %cst_287 = arith.constant dense<0.000000e+00> : vector<8x8xf32>
    %379 = tpu.matmul %377, %378, %cst_287 {dimension_numbers = #tpu.dot_dimension_numbers<[1], [0], [0], [1], [0, 0, 1, 1], [], []>} : vector<8x4xbf16>, vector<4x8xbf16>, vector<8x8xf32> -> vector<8x8xf32>
    %380 = arith.addf %362, %379 : vector<8x8xf32>
    %c3_288 = arith.constant 3 : index
    %c0_289 = arith.constant 0 : index
    %c0_290 = arith.constant 0 : index
    %381 = vector.load %arg12[%c3_288, %c0_289, %c0_290] : memref<4x8x32xbf16, #tpu.memory_space<vmem>>, vector<1x8x32xbf16>
    %382 = vector.shape_cast %381 : vector<1x8x32xbf16> to vector<8x32xbf16>
    %cst_291 = arith.constant dense<0.000000e+00> : vector<8x4xf32>
    %383 = tpu.matmul %382, %323, %cst_291 {dimension_numbers = #tpu.dot_dimension_numbers<[1], [1], [0], [0], [0, 0, 1, 0], [], []>} : vector<8x32xbf16>, vector<4x32xbf16>, vector<8x4xf32> -> vector<8x4xf32>
    %c3_292 = arith.constant 3 : index
    %c0_293 = arith.constant 0 : index
    %c0_294 = arith.constant 0 : index
    %384 = vector.load %arg13[%c3_292, %c0_293, %c0_294] : memref<4x8x1xf32, #tpu.memory_space<vmem>>, vector<1x8x1xf32>
    %385 = vector.shape_cast %384 : vector<1x8x1xf32> to vector<8x1xf32>
    %386 = vector.broadcast %385 : vector<8x1xf32> to vector<8x4xf32>
    %387 = arith.addf %383, %386 : vector<8x4xf32>
    %c3_295 = arith.constant 3 : index
    %c0_296 = arith.constant 0 : index
    %c0_297 = arith.constant 0 : index
    %388 = vector.load %arg14[%c3_295, %c0_296, %c0_297] : memref<4x32x8xbf16, #tpu.memory_space<vmem>>, vector<1x32x8xbf16>
    %389 = vector.shape_cast %388 : vector<1x32x8xbf16> to vector<32x8xbf16>
    %cst_298 = arith.constant dense<0.000000e+00> : vector<4x8xf32>
    %390 = tpu.matmul %323, %389, %cst_298 {dimension_numbers = #tpu.dot_dimension_numbers<[1], [0], [0], [1], [0, 0, 1, 1], [], []>} : vector<4x32xbf16>, vector<32x8xbf16>, vector<4x8xf32> -> vector<4x8xf32>
    %c3_299 = arith.constant 3 : index
    %c0_300 = arith.constant 0 : index
    %c0_301 = arith.constant 0 : index
    %391 = vector.load %arg15[%c3_299, %c0_300, %c0_301] : memref<4x1x8xf32, #tpu.memory_space<vmem>>, vector<1x1x8xf32>
    %392 = vector.shape_cast %391 : vector<1x1x8xf32> to vector<1x8xf32>
    %393 = vector.broadcast %392 : vector<1x8xf32> to vector<4x8xf32>
    %394 = arith.addf %390, %393 : vector<4x8xf32>
    %395 = arith.truncf %387 : vector<8x4xf32> to vector<8x4xbf16>
    %396 = arith.truncf %394 : vector<4x8xf32> to vector<4x8xbf16>
    %cst_302 = arith.constant dense<0.000000e+00> : vector<8x8xf32>
    %397 = tpu.matmul %395, %396, %cst_302 {dimension_numbers = #tpu.dot_dimension_numbers<[1], [0], [0], [1], [0, 0, 1, 1], [], []>} : vector<8x4xbf16>, vector<4x8xbf16>, vector<8x8xf32> -> vector<8x8xf32>
    %398 = arith.addf %380, %397 : vector<8x8xf32>
    %cst_303 = arith.constant 2.500000e-01 : f32
    %399 = vector.broadcast %cst_303 : f32 to vector<8x8xf32>
    %400 = arith.mulf %398, %399 : vector<8x8xf32>
    %cst_304 = arith.constant dense<0xFF800000> : vector<8xf32>
    %401 = vector.multi_reduction <maximumf>, %400, %cst_304 [1] : vector<8x8xf32> to vector<8xf32>
    %402 = vector.shape_cast %401 : vector<8xf32> to vector<8x1xf32>
    %403 = vector.broadcast %402 : vector<8x1xf32> to vector<8x8xf32>
    %404 = arith.subf %400, %403 : vector<8x8xf32>
    %405 = math.exp %404 : vector<8x8xf32>
    %cst_305 = arith.constant dense<0.000000e+00> : vector<8xf32>
    %406 = vector.multi_reduction <add>, %405, %cst_305 [1] : vector<8x8xf32> to vector<8xf32>
    %407 = vector.shape_cast %406 : vector<8xf32> to vector<8x1xf32>
    %408 = vector.broadcast %407 : vector<8x1xf32> to vector<8x8xf32>
    %409 = arith.divf %405, %408 : vector<8x8xf32>
    %cst_306 = arith.constant 0.000000e+00 : f32
    %410 = vector.broadcast %cst_306 : f32 to vector<8x32xf32>
    %c0_307 = arith.constant 0 : index
    %c0_308 = arith.constant 0 : index
    %c0_309 = arith.constant 0 : index
    %411 = vector.load %arg16[%c0_307, %c0_308, %c0_309] : memref<4x8x32xbf16, #tpu.memory_space<vmem>>, vector<1x8x32xbf16>
    %412 = vector.shape_cast %411 : vector<1x8x32xbf16> to vector<8x32xbf16>
    %cst_310 = arith.constant dense<0.000000e+00> : vector<8x4xf32>
    %413 = tpu.matmul %412, %325, %cst_310 {dimension_numbers = #tpu.dot_dimension_numbers<[1], [1], [0], [0], [0, 0, 1, 0], [], []>} : vector<8x32xbf16>, vector<4x32xbf16>, vector<8x4xf32> -> vector<8x4xf32>
    %c0_311 = arith.constant 0 : index
    %c0_312 = arith.constant 0 : index
    %c0_313 = arith.constant 0 : index
    %414 = vector.load %arg17[%c0_311, %c0_312, %c0_313] : memref<4x8x1xf32, #tpu.memory_space<vmem>>, vector<1x8x1xf32>
    %415 = vector.shape_cast %414 : vector<1x8x1xf32> to vector<8x1xf32>
    %416 = vector.broadcast %415 : vector<8x1xf32> to vector<8x4xf32>
    %417 = arith.addf %413, %416 : vector<8x4xf32>
    %c0_314 = arith.constant 0 : index
    %c0_315 = arith.constant 0 : index
    %c0_316 = arith.constant 0 : index
    %418 = vector.load %arg18[%c0_314, %c0_315, %c0_316] : memref<8x4x32xbf16, #tpu.memory_space<vmem>>, vector<1x4x32xbf16>
    %419 = vector.shape_cast %418 : vector<1x4x32xbf16> to vector<4x32xbf16>
    %420 = arith.truncf %417 : vector<8x4xf32> to vector<8x4xbf16>
    %cst_317 = arith.constant dense<0.000000e+00> : vector<8x32xf32>
    %421 = tpu.matmul %420, %419, %cst_317 {dimension_numbers = #tpu.dot_dimension_numbers<[1], [0], [0], [1], [0, 0, 1, 1], [], []>} : vector<8x4xbf16>, vector<4x32xbf16>, vector<8x32xf32> -> vector<8x32xf32>
    %422 = arith.addf %410, %421 : vector<8x32xf32>
    %c1_318 = arith.constant 1 : index
    %c0_319 = arith.constant 0 : index
    %c0_320 = arith.constant 0 : index
    %423 = vector.load %arg16[%c1_318, %c0_319, %c0_320] : memref<4x8x32xbf16, #tpu.memory_space<vmem>>, vector<1x8x32xbf16>
    %424 = vector.shape_cast %423 : vector<1x8x32xbf16> to vector<8x32xbf16>
    %cst_321 = arith.constant dense<0.000000e+00> : vector<8x4xf32>
    %425 = tpu.matmul %424, %325, %cst_321 {dimension_numbers = #tpu.dot_dimension_numbers<[1], [1], [0], [0], [0, 0, 1, 0], [], []>} : vector<8x32xbf16>, vector<4x32xbf16>, vector<8x4xf32> -> vector<8x4xf32>
    %c1_322 = arith.constant 1 : index
    %c0_323 = arith.constant 0 : index
    %c0_324 = arith.constant 0 : index
    %426 = vector.load %arg17[%c1_322, %c0_323, %c0_324] : memref<4x8x1xf32, #tpu.memory_space<vmem>>, vector<1x8x1xf32>
    %427 = vector.shape_cast %426 : vector<1x8x1xf32> to vector<8x1xf32>
    %428 = vector.broadcast %427 : vector<8x1xf32> to vector<8x4xf32>
    %429 = arith.addf %425, %428 : vector<8x4xf32>
    %c1_325 = arith.constant 1 : index
    %c0_326 = arith.constant 0 : index
    %c0_327 = arith.constant 0 : index
    %430 = vector.load %arg18[%c1_325, %c0_326, %c0_327] : memref<8x4x32xbf16, #tpu.memory_space<vmem>>, vector<1x4x32xbf16>
    %431 = vector.shape_cast %430 : vector<1x4x32xbf16> to vector<4x32xbf16>
    %432 = arith.truncf %429 : vector<8x4xf32> to vector<8x4xbf16>
    %cst_328 = arith.constant dense<0.000000e+00> : vector<8x32xf32>
    %433 = tpu.matmul %432, %431, %cst_328 {dimension_numbers = #tpu.dot_dimension_numbers<[1], [0], [0], [1], [0, 0, 1, 1], [], []>} : vector<8x4xbf16>, vector<4x32xbf16>, vector<8x32xf32> -> vector<8x32xf32>
    %434 = arith.addf %422, %433 : vector<8x32xf32>
    %c2_329 = arith.constant 2 : index
    %c0_330 = arith.constant 0 : index
    %c0_331 = arith.constant 0 : index
    %435 = vector.load %arg16[%c2_329, %c0_330, %c0_331] : memref<4x8x32xbf16, #tpu.memory_space<vmem>>, vector<1x8x32xbf16>
    %436 = vector.shape_cast %435 : vector<1x8x32xbf16> to vector<8x32xbf16>
    %cst_332 = arith.constant dense<0.000000e+00> : vector<8x4xf32>
    %437 = tpu.matmul %436, %325, %cst_332 {dimension_numbers = #tpu.dot_dimension_numbers<[1], [1], [0], [0], [0, 0, 1, 0], [], []>} : vector<8x32xbf16>, vector<4x32xbf16>, vector<8x4xf32> -> vector<8x4xf32>
    %c2_333 = arith.constant 2 : index
    %c0_334 = arith.constant 0 : index
    %c0_335 = arith.constant 0 : index
    %438 = vector.load %arg17[%c2_333, %c0_334, %c0_335] : memref<4x8x1xf32, #tpu.memory_space<vmem>>, vector<1x8x1xf32>
    %439 = vector.shape_cast %438 : vector<1x8x1xf32> to vector<8x1xf32>
    %440 = vector.broadcast %439 : vector<8x1xf32> to vector<8x4xf32>
    %441 = arith.addf %437, %440 : vector<8x4xf32>
    %c2_336 = arith.constant 2 : index
    %c0_337 = arith.constant 0 : index
    %c0_338 = arith.constant 0 : index
    %442 = vector.load %arg18[%c2_336, %c0_337, %c0_338] : memref<8x4x32xbf16, #tpu.memory_space<vmem>>, vector<1x4x32xbf16>
    %443 = vector.shape_cast %442 : vector<1x4x32xbf16> to vector<4x32xbf16>
    %444 = arith.truncf %441 : vector<8x4xf32> to vector<8x4xbf16>
    %cst_339 = arith.constant dense<0.000000e+00> : vector<8x32xf32>
    %445 = tpu.matmul %444, %443, %cst_339 {dimension_numbers = #tpu.dot_dimension_numbers<[1], [0], [0], [1], [0, 0, 1, 1], [], []>} : vector<8x4xbf16>, vector<4x32xbf16>, vector<8x32xf32> -> vector<8x32xf32>
    %446 = arith.addf %434, %445 : vector<8x32xf32>
    %c3_340 = arith.constant 3 : index
    %c0_341 = arith.constant 0 : index
    %c0_342 = arith.constant 0 : index
    %447 = vector.load %arg16[%c3_340, %c0_341, %c0_342] : memref<4x8x32xbf16, #tpu.memory_space<vmem>>, vector<1x8x32xbf16>
    %448 = vector.shape_cast %447 : vector<1x8x32xbf16> to vector<8x32xbf16>
    %cst_343 = arith.constant dense<0.000000e+00> : vector<8x4xf32>
    %449 = tpu.matmul %448, %325, %cst_343 {dimension_numbers = #tpu.dot_dimension_numbers<[1], [1], [0], [0], [0, 0, 1, 0], [], []>} : vector<8x32xbf16>, vector<4x32xbf16>, vector<8x4xf32> -> vector<8x4xf32>
    %c3_344 = arith.constant 3 : index
    %c0_345 = arith.constant 0 : index
    %c0_346 = arith.constant 0 : index
    %450 = vector.load %arg17[%c3_344, %c0_345, %c0_346] : memref<4x8x1xf32, #tpu.memory_space<vmem>>, vector<1x8x1xf32>
    %451 = vector.shape_cast %450 : vector<1x8x1xf32> to vector<8x1xf32>
    %452 = vector.broadcast %451 : vector<8x1xf32> to vector<8x4xf32>
    %453 = arith.addf %449, %452 : vector<8x4xf32>
    %c3_347 = arith.constant 3 : index
    %c0_348 = arith.constant 0 : index
    %c0_349 = arith.constant 0 : index
    %454 = vector.load %arg18[%c3_347, %c0_348, %c0_349] : memref<8x4x32xbf16, #tpu.memory_space<vmem>>, vector<1x4x32xbf16>
    %455 = vector.shape_cast %454 : vector<1x4x32xbf16> to vector<4x32xbf16>
    %456 = arith.truncf %453 : vector<8x4xf32> to vector<8x4xbf16>
    %cst_350 = arith.constant dense<0.000000e+00> : vector<8x32xf32>
    %457 = tpu.matmul %456, %455, %cst_350 {dimension_numbers = #tpu.dot_dimension_numbers<[1], [0], [0], [1], [0, 0, 1, 1], [], []>} : vector<8x4xbf16>, vector<4x32xbf16>, vector<8x32xf32> -> vector<8x32xf32>
    %458 = arith.addf %446, %457 : vector<8x32xf32>
    %459 = arith.truncf %409 : vector<8x8xf32> to vector<8x8xbf16>
    %460 = arith.truncf %458 : vector<8x32xf32> to vector<8x32xbf16>
    %cst_351 = arith.constant dense<0.000000e+00> : vector<8x32xf32>
    %461 = tpu.matmul %459, %460, %cst_351 {dimension_numbers = #tpu.dot_dimension_numbers<[1], [0], [0], [1], [0, 0, 1, 1], [], []>} : vector<8x8xbf16>, vector<8x32xbf16>, vector<8x32xf32> -> vector<8x32xf32>
    %462 = arith.addf %321, %461 : vector<8x32xf32>
    %c4_352 = arith.constant 4 : index
    %c0_353 = arith.constant 0 : index
    %463 = vector.load %arg1[%c4_352, %c0_353] : memref<8x32xf32, #tpu.memory_space<vmem>>, vector<4x32xf32>
    %464 = arith.truncf %463 : vector<4x32xf32> to vector<4x32xbf16>
    %c4_354 = arith.constant 4 : index
    %c0_355 = arith.constant 0 : index
    %465 = vector.load %arg29[%c4_354, %c0_355] : memref<8x32xf32, #tpu.memory_space<vmem>>, vector<4x32xf32>
    %466 = arith.truncf %465 : vector<4x32xf32> to vector<4x32xbf16>
    %cst_356 = arith.constant 0.000000e+00 : f32
    %467 = vector.broadcast %cst_356 : f32 to vector<8x8xf32>
    %c0_357 = arith.constant 0 : index
    %c0_358 = arith.constant 0 : index
    %c0_359 = arith.constant 0 : index
    %468 = vector.load %arg12[%c0_357, %c0_358, %c0_359] : memref<4x8x32xbf16, #tpu.memory_space<vmem>>, vector<1x8x32xbf16>
    %469 = vector.shape_cast %468 : vector<1x8x32xbf16> to vector<8x32xbf16>
    %cst_360 = arith.constant dense<0.000000e+00> : vector<8x4xf32>
    %470 = tpu.matmul %469, %464, %cst_360 {dimension_numbers = #tpu.dot_dimension_numbers<[1], [1], [0], [0], [0, 0, 1, 0], [], []>} : vector<8x32xbf16>, vector<4x32xbf16>, vector<8x4xf32> -> vector<8x4xf32>
    %c0_361 = arith.constant 0 : index
    %c0_362 = arith.constant 0 : index
    %c0_363 = arith.constant 0 : index
    %471 = vector.load %arg13[%c0_361, %c0_362, %c0_363] : memref<4x8x1xf32, #tpu.memory_space<vmem>>, vector<1x8x1xf32>
    %472 = vector.shape_cast %471 : vector<1x8x1xf32> to vector<8x1xf32>
    %473 = vector.broadcast %472 : vector<8x1xf32> to vector<8x4xf32>
    %474 = arith.addf %470, %473 : vector<8x4xf32>
    %c0_364 = arith.constant 0 : index
    %c0_365 = arith.constant 0 : index
    %c0_366 = arith.constant 0 : index
    %475 = vector.load %arg14[%c0_364, %c0_365, %c0_366] : memref<4x32x8xbf16, #tpu.memory_space<vmem>>, vector<1x32x8xbf16>
    %476 = vector.shape_cast %475 : vector<1x32x8xbf16> to vector<32x8xbf16>
    %cst_367 = arith.constant dense<0.000000e+00> : vector<4x8xf32>
    %477 = tpu.matmul %464, %476, %cst_367 {dimension_numbers = #tpu.dot_dimension_numbers<[1], [0], [0], [1], [0, 0, 1, 1], [], []>} : vector<4x32xbf16>, vector<32x8xbf16>, vector<4x8xf32> -> vector<4x8xf32>
    %c0_368 = arith.constant 0 : index
    %c0_369 = arith.constant 0 : index
    %c0_370 = arith.constant 0 : index
    %478 = vector.load %arg15[%c0_368, %c0_369, %c0_370] : memref<4x1x8xf32, #tpu.memory_space<vmem>>, vector<1x1x8xf32>
    %479 = vector.shape_cast %478 : vector<1x1x8xf32> to vector<1x8xf32>
    %480 = vector.broadcast %479 : vector<1x8xf32> to vector<4x8xf32>
    %481 = arith.addf %477, %480 : vector<4x8xf32>
    %482 = arith.truncf %474 : vector<8x4xf32> to vector<8x4xbf16>
    %483 = arith.truncf %481 : vector<4x8xf32> to vector<4x8xbf16>
    %cst_371 = arith.constant dense<0.000000e+00> : vector<8x8xf32>
    %484 = tpu.matmul %482, %483, %cst_371 {dimension_numbers = #tpu.dot_dimension_numbers<[1], [0], [0], [1], [0, 0, 1, 1], [], []>} : vector<8x4xbf16>, vector<4x8xbf16>, vector<8x8xf32> -> vector<8x8xf32>
    %485 = arith.addf %467, %484 : vector<8x8xf32>
    %c1_372 = arith.constant 1 : index
    %c0_373 = arith.constant 0 : index
    %c0_374 = arith.constant 0 : index
    %486 = vector.load %arg12[%c1_372, %c0_373, %c0_374] : memref<4x8x32xbf16, #tpu.memory_space<vmem>>, vector<1x8x32xbf16>
    %487 = vector.shape_cast %486 : vector<1x8x32xbf16> to vector<8x32xbf16>
    %cst_375 = arith.constant dense<0.000000e+00> : vector<8x4xf32>
    %488 = tpu.matmul %487, %464, %cst_375 {dimension_numbers = #tpu.dot_dimension_numbers<[1], [1], [0], [0], [0, 0, 1, 0], [], []>} : vector<8x32xbf16>, vector<4x32xbf16>, vector<8x4xf32> -> vector<8x4xf32>
    %c1_376 = arith.constant 1 : index
    %c0_377 = arith.constant 0 : index
    %c0_378 = arith.constant 0 : index
    %489 = vector.load %arg13[%c1_376, %c0_377, %c0_378] : memref<4x8x1xf32, #tpu.memory_space<vmem>>, vector<1x8x1xf32>
    %490 = vector.shape_cast %489 : vector<1x8x1xf32> to vector<8x1xf32>
    %491 = vector.broadcast %490 : vector<8x1xf32> to vector<8x4xf32>
    %492 = arith.addf %488, %491 : vector<8x4xf32>
    %c1_379 = arith.constant 1 : index
    %c0_380 = arith.constant 0 : index
    %c0_381 = arith.constant 0 : index
    %493 = vector.load %arg14[%c1_379, %c0_380, %c0_381] : memref<4x32x8xbf16, #tpu.memory_space<vmem>>, vector<1x32x8xbf16>
    %494 = vector.shape_cast %493 : vector<1x32x8xbf16> to vector<32x8xbf16>
    %cst_382 = arith.constant dense<0.000000e+00> : vector<4x8xf32>
    %495 = tpu.matmul %464, %494, %cst_382 {dimension_numbers = #tpu.dot_dimension_numbers<[1], [0], [0], [1], [0, 0, 1, 1], [], []>} : vector<4x32xbf16>, vector<32x8xbf16>, vector<4x8xf32> -> vector<4x8xf32>
    %c1_383 = arith.constant 1 : index
    %c0_384 = arith.constant 0 : index
    %c0_385 = arith.constant 0 : index
    %496 = vector.load %arg15[%c1_383, %c0_384, %c0_385] : memref<4x1x8xf32, #tpu.memory_space<vmem>>, vector<1x1x8xf32>
    %497 = vector.shape_cast %496 : vector<1x1x8xf32> to vector<1x8xf32>
    %498 = vector.broadcast %497 : vector<1x8xf32> to vector<4x8xf32>
    %499 = arith.addf %495, %498 : vector<4x8xf32>
    %500 = arith.truncf %492 : vector<8x4xf32> to vector<8x4xbf16>
    %501 = arith.truncf %499 : vector<4x8xf32> to vector<4x8xbf16>
    %cst_386 = arith.constant dense<0.000000e+00> : vector<8x8xf32>
    %502 = tpu.matmul %500, %501, %cst_386 {dimension_numbers = #tpu.dot_dimension_numbers<[1], [0], [0], [1], [0, 0, 1, 1], [], []>} : vector<8x4xbf16>, vector<4x8xbf16>, vector<8x8xf32> -> vector<8x8xf32>
    %503 = arith.addf %485, %502 : vector<8x8xf32>
    %c2_387 = arith.constant 2 : index
    %c0_388 = arith.constant 0 : index
    %c0_389 = arith.constant 0 : index
    %504 = vector.load %arg12[%c2_387, %c0_388, %c0_389] : memref<4x8x32xbf16, #tpu.memory_space<vmem>>, vector<1x8x32xbf16>
    %505 = vector.shape_cast %504 : vector<1x8x32xbf16> to vector<8x32xbf16>
    %cst_390 = arith.constant dense<0.000000e+00> : vector<8x4xf32>
    %506 = tpu.matmul %505, %464, %cst_390 {dimension_numbers = #tpu.dot_dimension_numbers<[1], [1], [0], [0], [0, 0, 1, 0], [], []>} : vector<8x32xbf16>, vector<4x32xbf16>, vector<8x4xf32> -> vector<8x4xf32>
    %c2_391 = arith.constant 2 : index
    %c0_392 = arith.constant 0 : index
    %c0_393 = arith.constant 0 : index
    %507 = vector.load %arg13[%c2_391, %c0_392, %c0_393] : memref<4x8x1xf32, #tpu.memory_space<vmem>>, vector<1x8x1xf32>
    %508 = vector.shape_cast %507 : vector<1x8x1xf32> to vector<8x1xf32>
    %509 = vector.broadcast %508 : vector<8x1xf32> to vector<8x4xf32>
    %510 = arith.addf %506, %509 : vector<8x4xf32>
    %c2_394 = arith.constant 2 : index
    %c0_395 = arith.constant 0 : index
    %c0_396 = arith.constant 0 : index
    %511 = vector.load %arg14[%c2_394, %c0_395, %c0_396] : memref<4x32x8xbf16, #tpu.memory_space<vmem>>, vector<1x32x8xbf16>
    %512 = vector.shape_cast %511 : vector<1x32x8xbf16> to vector<32x8xbf16>
    %cst_397 = arith.constant dense<0.000000e+00> : vector<4x8xf32>
    %513 = tpu.matmul %464, %512, %cst_397 {dimension_numbers = #tpu.dot_dimension_numbers<[1], [0], [0], [1], [0, 0, 1, 1], [], []>} : vector<4x32xbf16>, vector<32x8xbf16>, vector<4x8xf32> -> vector<4x8xf32>
    %c2_398 = arith.constant 2 : index
    %c0_399 = arith.constant 0 : index
    %c0_400 = arith.constant 0 : index
    %514 = vector.load %arg15[%c2_398, %c0_399, %c0_400] : memref<4x1x8xf32, #tpu.memory_space<vmem>>, vector<1x1x8xf32>
    %515 = vector.shape_cast %514 : vector<1x1x8xf32> to vector<1x8xf32>
    %516 = vector.broadcast %515 : vector<1x8xf32> to vector<4x8xf32>
    %517 = arith.addf %513, %516 : vector<4x8xf32>
    %518 = arith.truncf %510 : vector<8x4xf32> to vector<8x4xbf16>
    %519 = arith.truncf %517 : vector<4x8xf32> to vector<4x8xbf16>
    %cst_401 = arith.constant dense<0.000000e+00> : vector<8x8xf32>
    %520 = tpu.matmul %518, %519, %cst_401 {dimension_numbers = #tpu.dot_dimension_numbers<[1], [0], [0], [1], [0, 0, 1, 1], [], []>} : vector<8x4xbf16>, vector<4x8xbf16>, vector<8x8xf32> -> vector<8x8xf32>
    %521 = arith.addf %503, %520 : vector<8x8xf32>
    %c3_402 = arith.constant 3 : index
    %c0_403 = arith.constant 0 : index
    %c0_404 = arith.constant 0 : index
    %522 = vector.load %arg12[%c3_402, %c0_403, %c0_404] : memref<4x8x32xbf16, #tpu.memory_space<vmem>>, vector<1x8x32xbf16>
    %523 = vector.shape_cast %522 : vector<1x8x32xbf16> to vector<8x32xbf16>
    %cst_405 = arith.constant dense<0.000000e+00> : vector<8x4xf32>
    %524 = tpu.matmul %523, %464, %cst_405 {dimension_numbers = #tpu.dot_dimension_numbers<[1], [1], [0], [0], [0, 0, 1, 0], [], []>} : vector<8x32xbf16>, vector<4x32xbf16>, vector<8x4xf32> -> vector<8x4xf32>
    %c3_406 = arith.constant 3 : index
    %c0_407 = arith.constant 0 : index
    %c0_408 = arith.constant 0 : index
    %525 = vector.load %arg13[%c3_406, %c0_407, %c0_408] : memref<4x8x1xf32, #tpu.memory_space<vmem>>, vector<1x8x1xf32>
    %526 = vector.shape_cast %525 : vector<1x8x1xf32> to vector<8x1xf32>
    %527 = vector.broadcast %526 : vector<8x1xf32> to vector<8x4xf32>
    %528 = arith.addf %524, %527 : vector<8x4xf32>
    %c3_409 = arith.constant 3 : index
    %c0_410 = arith.constant 0 : index
    %c0_411 = arith.constant 0 : index
    %529 = vector.load %arg14[%c3_409, %c0_410, %c0_411] : memref<4x32x8xbf16, #tpu.memory_space<vmem>>, vector<1x32x8xbf16>
    %530 = vector.shape_cast %529 : vector<1x32x8xbf16> to vector<32x8xbf16>
    %cst_412 = arith.constant dense<0.000000e+00> : vector<4x8xf32>
    %531 = tpu.matmul %464, %530, %cst_412 {dimension_numbers = #tpu.dot_dimension_numbers<[1], [0], [0], [1], [0, 0, 1, 1], [], []>} : vector<4x32xbf16>, vector<32x8xbf16>, vector<4x8xf32> -> vector<4x8xf32>
    %c3_413 = arith.constant 3 : index
    %c0_414 = arith.constant 0 : index
    %c0_415 = arith.constant 0 : index
    %532 = vector.load %arg15[%c3_413, %c0_414, %c0_415] : memref<4x1x8xf32, #tpu.memory_space<vmem>>, vector<1x1x8xf32>
    %533 = vector.shape_cast %532 : vector<1x1x8xf32> to vector<1x8xf32>
    %534 = vector.broadcast %533 : vector<1x8xf32> to vector<4x8xf32>
    %535 = arith.addf %531, %534 : vector<4x8xf32>
    %536 = arith.truncf %528 : vector<8x4xf32> to vector<8x4xbf16>
    %537 = arith.truncf %535 : vector<4x8xf32> to vector<4x8xbf16>
    %cst_416 = arith.constant dense<0.000000e+00> : vector<8x8xf32>
    %538 = tpu.matmul %536, %537, %cst_416 {dimension_numbers = #tpu.dot_dimension_numbers<[1], [0], [0], [1], [0, 0, 1, 1], [], []>} : vector<8x4xbf16>, vector<4x8xbf16>, vector<8x8xf32> -> vector<8x8xf32>
    %539 = arith.addf %521, %538 : vector<8x8xf32>
    %cst_417 = arith.constant 2.500000e-01 : f32
    %540 = vector.broadcast %cst_417 : f32 to vector<8x8xf32>
    %541 = arith.mulf %539, %540 : vector<8x8xf32>
    %cst_418 = arith.constant dense<0xFF800000> : vector<8xf32>
    %542 = vector.multi_reduction <maximumf>, %541, %cst_418 [1] : vector<8x8xf32> to vector<8xf32>
    %543 = vector.shape_cast %542 : vector<8xf32> to vector<8x1xf32>
    %544 = vector.broadcast %543 : vector<8x1xf32> to vector<8x8xf32>
    %545 = arith.subf %541, %544 : vector<8x8xf32>
    %546 = math.exp %545 : vector<8x8xf32>
    %cst_419 = arith.constant dense<0.000000e+00> : vector<8xf32>
    %547 = vector.multi_reduction <add>, %546, %cst_419 [1] : vector<8x8xf32> to vector<8xf32>
    %548 = vector.shape_cast %547 : vector<8xf32> to vector<8x1xf32>
    %549 = vector.broadcast %548 : vector<8x1xf32> to vector<8x8xf32>
    %550 = arith.divf %546, %549 : vector<8x8xf32>
    %cst_420 = arith.constant 0.000000e+00 : f32
    %551 = vector.broadcast %cst_420 : f32 to vector<8x32xf32>
    %c0_421 = arith.constant 0 : index
    %c0_422 = arith.constant 0 : index
    %c0_423 = arith.constant 0 : index
    %552 = vector.load %arg16[%c0_421, %c0_422, %c0_423] : memref<4x8x32xbf16, #tpu.memory_space<vmem>>, vector<1x8x32xbf16>
    %553 = vector.shape_cast %552 : vector<1x8x32xbf16> to vector<8x32xbf16>
    %cst_424 = arith.constant dense<0.000000e+00> : vector<8x4xf32>
    %554 = tpu.matmul %553, %466, %cst_424 {dimension_numbers = #tpu.dot_dimension_numbers<[1], [1], [0], [0], [0, 0, 1, 0], [], []>} : vector<8x32xbf16>, vector<4x32xbf16>, vector<8x4xf32> -> vector<8x4xf32>
    %c0_425 = arith.constant 0 : index
    %c0_426 = arith.constant 0 : index
    %c0_427 = arith.constant 0 : index
    %555 = vector.load %arg17[%c0_425, %c0_426, %c0_427] : memref<4x8x1xf32, #tpu.memory_space<vmem>>, vector<1x8x1xf32>
    %556 = vector.shape_cast %555 : vector<1x8x1xf32> to vector<8x1xf32>
    %557 = vector.broadcast %556 : vector<8x1xf32> to vector<8x4xf32>
    %558 = arith.addf %554, %557 : vector<8x4xf32>
    %c4_428 = arith.constant 4 : index
    %c0_429 = arith.constant 0 : index
    %c0_430 = arith.constant 0 : index
    %559 = vector.load %arg18[%c4_428, %c0_429, %c0_430] : memref<8x4x32xbf16, #tpu.memory_space<vmem>>, vector<1x4x32xbf16>
    %560 = vector.shape_cast %559 : vector<1x4x32xbf16> to vector<4x32xbf16>
    %561 = arith.truncf %558 : vector<8x4xf32> to vector<8x4xbf16>
    %cst_431 = arith.constant dense<0.000000e+00> : vector<8x32xf32>
    %562 = tpu.matmul %561, %560, %cst_431 {dimension_numbers = #tpu.dot_dimension_numbers<[1], [0], [0], [1], [0, 0, 1, 1], [], []>} : vector<8x4xbf16>, vector<4x32xbf16>, vector<8x32xf32> -> vector<8x32xf32>
    %563 = arith.addf %551, %562 : vector<8x32xf32>
    %c1_432 = arith.constant 1 : index
    %c0_433 = arith.constant 0 : index
    %c0_434 = arith.constant 0 : index
    %564 = vector.load %arg16[%c1_432, %c0_433, %c0_434] : memref<4x8x32xbf16, #tpu.memory_space<vmem>>, vector<1x8x32xbf16>
    %565 = vector.shape_cast %564 : vector<1x8x32xbf16> to vector<8x32xbf16>
    %cst_435 = arith.constant dense<0.000000e+00> : vector<8x4xf32>
    %566 = tpu.matmul %565, %466, %cst_435 {dimension_numbers = #tpu.dot_dimension_numbers<[1], [1], [0], [0], [0, 0, 1, 0], [], []>} : vector<8x32xbf16>, vector<4x32xbf16>, vector<8x4xf32> -> vector<8x4xf32>
    %c1_436 = arith.constant 1 : index
    %c0_437 = arith.constant 0 : index
    %c0_438 = arith.constant 0 : index
    %567 = vector.load %arg17[%c1_436, %c0_437, %c0_438] : memref<4x8x1xf32, #tpu.memory_space<vmem>>, vector<1x8x1xf32>
    %568 = vector.shape_cast %567 : vector<1x8x1xf32> to vector<8x1xf32>
    %569 = vector.broadcast %568 : vector<8x1xf32> to vector<8x4xf32>
    %570 = arith.addf %566, %569 : vector<8x4xf32>
    %c5_439 = arith.constant 5 : index
    %c0_440 = arith.constant 0 : index
    %c0_441 = arith.constant 0 : index
    %571 = vector.load %arg18[%c5_439, %c0_440, %c0_441] : memref<8x4x32xbf16, #tpu.memory_space<vmem>>, vector<1x4x32xbf16>
    %572 = vector.shape_cast %571 : vector<1x4x32xbf16> to vector<4x32xbf16>
    %573 = arith.truncf %570 : vector<8x4xf32> to vector<8x4xbf16>
    %cst_442 = arith.constant dense<0.000000e+00> : vector<8x32xf32>
    %574 = tpu.matmul %573, %572, %cst_442 {dimension_numbers = #tpu.dot_dimension_numbers<[1], [0], [0], [1], [0, 0, 1, 1], [], []>} : vector<8x4xbf16>, vector<4x32xbf16>, vector<8x32xf32> -> vector<8x32xf32>
    %575 = arith.addf %563, %574 : vector<8x32xf32>
    %c2_443 = arith.constant 2 : index
    %c0_444 = arith.constant 0 : index
    %c0_445 = arith.constant 0 : index
    %576 = vector.load %arg16[%c2_443, %c0_444, %c0_445] : memref<4x8x32xbf16, #tpu.memory_space<vmem>>, vector<1x8x32xbf16>
    %577 = vector.shape_cast %576 : vector<1x8x32xbf16> to vector<8x32xbf16>
    %cst_446 = arith.constant dense<0.000000e+00> : vector<8x4xf32>
    %578 = tpu.matmul %577, %466, %cst_446 {dimension_numbers = #tpu.dot_dimension_numbers<[1], [1], [0], [0], [0, 0, 1, 0], [], []>} : vector<8x32xbf16>, vector<4x32xbf16>, vector<8x4xf32> -> vector<8x4xf32>
    %c2_447 = arith.constant 2 : index
    %c0_448 = arith.constant 0 : index
    %c0_449 = arith.constant 0 : index
    %579 = vector.load %arg17[%c2_447, %c0_448, %c0_449] : memref<4x8x1xf32, #tpu.memory_space<vmem>>, vector<1x8x1xf32>
    %580 = vector.shape_cast %579 : vector<1x8x1xf32> to vector<8x1xf32>
    %581 = vector.broadcast %580 : vector<8x1xf32> to vector<8x4xf32>
    %582 = arith.addf %578, %581 : vector<8x4xf32>
    %c6_450 = arith.constant 6 : index
    %c0_451 = arith.constant 0 : index
    %c0_452 = arith.constant 0 : index
    %583 = vector.load %arg18[%c6_450, %c0_451, %c0_452] : memref<8x4x32xbf16, #tpu.memory_space<vmem>>, vector<1x4x32xbf16>
    %584 = vector.shape_cast %583 : vector<1x4x32xbf16> to vector<4x32xbf16>
    %585 = arith.truncf %582 : vector<8x4xf32> to vector<8x4xbf16>
    %cst_453 = arith.constant dense<0.000000e+00> : vector<8x32xf32>
    %586 = tpu.matmul %585, %584, %cst_453 {dimension_numbers = #tpu.dot_dimension_numbers<[1], [0], [0], [1], [0, 0, 1, 1], [], []>} : vector<8x4xbf16>, vector<4x32xbf16>, vector<8x32xf32> -> vector<8x32xf32>
    %587 = arith.addf %575, %586 : vector<8x32xf32>
    %c3_454 = arith.constant 3 : index
    %c0_455 = arith.constant 0 : index
    %c0_456 = arith.constant 0 : index
    %588 = vector.load %arg16[%c3_454, %c0_455, %c0_456] : memref<4x8x32xbf16, #tpu.memory_space<vmem>>, vector<1x8x32xbf16>
    %589 = vector.shape_cast %588 : vector<1x8x32xbf16> to vector<8x32xbf16>
    %cst_457 = arith.constant dense<0.000000e+00> : vector<8x4xf32>
    %590 = tpu.matmul %589, %466, %cst_457 {dimension_numbers = #tpu.dot_dimension_numbers<[1], [1], [0], [0], [0, 0, 1, 0], [], []>} : vector<8x32xbf16>, vector<4x32xbf16>, vector<8x4xf32> -> vector<8x4xf32>
    %c3_458 = arith.constant 3 : index
    %c0_459 = arith.constant 0 : index
    %c0_460 = arith.constant 0 : index
    %591 = vector.load %arg17[%c3_458, %c0_459, %c0_460] : memref<4x8x1xf32, #tpu.memory_space<vmem>>, vector<1x8x1xf32>
    %592 = vector.shape_cast %591 : vector<1x8x1xf32> to vector<8x1xf32>
    %593 = vector.broadcast %592 : vector<8x1xf32> to vector<8x4xf32>
    %594 = arith.addf %590, %593 : vector<8x4xf32>
    %c7_461 = arith.constant 7 : index
    %c0_462 = arith.constant 0 : index
    %c0_463 = arith.constant 0 : index
    %595 = vector.load %arg18[%c7_461, %c0_462, %c0_463] : memref<8x4x32xbf16, #tpu.memory_space<vmem>>, vector<1x4x32xbf16>
    %596 = vector.shape_cast %595 : vector<1x4x32xbf16> to vector<4x32xbf16>
    %597 = arith.truncf %594 : vector<8x4xf32> to vector<8x4xbf16>
    %cst_464 = arith.constant dense<0.000000e+00> : vector<8x32xf32>
    %598 = tpu.matmul %597, %596, %cst_464 {dimension_numbers = #tpu.dot_dimension_numbers<[1], [0], [0], [1], [0, 0, 1, 1], [], []>} : vector<8x4xbf16>, vector<4x32xbf16>, vector<8x32xf32> -> vector<8x32xf32>
    %599 = arith.addf %587, %598 : vector<8x32xf32>
    %600 = arith.truncf %550 : vector<8x8xf32> to vector<8x8xbf16>
    %601 = arith.truncf %599 : vector<8x32xf32> to vector<8x32xbf16>
    %cst_465 = arith.constant dense<0.000000e+00> : vector<8x32xf32>
    %602 = tpu.matmul %600, %601, %cst_465 {dimension_numbers = #tpu.dot_dimension_numbers<[1], [0], [0], [1], [0, 0, 1, 1], [], []>} : vector<8x8xbf16>, vector<8x32xbf16>, vector<8x32xf32> -> vector<8x32xf32>
    %603 = arith.addf %462, %602 : vector<8x32xf32>
    %c0_466 = arith.constant 0 : index
    %c0_467 = arith.constant 0 : index
    %604 = vector.load %arg20[%c0_466, %c0_467] : memref<1x32xf32, #tpu.memory_space<vmem>>, vector<1x32xf32>
    %c0_468 = arith.constant 0 : index
    %c0_469 = arith.constant 0 : index
    %605 = vector.load %arg21[%c0_468, %c0_469] : memref<1x32xf32, #tpu.memory_space<vmem>>, vector<1x32xf32>
    %cst_470 = arith.constant dense<0.000000e+00> : vector<8xf32>
    %606 = vector.multi_reduction <add>, %603, %cst_470 [1] : vector<8x32xf32> to vector<8xf32>
    %607 = vector.shape_cast %606 : vector<8xf32> to vector<8x1xf32>
    %cst_471 = arith.constant 3.200000e+01 : f32
    %608 = vector.broadcast %cst_471 : f32 to vector<8x1xf32>
    %609 = arith.divf %607, %608 : vector<8x1xf32>
    %610 = vector.broadcast %609 : vector<8x1xf32> to vector<8x32xf32>
    %611 = arith.subf %603, %610 : vector<8x32xf32>
    %612 = arith.mulf %611, %611 : vector<8x32xf32>
    %cst_472 = arith.constant dense<0.000000e+00> : vector<8xf32>
    %613 = vector.multi_reduction <add>, %612, %cst_472 [1] : vector<8x32xf32> to vector<8xf32>
    %614 = vector.shape_cast %613 : vector<8xf32> to vector<8x1xf32>
    %cst_473 = arith.constant 3.200000e+01 : f32
    %615 = vector.broadcast %cst_473 : f32 to vector<8x1xf32>
    %616 = arith.divf %614, %615 : vector<8x1xf32>
    %617 = vector.broadcast %609 : vector<8x1xf32> to vector<8x32xf32>
    %618 = arith.subf %603, %617 : vector<8x32xf32>
    %cst_474 = arith.constant 9.99999974E-6 : f32
    %619 = vector.broadcast %cst_474 : f32 to vector<8x1xf32>
    %620 = arith.addf %616, %619 : vector<8x1xf32>
    %621 = math.rsqrt %620 : vector<8x1xf32>
    %622 = vector.broadcast %621 : vector<8x1xf32> to vector<8x32xf32>
    %623 = arith.mulf %618, %622 : vector<8x32xf32>
    %624 = vector.broadcast %604 : vector<1x32xf32> to vector<8x32xf32>
    %625 = arith.mulf %623, %624 : vector<8x32xf32>
    %626 = vector.broadcast %605 : vector<1x32xf32> to vector<8x32xf32>
    %627 = arith.addf %625, %626 : vector<8x32xf32>
    %c0_475 = arith.constant 0 : index
    %c0_476 = arith.constant 0 : index
    %628 = vector.load %arg22[%c0_475, %c0_476] : memref<32x64xbf16, #tpu.memory_space<vmem>>, vector<32x64xbf16>
    %629 = arith.truncf %627 : vector<8x32xf32> to vector<8x32xbf16>
    %cst_477 = arith.constant dense<0.000000e+00> : vector<8x64xf32>
    %630 = tpu.matmul %629, %628, %cst_477 {dimension_numbers = #tpu.dot_dimension_numbers<[1], [0], [0], [1], [0, 0, 1, 1], [], []>} : vector<8x32xbf16>, vector<32x64xbf16>, vector<8x64xf32> -> vector<8x64xf32>
    %c0_478 = arith.constant 0 : index
    %c0_479 = arith.constant 0 : index
    %631 = vector.load %arg23[%c0_478, %c0_479] : memref<1x64xf32, #tpu.memory_space<vmem>>, vector<1x64xf32>
    %632 = vector.broadcast %631 : vector<1x64xf32> to vector<8x64xf32>
    %633 = arith.addf %630, %632 : vector<8x64xf32>
    %cst_480 = arith.constant 0.000000e+00 : f32
    %634 = vector.broadcast %cst_480 : f32 to vector<8x64xf32>
    %635 = arith.maximumf %633, %634 : vector<8x64xf32>
    %c0_481 = arith.constant 0 : index
    %c0_482 = arith.constant 0 : index
    %636 = vector.load %arg24[%c0_481, %c0_482] : memref<64x32xbf16, #tpu.memory_space<vmem>>, vector<64x32xbf16>
    %637 = arith.truncf %635 : vector<8x64xf32> to vector<8x64xbf16>
    %cst_483 = arith.constant dense<0.000000e+00> : vector<8x32xf32>
    %638 = tpu.matmul %637, %636, %cst_483 {dimension_numbers = #tpu.dot_dimension_numbers<[1], [0], [0], [1], [0, 0, 1, 1], [], []>} : vector<8x64xbf16>, vector<64x32xbf16>, vector<8x32xf32> -> vector<8x32xf32>
    %c0_484 = arith.constant 0 : index
    %c0_485 = arith.constant 0 : index
    %639 = vector.load %arg25[%c0_484, %c0_485] : memref<1x32xf32, #tpu.memory_space<vmem>>, vector<1x32xf32>
    %640 = vector.broadcast %639 : vector<1x32xf32> to vector<8x32xf32>
    %641 = arith.addf %638, %640 : vector<8x32xf32>
    %642 = arith.addf %641, %627 : vector<8x32xf32>
    %c0_486 = arith.constant 0 : index
    %c0_487 = arith.constant 0 : index
    %643 = vector.load %arg26[%c0_486, %c0_487] : memref<1x32xf32, #tpu.memory_space<vmem>>, vector<1x32xf32>
    %c0_488 = arith.constant 0 : index
    %c0_489 = arith.constant 0 : index
    %644 = vector.load %arg27[%c0_488, %c0_489] : memref<1x32xf32, #tpu.memory_space<vmem>>, vector<1x32xf32>
    %cst_490 = arith.constant dense<0.000000e+00> : vector<8xf32>
    %645 = vector.multi_reduction <add>, %642, %cst_490 [1] : vector<8x32xf32> to vector<8xf32>
    %646 = vector.shape_cast %645 : vector<8xf32> to vector<8x1xf32>
    %cst_491 = arith.constant 3.200000e+01 : f32
    %647 = vector.broadcast %cst_491 : f32 to vector<8x1xf32>
    %648 = arith.divf %646, %647 : vector<8x1xf32>
    %649 = vector.broadcast %648 : vector<8x1xf32> to vector<8x32xf32>
    %650 = arith.subf %642, %649 : vector<8x32xf32>
    %651 = arith.mulf %650, %650 : vector<8x32xf32>
    %cst_492 = arith.constant dense<0.000000e+00> : vector<8xf32>
    %652 = vector.multi_reduction <add>, %651, %cst_492 [1] : vector<8x32xf32> to vector<8xf32>
    %653 = vector.shape_cast %652 : vector<8xf32> to vector<8x1xf32>
    %cst_493 = arith.constant 3.200000e+01 : f32
    %654 = vector.broadcast %cst_493 : f32 to vector<8x1xf32>
    %655 = arith.divf %653, %654 : vector<8x1xf32>
    %656 = vector.broadcast %648 : vector<8x1xf32> to vector<8x32xf32>
    %657 = arith.subf %642, %656 : vector<8x32xf32>
    %cst_494 = arith.constant 9.99999974E-6 : f32
    %658 = vector.broadcast %cst_494 : f32 to vector<8x1xf32>
    %659 = arith.addf %655, %658 : vector<8x1xf32>
    %660 = math.rsqrt %659 : vector<8x1xf32>
    %661 = vector.broadcast %660 : vector<8x1xf32> to vector<8x32xf32>
    %662 = arith.mulf %657, %661 : vector<8x32xf32>
    %663 = vector.broadcast %643 : vector<1x32xf32> to vector<8x32xf32>
    %664 = arith.mulf %662, %663 : vector<8x32xf32>
    %665 = vector.broadcast %644 : vector<1x32xf32> to vector<8x32xf32>
    %666 = arith.addf %664, %665 : vector<8x32xf32>
    %c0_495 = arith.constant 0 : index
    %c0_496 = arith.constant 0 : index
    %667 = vector.load %arg28[%c0_495, %c0_496] : memref<8x32xf32, #tpu.memory_space<vmem>>, vector<8x32xf32>
    tpu.vector_store %arg28[%c0_495, %c0_496], %666 {strides = array<i32>} : memref<8x32xf32, #tpu.memory_space<vmem>>, vector<8x32xf32>,
    return
  }
}

</mosaic_0001>

<llo_original>
// kernel: decoder_layer_forward.1
$region0: #{decoder_layer_forward.1}
  #allocation0 [shape = 'u32[]', space=smem, size = 0x4, offset = 0x4, fixed_abs, tag = 'smem constant byte address 0x4 - core index']
  #allocation1 [shape = 'u32[72,128]{1,0:T(1,128)}', space=vmem, size = 0x9000, scoped, tag = 'internal scratch']
  #allocation2 [shape = 'f32[8,32]{1,0:T(8,128)}', space=vmem, size = 0x1000, scoped, tag = 'scratch operand']
  %s0 = inlined_call_operand.vmem [shape: f32[8,32], index: 0, kind: input, shape index: {}]
  %s1 = inlined_call_operand.vmem [shape: f32[8,32], index: 1, kind: input, shape index: {}]
  %s2 = inlined_call_operand.vmem [shape: bf16[4,8,32], index: 2, kind: input, shape index: {}]
  %s3 = inlined_call_operand.vmem [shape: f32[4,8,1], index: 3, kind: input, shape index: {}]
  %s4 = inlined_call_operand.vmem [shape: bf16[4,32,8], index: 4, kind: input, shape index: {}]
  %s5 = inlined_call_operand.vmem [shape: f32[4,1,8], index: 5, kind: input, shape index: {}]
  %s6 = inlined_call_operand.vmem [shape: bf16[4,8,32], index: 6, kind: input, shape index: {}]
  %s7 = inlined_call_operand.vmem [shape: f32[4,8,1], index: 7, kind: input, shape index: {}]
  %s8 = inlined_call_operand.vmem [shape: bf16[8,4,32], index: 8, kind: input, shape index: {}]
  %s9 = inlined_call_operand.vmem [shape: f32[1,32], index: 9, kind: input, shape index: {}]
  %s10 = inlined_call_operand.vmem [shape: f32[1,32], index: 10, kind: input, shape index: {}]
  %s11 = inlined_call_operand.vmem [shape: f32[1,32], index: 11, kind: input, shape index: {}]
  %s12 = inlined_call_operand.vmem [shape: bf16[4,8,32], index: 12, kind: input, shape index: {}]
  %s13 = inlined_call_operand.vmem [shape: f32[4,8,1], index: 13, kind: input, shape index: {}]
  %s14 = inlined_call_operand.vmem [shape: bf16[4,32,8], index: 14, kind: input, shape index: {}]
  %s15 = inlined_call_operand.vmem [shape: f32[4,1,8], index: 15, kind: input, shape index: {}]
  %s16 = inlined_call_operand.vmem [shape: bf16[4,8,32], index: 16, kind: input, shape index: {}]
  %s17 = inlined_call_operand.vmem [shape: f32[4,8,1], index: 17, kind: input, shape index: {}]
  %s18 = inlined_call_operand.vmem [shape: bf16[8,4,32], index: 18, kind: input, shape index: {}]
  %s19 = inlined_call_operand.vmem [shape: f32[1,32], index: 19, kind: input, shape index: {}]
  %s20 = inlined_call_operand.vmem [shape: f32[1,32], index: 20, kind: input, shape index: {}]
  %s21 = inlined_call_operand.vmem [shape: f32[1,32], index: 21, kind: input, shape index: {}]
  %s22 = inlined_call_operand.vmem [shape: bf16[32,64], index: 22, kind: input, shape index: {}]
  %s23 = inlined_call_operand.vmem [shape: f32[1,64], index: 23, kind: input, shape index: {}]
  %s24 = inlined_call_operand.vmem [shape: bf16[64,32], index: 24, kind: input, shape index: {}]
  %s25 = inlined_call_operand.vmem [shape: f32[1,32], index: 25, kind: input, shape index: {}]
  %s26 = inlined_call_operand.vmem [shape: f32[1,32], index: 26, kind: input, shape index: {}]
  %s27 = inlined_call_operand.vmem [shape: f32[1,32], index: 27, kind: input, shape index: {}]
  %s28 = inlined_call_operand.hbm [shape: f32[8,32], index: 28, kind: output, shape index: {}]
  %s29 = sld [smem:[#allocation0]]
  $region122: #{decoder_layer_forward.1} parent=0
    _
  %s31 = ssub.s32 1, %s29
  %s32 = scalar_select 0, %s31, %s29
  $region1: #{decoder_layer_forward.1} parent=0
    #allocation3 [shape = 'u8[4096]{0}', space=vmem, size = 0x1000, scoped, tag = 'output window, operand 0, single buffered']
    #allocation4 [shape = 's32[1]{0}', space=sflag, size = 0x4, scoped, tag = 'scoped memory for decoder_layer_forward.1']
    %33 = vsyncpa [#allocation4], 0
    // Predicated region
    $region2: #{decoder_layer_forward.1} parent=1 // pred_check
      _
    $region3: #{decoder_layer_forward.1} parent=1 // pred_check_branch
      %35 = sbr.rel (0) target = $region5
    $region4: #{decoder_layer_forward.1} parent=1 // pred_region
      _
    $region5: #{decoder_layer_forward.1} parent=1 // pred_fallthru
      _
    // Predicated region
    $region6: #{decoder_layer_forward.1} parent=1 // pred_check
      _
    $region7: #{decoder_layer_forward.1} parent=1 // pred_check_branch
      %37 = sbr.rel (0) target = $region9
    $region8: #{decoder_layer_forward.1} parent=1 // pred_region
      _
    $region9: #{decoder_layer_forward.1} parent=1 // pred_fallthru
      _
    // Predicated region
    $region10: #{decoder_layer_forward.1} parent=1 // pred_check
      _
    $region11: #{decoder_layer_forward.1} parent=1 // pred_check_branch
      %39 = sbr.rel (0) target = $region13
    $region12: #{decoder_layer_forward.1} parent=1 // pred_region
      _
    $region13: #{decoder_layer_forward.1} parent=1 // pred_fallthru
      _
    // Predicated region
    $region14: #{decoder_layer_forward.1} parent=1 // pred_check
      _
    $region15: #{decoder_layer_forward.1} parent=1 // pred_check_branch
      %41 = sbr.rel (0) target = $region17
    $region16: #{decoder_layer_forward.1} parent=1 // pred_region
      _
    $region17: #{decoder_layer_forward.1} parent=1 // pred_fallthru
      _
    // Predicated region
    $region18: #{decoder_layer_forward.1} parent=1 // pred_check
      _
    $region19: #{decoder_layer_forward.1} parent=1 // pred_check_branch
      %43 = sbr.rel (0) target = $region21
    $region20: #{decoder_layer_forward.1} parent=1 // pred_region
      _
    $region21: #{decoder_layer_forward.1} parent=1 // pred_fallthru
      _
    // Predicated region
    $region22: #{decoder_layer_forward.1} parent=1 // pred_check
      _
    $region23: #{decoder_layer_forward.1} parent=1 // pred_check_branch
      %45 = sbr.rel (0) target = $region25
    $region24: #{decoder_layer_forward.1} parent=1 // pred_region
      _
    $region25: #{decoder_layer_forward.1} parent=1 // pred_fallthru
      _
    // Predicated region
    $region26: #{decoder_layer_forward.1} parent=1 // pred_check
      _
    $region27: #{decoder_layer_forward.1} parent=1 // pred_check_branch
      %47 = sbr.rel (0) target = $region29
    $region28: #{decoder_layer_forward.1} parent=1 // pred_region
      _
    $region29: #{decoder_layer_forward.1} parent=1 // pred_fallthru
      _
    // Predicated region
    $region30: #{decoder_layer_forward.1} parent=1 // pred_check
      _
    $region31: #{decoder_layer_forward.1} parent=1 // pred_check_branch
      %49 = sbr.rel (0) target = $region33
    $region32: #{decoder_layer_forward.1} parent=1 // pred_region
      _
    $region33: #{decoder_layer_forward.1} parent=1 // pred_fallthru
      _
    // Predicated region
    $region34: #{decoder_layer_forward.1} parent=1 // pred_check
      _
    $region35: #{decoder_layer_forward.1} parent=1 // pred_check_branch
      %51 = sbr.rel (0) target = $region37
    $region36: #{decoder_layer_forward.1} parent=1 // pred_region
      _
    $region37: #{decoder_layer_forward.1} parent=1 // pred_fallthru
      _
    // Predicated region
    $region38: #{decoder_layer_forward.1} parent=1 // pred_check
      _
    $region39: #{decoder_layer_forward.1} parent=1 // pred_check_branch
      %53 = sbr.rel (0) target = $region41
    $region40: #{decoder_layer_forward.1} parent=1 // pred_region
      _
    $region41: #{decoder_layer_forward.1} parent=1 // pred_fallthru
      _
    // Predicated region
    $region42: #{decoder_layer_forward.1} parent=1 // pred_check
      _
    $region43: #{decoder_layer_forward.1} parent=1 // pred_check_branch
      %55 = sbr.rel (0) target = $region45
    $region44: #{decoder_layer_forward.1} parent=1 // pred_region
      _
    $region45: #{decoder_layer_forward.1} parent=1 // pred_fallthru
      _
    // Predicated region
    $region46: #{decoder_layer_forward.1} parent=1 // pred_check
      _
    $region47: #{decoder_layer_forward.1} parent=1 // pred_check_branch
      %57 = sbr.rel (0) target = $region49
    $region48: #{decoder_layer_forward.1} parent=1 // pred_region
      _
    $region49: #{decoder_layer_forward.1} parent=1 // pred_fallthru
      _
    // Predicated region
    $region50: #{decoder_layer_forward.1} parent=1 // pred_check
      _
    $region51: #{decoder_layer_forward.1} parent=1 // pred_check_branch
      %59 = sbr.rel (0) target = $region53
    $region52: #{decoder_layer_forward.1} parent=1 // pred_region
      _
    $region53: #{decoder_layer_forward.1} parent=1 // pred_fallthru
      _
    // Predicated region
    $region54: #{decoder_layer_forward.1} parent=1 // pred_check
      _
    $region55: #{decoder_layer_forward.1} parent=1 // pred_check_branch
      %61 = sbr.rel (0) target = $region57
    $region56: #{decoder_layer_forward.1} parent=1 // pred_region
      _
    $region57: #{decoder_layer_forward.1} parent=1 // pred_fallthru
      _
    // Predicated region
    $region58: #{decoder_layer_forward.1} parent=1 // pred_check
      _
    $region59: #{decoder_layer_forward.1} parent=1 // pred_check_branch
      %63 = sbr.rel (0) target = $region61
    $region60: #{decoder_layer_forward.1} parent=1 // pred_region
      _
    $region61: #{decoder_layer_forward.1} parent=1 // pred_fallthru
      _
    // Predicated region
    $region62: #{decoder_layer_forward.1} parent=1 // pred_check
      _
    $region63: #{decoder_layer_forward.1} parent=1 // pred_check_branch
      %65 = sbr.rel (0) target = $region65
    $region64: #{decoder_layer_forward.1} parent=1 // pred_region
      _
    $region65: #{decoder_layer_forward.1} parent=1 // pred_fallthru
      _
    // Predicated region
    $region66: #{decoder_layer_forward.1} parent=1 // pred_check
      _
    $region67: #{decoder_layer_forward.1} parent=1 // pred_check_branch
      %67 = sbr.rel (0) target = $region69
    $region68: #{decoder_layer_forward.1} parent=1 // pred_region
      _
    $region69: #{decoder_layer_forward.1} parent=1 // pred_fallthru
      _
    // Predicated region
    $region70: #{decoder_layer_forward.1} parent=1 // pred_check
      _
    $region71: #{decoder_layer_forward.1} parent=1 // pred_check_branch
      %69 = sbr.rel (0) target = $region73
    $region72: #{decoder_layer_forward.1} parent=1 // pred_region
      _
    $region73: #{decoder_layer_forward.1} parent=1 // pred_fallthru
      _
    // Predicated region
    $region74: #{decoder_layer_forward.1} parent=1 // pred_check
      _
    $region75: #{decoder_layer_forward.1} parent=1 // pred_check_branch
      %71 = sbr.rel (0) target = $region77
    $region76: #{decoder_layer_forward.1} parent=1 // pred_region
      _
    $region77: #{decoder_layer_forward.1} parent=1 // pred_fallthru
      _
    // Predicated region
    $region78: #{decoder_layer_forward.1} parent=1 // pred_check
      _
    $region79: #{decoder_layer_forward.1} parent=1 // pred_check_branch
      %73 = sbr.rel (0) target = $region81
    $region80: #{decoder_layer_forward.1} parent=1 // pred_region
      _
    $region81: #{decoder_layer_forward.1} parent=1 // pred_fallthru
      _
    // Predicated region
    $region82: #{decoder_layer_forward.1} parent=1 // pred_check
      _
    $region83: #{decoder_layer_forward.1} parent=1 // pred_check_branch
      %75 = sbr.rel (0) target = $region85
    $region84: #{decoder_layer_forward.1} parent=1 // pred_region
      _
    $region85: #{decoder_layer_forward.1} parent=1 // pred_fallthru
      _
    // Predicated region
    $region86: #{decoder_layer_forward.1} parent=1 // pred_check
      _
    $region87: #{decoder_layer_forward.1} parent=1 // pred_check_branch
      %77 = sbr.rel (0) target = $region89
    $region88: #{decoder_layer_forward.1} parent=1 // pred_region
      _
    $region89: #{decoder_layer_forward.1} parent=1 // pred_fallthru
      _
    // Predicated region
    $region90: #{decoder_layer_forward.1} parent=1 // pred_check
      _
    $region91: #{decoder_layer_forward.1} parent=1 // pred_check_branch
      %79 = sbr.rel (0) target = $region93
    $region92: #{decoder_layer_forward.1} parent=1 // pred_region
      _
    $region93: #{decoder_layer_forward.1} parent=1 // pred_fallthru
      _
    // Predicated region
    $region94: #{decoder_layer_forward.1} parent=1 // pred_check
      _
    $region95: #{decoder_layer_forward.1} parent=1 // pred_check_branch
      %81 = sbr.rel (0) target = $region97
    $region96: #{decoder_layer_forward.1} parent=1 // pred_region
      _
    $region97: #{decoder_layer_forward.1} parent=1 // pred_fallthru
      _
    // Predicated region
    $region98: #{decoder_layer_forward.1} parent=1 // pred_check
      _
    $region99: #{decoder_layer_forward.1} parent=1 // pred_check_branch
      %83 = sbr.rel (0) target = $region101
    $region100: #{decoder_layer_forward.1} parent=1 // pred_region
      _
    $region101: #{decoder_layer_forward.1} parent=1 // pred_fallthru
      _
    // Predicated region
    $region102: #{decoder_layer_forward.1} parent=1 // pred_check
      _
    $region103: #{decoder_layer_forward.1} parent=1 // pred_check_branch
      %85 = sbr.rel (0) target = $region105
    $region104: #{decoder_layer_forward.1} parent=1 // pred_region
      _
    $region105: #{decoder_layer_forward.1} parent=1 // pred_fallthru
      _
    // Predicated region
    $region106: #{decoder_layer_forward.1} parent=1 // pred_check
      _
    $region107: #{decoder_layer_forward.1} parent=1 // pred_check_branch
      %87 = sbr.rel (0) target = $region109
    $region108: #{decoder_layer_forward.1} parent=1 // pred_region
      _
    $region109: #{decoder_layer_forward.1} parent=1 // pred_fallthru
      _
    // Predicated region
    $region110: #{decoder_layer_forward.1} parent=1 // pred_check
      _
    $region111: #{decoder_layer_forward.1} parent=1 // pred_check_branch
      %89 = sbr.rel (0) target = $region113
    $region112: #{decoder_layer_forward.1} parent=1 // pred_region
      _
    $region113: #{decoder_layer_forward.1} parent=1 // pred_fallthru
      _
    %v91 = vlaneseq
    %v92 = vshrl.u32 %v91, 7
    %v93 = vlaneseq
    %v94 = vand.u32 %v93, 127
    %vm95 = vcmp.ge.s32.totalorder %v92, %v94
    %v96 = vsel %vm95, 0.0, -1e+09
    %v97 = vld [vmem:[%s0] sm:$0xff]
    %v98 = vld [vmem:[%s9] sm:$0x1]
    %v100 = vperm.slane %v98, 0
    %v102 = vadd.f32 %v97, %v100
    %v103 = vld [vmem:[%s0] sm:$0xf]
    %v104 = vpack.c.bf16 %v103, %v103
    %v105 = vld [vmem:[%s2] sm:$0xf]
    %v106 = vld [vmem:[%s3] sm:$0xff]
    %108 = vset.pattern.permute.xlu0 0
    %109 = vperm.xlu0 %108, %v106
    %v110 = vpop.permute.xlu0 %109
    %vm112 = vcmask 261120
    %v114 = vsel %vm112, %v105, 0
    %v117 = vsel %vm112, %v104, 0
    %119 = vmatpush.bf16.xpose.msra.mxu0 0
    %120 = vmatpush.bf16.xpose.msra.mxu0 0
    %121 = vmatpush.bf16.xpose.msra.mxu0 0
    %122 = vmatpush.bf16.xpose.msra.mxu0 0
    %123 = vmatpush.bf16.xpose.msra.mxu0 0
    %124 = vmatpush.bf16.xpose.msra.mxu0 0
    %125 = vmatpush.bf16.xpose.msra.mxu0 0
    %126 = vmatpush.bf16.xpose.msra.mxu0 %v117
    %127 = vmatmul.bf16.gmra.mxu0 %v114
    %v128 = vpop.f32.mrf.mxu0
    %v129 = vadd.f32 %v110, %v128
    %v130 = vpop.f32.mrf.mxu0
    %131 = vdwg.mxu0
    %v132 = vld [vmem:[%s4] sm:$0xf]
    %v133 = vld [vmem:[%s4 + $0x4] sm:$0xf]
    %v134 = vld [vmem:[%s4 + $0x8] sm:$0xf]
    %v135 = vld [vmem:[%s4 + $0xc] sm:$0xf]
    %v136 = vld [vmem:[%s5] sm:$0x1]
    %v138 = vperm.slane %v136, 0
    %v144 = vunpack.c.l.b16 %v132
    %v145 = vunpack.c.l.b16 %v133
    %v146 = vunpack.c.l.b16 %v134
    %v147 = vunpack.c.l.b16 %v135
    %v148 = vpack.c.b16 %v145, %v144
    %v149 = vpack.c.b16 %v147, %v146
    %152 = vmatpush.bf16.msra.mxu0 0
    %153 = vmatpush.bf16.msra.mxu0 0
    %154 = vmatpush.bf16.msra.mxu0 0
    %155 = vmatpush.bf16.msra.mxu0 0
    %156 = vmatpush.bf16.msra.mxu0 0
    %157 = vmatpush.bf16.msra.mxu0 0
    %158 = vmatpush.bf16.msra.mxu0 %v149
    %159 = vmatpush.bf16.msra.mxu0 %v148
    %160 = vmatmul.bf16.gmra.mxu0 %v117
    %v161 = vpop.f32.mrf.mxu0
    %v162 = vadd.f32 %v138, %v161
    %v163 = vpop.f32.mrf.mxu0
    %164 = vdwg.mxu0
    %v165 = vpack.c.bf16 %v129, %v129
    %v166 = vpack.c.bf16 %v162, %v162
    %s167 = scalar_lea.vmem %s2, 4
    %v168 = vld [vmem:[%s167] sm:$0xf]
    %s169 = scalar_lea.vmem %s3, 8
    %v170 = vld [vmem:[%s169] sm:$0xff]
    %172 = vset.pattern.permute.xlu0 0
    %173 = vperm.xlu0 %172, %v170
    %v174 = vpop.permute.xlu0 %173
    %v177 = vsel %vm112, %v168, 0
    %179 = vmatpush.bf16.xpose.msra.mxu0 0
    %180 = vmatpush.bf16.xpose.msra.mxu0 0
    %181 = vmatpush.bf16.xpose.msra.mxu0 0
    %182 = vmatpush.bf16.xpose.msra.mxu0 0
    %183 = vmatpush.bf16.xpose.msra.mxu0 0
    %184 = vmatpush.bf16.xpose.msra.mxu0 0
    %185 = vmatpush.bf16.xpose.msra.mxu0 0
    %186 = vmatpush.bf16.xpose.msra.mxu0 %v117
    %187 = vmatmul.bf16.gmra.mxu0 %v177
    %v188 = vpop.f32.mrf.mxu0
    %v189 = vadd.f32 %v174, %v188
    %v190 = vpop.f32.mrf.mxu0
    %191 = vdwg.mxu0
    %s192 = scalar_lea.vmem %s4, 16
    %v193 = vld [vmem:[%s192] sm:$0xf]
    %v194 = vld [vmem:[%s192 + $0x4] sm:$0xf]
    %v195 = vld [vmem:[%s192 + $0x8] sm:$0xf]
    %v196 = vld [vmem:[%s192 + $0xc] sm:$0xf]
    %s197 = scalar_lea.vmem %s5, 1
    %v198 = vld [vmem:[%s197] sm:$0x1]
    %v200 = vperm.slane %v198, 0
    %v206 = vunpack.c.l.b16 %v193
    %v207 = vunpack.c.l.b16 %v194
    %v208 = vunpack.c.l.b16 %v195
    %v209 = vunpack.c.l.b16 %v196
    %v210 = vpack.c.b16 %v207, %v206
    %v211 = vpack.c.b16 %v209, %v208
    %214 = vmatpush.bf16.msra.mxu0 0
    %215 = vmatpush.bf16.msra.mxu0 0
    %216 = vmatpush.bf16.msra.mxu0 0
    %217 = vmatpush.bf16.msra.mxu0 0
    %218 = vmatpush.bf16.msra.mxu0 0
    %219 = vmatpush.bf16.msra.mxu0 0
    %220 = vmatpush.bf16.msra.mxu0 %v211
    %221 = vmatpush.bf16.msra.mxu0 %v210
    %222 = vmatmul.bf16.gmra.mxu0 %v117
    %v223 = vpop.f32.mrf.mxu0
    %v224 = vadd.f32 %v200, %v223
    %v225 = vpop.f32.mrf.mxu0
    %226 = vdwg.mxu0
    %v227 = vpack.c.bf16 %v189, %v189
    %v228 = vpack.c.bf16 %v224, %v224
    %vm229 = vcmask 31744
    %v231 = vsel %vm229, %v227, 0
    %vm233 = vcmask 1041408
    %v235 = vsel %vm233, %v228, 0
    %237 = vmatpush.bf16.msra.mxu0 0
    %238 = vmatpush.bf16.msra.mxu0 0
    %239 = vmatpush.bf16.msra.mxu0 0
    %240 = vmatpush.bf16.msra.mxu0 0
    %241 = vmatpush.bf16.msra.mxu0 0
    %242 = vmatpush.bf16.msra.mxu0 0
    %243 = vmatpush.bf16.msra.mxu0 0
    %244 = vmatpush.bf16.msra.mxu0 %v235
    %245 = vmatmul.bf16.gmra.mxu0 %v231
    %v246 = vpop.f32.mrf.mxu0
    %v247 = vadd.f32 0.0, %v246
    %v248 = vpop.f32.mrf.mxu0
    %249 = vdwg.mxu0
    %v251 = vsel %vm229, %v165, 0
    %v254 = vsel %vm233, %v166, 0
    %256 = vmatpush.bf16.msra.mxu0 0
    %257 = vmatpush.bf16.msra.mxu0 0
    %258 = vmatpush.bf16.msra.mxu0 0
    %259 = vmatpush.bf16.msra.mxu0 0
    %260 = vmatpush.bf16.msra.mxu0 0
    %261 = vmatpush.bf16.msra.mxu0 0
    %262 = vmatpush.bf16.msra.mxu0 0
    %263 = vmatpush.bf16.msra.mxu0 %v254
    %264 = vmatmul.bf16.gmra.mxu0 %v251
    %v265 = vpop.f32.mrf.mxu0
    %v266 = vadd.f32 %v247, %v265
    %v267 = vpop.f32.mrf.mxu0
    %268 = vdwg.mxu0
    %s269 = scalar_lea.vmem %s2, 8
    %v270 = vld [vmem:[%s269] sm:$0xf]
    %s271 = scalar_lea.vmem %s3, 16
    %v272 = vld [vmem:[%s271] sm:$0xff]
    %274 = vset.pattern.permute.xlu0 0
    %275 = vperm.xlu0 %274, %v272
    %v276 = vpop.permute.xlu0 %275
    %v279 = vsel %vm112, %v270, 0
    %281 = vmatpush.bf16.xpose.msra.mxu0 0
    %282 = vmatpush.bf16.xpose.msra.mxu0 0
    %283 = vmatpush.bf16.xpose.msra.mxu0 0
    %284 = vmatpush.bf16.xpose.msra.mxu0 0
    %285 = vmatpush.bf16.xpose.msra.mxu0 0
    %286 = vmatpush.bf16.xpose.msra.mxu0 0
    %287 = vmatpush.bf16.xpose.msra.mxu0 0
    %288 = vmatpush.bf16.xpose.msra.mxu0 %v117
    %289 = vmatmul.bf16.gmra.mxu0 %v279
    %v290 = vpop.f32.mrf.mxu0
    %v291 = vadd.f32 %v276, %v290
    %v292 = vpop.f32.mrf.mxu0
    %293 = vdwg.mxu0
    %s294 = scalar_lea.vmem %s4, 32
    %v295 = vld [vmem:[%s294] sm:$0xf]
    %v296 = vld [vmem:[%s294 + $0x4] sm:$0xf]
    %v297 = vld [vmem:[%s294 + $0x8] sm:$0xf]
    %v298 = vld [vmem:[%s294 + $0xc] sm:$0xf]
    %s299 = scalar_lea.vmem %s5, 2
    %v300 = vld [vmem:[%s299] sm:$0x1]
    %v302 = vperm.slane %v300, 0
    %v308 = vunpack.c.l.b16 %v295
    %v309 = vunpack.c.l.b16 %v296
    %v310 = vunpack.c.l.b16 %v297
    %v311 = vunpack.c.l.b16 %v298
    %v312 = vpack.c.b16 %v309, %v308
    %v313 = vpack.c.b16 %v311, %v310
    %316 = vmatpush.bf16.msra.mxu0 0
    %317 = vmatpush.bf16.msra.mxu0 0
    %318 = vmatpush.bf16.msra.mxu0 0
    %319 = vmatpush.bf16.msra.mxu0 0
    %320 = vmatpush.bf16.msra.mxu0 0
    %321 = vmatpush.bf16.msra.mxu0 0
    %322 = vmatpush.bf16.msra.mxu0 %v313
    %323 = vmatpush.bf16.msra.mxu0 %v312
    %324 = vmatmul.bf16.gmra.mxu0 %v117
    %v325 = vpop.f32.mrf.mxu0
    %v326 = vadd.f32 %v302, %v325
    %v327 = vpop.f32.mrf.mxu0
    %328 = vdwg.mxu0
    %v329 = vpack.c.bf16 %v291, %v291
    %v330 = vpack.c.bf16 %v326, %v326
    %v332 = vsel %vm229, %v329, 0
    %v335 = vsel %vm233, %v330, 0
    %337 = vmatpush.bf16.msra.mxu0 0
    %338 = vmatpush.bf16.msra.mxu0 0
    %339 = vmatpush.bf16.msra.mxu0 0
    %340 = vmatpush.bf16.msra.mxu0 0
    %341 = vmatpush.bf16.msra.mxu0 0
    %342 = vmatpush.bf16.msra.mxu0 0
    %343 = vmatpush.bf16.msra.mxu0 0
    %344 = vmatpush.bf16.msra.mxu0 %v335
    %345 = vmatmul.bf16.gmra.mxu0 %v332
    %v346 = vpop.f32.mrf.mxu0
    %v347 = vadd.f32 0.0, %v346
    %v348 = vpop.f32.mrf.mxu0
    %349 = vdwg.mxu0
    %v350 = vadd.f32 %v266, %v347
    %s351 = scalar_lea.vmem %s2, 12
    %v352 = vld [vmem:[%s351] sm:$0xf]
    %s353 = scalar_lea.vmem %s3, 24
    %v354 = vld [vmem:[%s353] sm:$0xff]
    %356 = vset.pattern.permute.xlu0 0
    %357 = vperm.xlu0 %356, %v354
    %v358 = vpop.permute.xlu0 %357
    %v361 = vsel %vm112, %v352, 0
    %363 = vmatpush.bf16.xpose.msra.mxu0 0
    %364 = vmatpush.bf16.xpose.msra.mxu0 0
    %365 = vmatpush.bf16.xpose.msra.mxu0 0
    %366 = vmatpush.bf16.xpose.msra.mxu0 0
    %367 = vmatpush.bf16.xpose.msra.mxu0 0
    %368 = vmatpush.bf16.xpose.msra.mxu0 0
    %369 = vmatpush.bf16.xpose.msra.mxu0 0
    %370 = vmatpush.bf16.xpose.msra.mxu0 %v117
    %371 = vmatmul.bf16.gmra.mxu0 %v361
    %v372 = vpop.f32.mrf.mxu0
    %v373 = vadd.f32 %v358, %v372
    %v374 = vpop.f32.mrf.mxu0
    %375 = vdwg.mxu0
    %s376 = scalar_lea.vmem %s4, 48
    %v377 = vld [vmem:[%s376] sm:$0xf]
    %v378 = vld [vmem:[%s376 + $0x4] sm:$0xf]
    %v379 = vld [vmem:[%s376 + $0x8] sm:$0xf]
    %v380 = vld [vmem:[%s376 + $0xc] sm:$0xf]
    %s381 = scalar_lea.vmem %s5, 3
    %v382 = vld [vmem:[%s381] sm:$0x1]
    %v384 = vperm.slane %v382, 0
    %v390 = vunpack.c.l.b16 %v377
    %v391 = vunpack.c.l.b16 %v378
    %v392 = vunpack.c.l.b16 %v379
    %v393 = vunpack.c.l.b16 %v380
    %v394 = vpack.c.b16 %v391, %v390
    %v395 = vpack.c.b16 %v393, %v392
    %398 = vmatpush.bf16.msra.mxu0 0
    %399 = vmatpush.bf16.msra.mxu0 0
    %400 = vmatpush.bf16.msra.mxu0 0
    %401 = vmatpush.bf16.msra.mxu0 0
    %402 = vmatpush.bf16.msra.mxu0 0
    %403 = vmatpush.bf16.msra.mxu0 0
    %404 = vmatpush.bf16.msra.mxu0 %v395
    %405 = vmatpush.bf16.msra.mxu0 %v394
    %406 = vmatmul.bf16.gmra.mxu0 %v117
    %v407 = vpop.f32.mrf.mxu0
    %v408 = vadd.f32 %v384, %v407
    %v409 = vpop.f32.mrf.mxu0
    %410 = vdwg.mxu0
    %v411 = vpack.c.bf16 %v373, %v373
    %v412 = vpack.c.bf16 %v408, %v408
    %v414 = vsel %vm229, %v411, 0
    %v417 = vsel %vm233, %v412, 0
    %419 = vmatpush.bf16.msra.mxu0 0
    %420 = vmatpush.bf16.msra.mxu0 0
    %421 = vmatpush.bf16.msra.mxu0 0
    %422 = vmatpush.bf16.msra.mxu0 0
    %423 = vmatpush.bf16.msra.mxu0 0
    %424 = vmatpush.bf16.msra.mxu0 0
    %425 = vmatpush.bf16.msra.mxu0 0
    %426 = vmatpush.bf16.msra.mxu0 %v417
    %427 = vmatmul.bf16.gmra.mxu0 %v414
    %v428 = vpop.f32.mrf.mxu0
    %v429 = vadd.f32 0.0, %v428
    %v430 = vpop.f32.mrf.mxu0
    %431 = vdwg.mxu0
    %v432 = vadd.f32 %v350, %v429
    %v433 = vmul.f32 %v432, 0.25
    %v434 = vadd.f32 %v433, %v96
    %vm435 = vcmask 64512
    %v436 = vsel %vm435, %v434, -inf
    %437 = vmax.xlane.f32.xlu0 %v436
    %v438 = vpop.xlane.xlu0 %437
    %v439 = vsub.f32 %v434, %v438
    %v440 = vmul.f32 %v439, 1.442695
    %v441 = vpow.pop %v440
    %v442 = vsel %vm435, %v441, 0.0
    %443 = vadd.xlane.f32.xlu0 %v442
    %v444 = vpop.xlane.xlu0 %443
    %v445 = vrcp.pop %v444
    %v446 = vmul.f32 %v444, %v445
    %v447 = vsub.f32 1.0, %v446
    %v448 = vmul.f32 %v445, %v447
    %v449 = vadd.f32 %v445, %v448
    %vm450 = vweird.f32 %v444
    %vm451 = vweird.f32 %v445
    %vm452 = vmor %vm450, %vm451
    %v453 = vsel %vm452, %v445, %v449
    %v454 = vand.u32 2147483647, %v444
    %vm455 = vcmp.eq.f32.partialorder %v454, 8.507059e+37
    %v456 = vand.u32 %v444, 2147483648
    %v457 = vor.u32 1.1754944e-38, %v456
    %v458 = vsel %vm455, %v457, %v453
    %v459 = vmul.f32 %v441, %v458
    %v460 = vld [vmem:[%s6] sm:$0xf]
    %v461 = vld [vmem:[%s7] sm:$0xff]
    %463 = vset.pattern.permute.xlu0 0
    %464 = vperm.xlu0 %463, %v461
    %v465 = vpop.permute.xlu0 %464
    %v468 = vsel %vm112, %v460, 0
    %470 = vmatpush.bf16.xpose.msra.mxu0 0
    %471 = vmatpush.bf16.xpose.msra.mxu0 0
    %472 = vmatpush.bf16.xpose.msra.mxu0 0
    %473 = vmatpush.bf16.xpose.msra.mxu0 0
    %474 = vmatpush.bf16.xpose.msra.mxu0 0
    %475 = vmatpush.bf16.xpose.msra.mxu0 0
    %476 = vmatpush.bf16.xpose.msra.mxu0 0
    %477 = vmatpush.bf16.xpose.msra.mxu0 %v117
    %478 = vmatmul.bf16.gmra.mxu0 %v468
    %v479 = vpop.f32.mrf.mxu0
    %v480 = vadd.f32 %v465, %v479
    %v481 = vpop.f32.mrf.mxu0
    %482 = vdwg.mxu0
    %v483 = vld [vmem:[%s8] sm:$0x3]
    %v484 = vpack.c.bf16 %v480, %v480
    %s485 = scalar_lea.vmem %s6, 4
    %v486 = vld [vmem:[%s485] sm:$0xf]
    %s487 = scalar_lea.vmem %s7, 8
    %v488 = vld [vmem:[%s487] sm:$0xff]
    %490 = vset.pattern.permute.xlu0 0
    %491 = vperm.xlu0 %490, %v488
    %v492 = vpop.permute.xlu0 %491
    %v495 = vsel %vm112, %v486, 0
    %497 = vmatpush.bf16.xpose.msra.mxu0 0
    %498 = vmatpush.bf16.xpose.msra.mxu0 0
    %499 = vmatpush.bf16.xpose.msra.mxu0 0
    %500 = vmatpush.bf16.xpose.msra.mxu0 0
    %501 = vmatpush.bf16.xpose.msra.mxu0 0
    %502 = vmatpush.bf16.xpose.msra.mxu0 0
    %503 = vmatpush.bf16.xpose.msra.mxu0 0
    %504 = vmatpush.bf16.xpose.msra.mxu0 %v117
    %505 = vmatmul.bf16.gmra.mxu0 %v495
    %v506 = vpop.f32.mrf.mxu0
    %v507 = vadd.f32 %v492, %v506
    %v508 = vpop.f32.mrf.mxu0
    %509 = vdwg.mxu0
    %s510 = scalar_lea.vmem %s8, 2
    %v511 = vld [vmem:[%s510] sm:$0x3]
    %v512 = vpack.c.bf16 %v507, %v507
    %v514 = vsel %vm229, %v512, 0
    %v517 = vsel %vm233, %v511, 0
    %519 = vmatpush.bf16.msra.mxu0 0
    %520 = vmatpush.bf16.msra.mxu0 0
    %521 = vmatpush.bf16.msra.mxu0 0
    %522 = vmatpush.bf16.msra.mxu0 0
    %523 = vmatpush.bf16.msra.mxu0 0
    %524 = vmatpush.bf16.msra.mxu0 0
    %525 = vmatpush.bf16.msra.mxu0 0
    %526 = vmatpush.bf16.msra.mxu0 %v517
    %527 = vmatmul.bf16.gmra.mxu0 %v514
    %v528 = vpop.f32.mrf.mxu0
    %v529 = vadd.f32 0.0, %v528
    %v530 = vpop.f32.mrf.mxu0
    %531 = vdwg.mxu0
    %v533 = vsel %vm229, %v484, 0
    %v536 = vsel %vm233, %v483, 0
    %538 = vmatpush.bf16.msra.mxu0 0
    %539 = vmatpush.bf16.msra.mxu0 0
    %540 = vmatpush.bf16.msra.mxu0 0
    %541 = vmatpush.bf16.msra.mxu0 0
    %542 = vmatpush.bf16.msra.mxu0 0
    %543 = vmatpush.bf16.msra.mxu0 0
    %544 = vmatpush.bf16.msra.mxu0 0
    %545 = vmatpush.bf16.msra.mxu0 %v536
    %546 = vmatmul.bf16.gmra.mxu0 %v533
    %v547 = vpop.f32.mrf.mxu0
    %v548 = vadd.f32 %v529, %v547
    %v549 = vpop.f32.mrf.mxu0
    %550 = vdwg.mxu0
    %s551 = scalar_lea.vmem %s6, 8
    %v552 = vld [vmem:[%s551] sm:$0xf]
    %s553 = scalar_lea.vmem %s7, 16
    %v554 = vld [vmem:[%s553] sm:$0xff]
    %556 = vset.pattern.permute.xlu0 0
    %557 = vperm.xlu0 %556, %v554
    %v558 = vpop.permute.xlu0 %557
    %v561 = vsel %vm112, %v552, 0
    %563 = vmatpush.bf16.xpose.msra.mxu0 0
    %564 = vmatpush.bf16.xpose.msra.mxu0 0
    %565 = vmatpush.bf16.xpose.msra.mxu0 0
    %566 = vmatpush.bf16.xpose.msra.mxu0 0
    %567 = vmatpush.bf16.xpose.msra.mxu0 0
    %568 = vmatpush.bf16.xpose.msra.mxu0 0
    %569 = vmatpush.bf16.xpose.msra.mxu0 0
    %570 = vmatpush.bf16.xpose.msra.mxu0 %v117
    %571 = vmatmul.bf16.gmra.mxu0 %v561
    %v572 = vpop.f32.mrf.mxu0
    %v573 = vadd.f32 %v558, %v572
    %v574 = vpop.f32.mrf.mxu0
    %575 = vdwg.mxu0
    %s576 = scalar_lea.vmem %s8, 4
    %v577 = vld [vmem:[%s576] sm:$0x3]
    %v578 = vpack.c.bf16 %v573, %v573
    %v580 = vsel %vm229, %v578, 0
    %v583 = vsel %vm233, %v577, 0
    %585 = vmatpush.bf16.msra.mxu0 0
    %586 = vmatpush.bf16.msra.mxu0 0
    %587 = vmatpush.bf16.msra.mxu0 0
    %588 = vmatpush.bf16.msra.mxu0 0
    %589 = vmatpush.bf16.msra.mxu0 0
    %590 = vmatpush.bf16.msra.mxu0 0
    %591 = vmatpush.bf16.msra.mxu0 0
    %592 = vmatpush.bf16.msra.mxu0 %v583
    %593 = vmatmul.bf16.gmra.mxu0 %v580
    %v594 = vpop.f32.mrf.mxu0
    %v595 = vadd.f32 0.0, %v594
    %v596 = vpop.f32.mrf.mxu0
    %597 = vdwg.mxu0
    %v598 = vadd.f32 %v548, %v595
    %s599 = scalar_lea.vmem %s6, 12
    %v600 = vld [vmem:[%s599] sm:$0xf]
    %s601 = scalar_lea.vmem %s7, 24
    %v602 = vld [vmem:[%s601] sm:$0xff]
    %604 = vset.pattern.permute.xlu0 0
    %605 = vperm.xlu0 %604, %v602
    %v606 = vpop.permute.xlu0 %605
    %v609 = vsel %vm112, %v600, 0
    %611 = vmatpush.bf16.xpose.msra.mxu0 0
    %612 = vmatpush.bf16.xpose.msra.mxu0 0
    %613 = vmatpush.bf16.xpose.msra.mxu0 0
    %614 = vmatpush.bf16.xpose.msra.mxu0 0
    %615 = vmatpush.bf16.xpose.msra.mxu0 0
    %616 = vmatpush.bf16.xpose.msra.mxu0 0
    %617 = vmatpush.bf16.xpose.msra.mxu0 0
    %618 = vmatpush.bf16.xpose.msra.mxu0 %v117
    %619 = vmatmul.bf16.gmra.mxu0 %v609
    %v620 = vpop.f32.mrf.mxu0
    %v621 = vadd.f32 %v606, %v620
    %v622 = vpop.f32.mrf.mxu0
    %623 = vdwg.mxu0
    %s624 = scalar_lea.vmem %s8, 6
    %v625 = vld [vmem:[%s624] sm:$0x3]
    %v626 = vpack.c.bf16 %v621, %v621
    %v628 = vsel %vm229, %v626, 0
    %v631 = vsel %vm233, %v625, 0
    %633 = vmatpush.bf16.msra.mxu0 0
    %634 = vmatpush.bf16.msra.mxu0 0
    %635 = vmatpush.bf16.msra.mxu0 0
    %636 = vmatpush.bf16.msra.mxu0 0
    %637 = vmatpush.bf16.msra.mxu0 0
    %638 = vmatpush.bf16.msra.mxu0 0
    %639 = vmatpush.bf16.msra.mxu0 0
    %640 = vmatpush.bf16.msra.mxu0 %v631
    %641 = vmatmul.bf16.gmra.mxu0 %v628
    %v642 = vpop.f32.mrf.mxu0
    %v643 = vadd.f32 0.0, %v642
    %v644 = vpop.f32.mrf.mxu0
    %645 = vdwg.mxu0
    %v646 = vadd.f32 %v598, %v643
    %v647 = vpack.c.bf16 %v459, %v459
    %v648 = vpack.c.bf16 %v646, %v646
    %v650 = vsel %vm435, %v647, 0
    %vm652 = vcmask 1043456
    %v654 = vsel %vm652, %v648, 0
    %656 = vmatpush.bf16.msra.mxu0 0
    %657 = vmatpush.bf16.msra.mxu0 0
    %658 = vmatpush.bf16.msra.mxu0 0
    %659 = vmatpush.bf16.msra.mxu0 0
    %660 = vmatpush.bf16.msra.mxu0 0
    %661 = vmatpush.bf16.msra.mxu0 0
    %662 = vmatpush.bf16.msra.mxu0 0
    %663 = vmatpush.bf16.msra.mxu0 %v654
    %664 = vmatmul.bf16.gmra.mxu0 %v650
    %v665 = vpop.f32.mrf.mxu0
    %v666 = vadd.f32 0.0, %v665
    %v667 = vpop.f32.mrf.mxu0
    %668 = vdwg.mxu0
    %v669 = vadd.f32 %v102, %v666
    %v670 = vld [vmem:[%s0 + $0x4] sm:$0xf]
    %v671 = vpack.c.bf16 %v670, %v670
    %v673 = vsel %vm112, %v671, 0
    %675 = vmatpush.bf16.xpose.msra.mxu0 0
    %676 = vmatpush.bf16.xpose.msra.mxu0 0
    %677 = vmatpush.bf16.xpose.msra.mxu0 0
    %678 = vmatpush.bf16.xpose.msra.mxu0 0
    %679 = vmatpush.bf16.xpose.msra.mxu0 0
    %680 = vmatpush.bf16.xpose.msra.mxu0 0
    %681 = vmatpush.bf16.xpose.msra.mxu0 0
    %682 = vmatpush.bf16.xpose.msra.mxu0 %v673
    %683 = vmatmul.bf16.gmra.mxu0 %v114
    %v684 = vpop.f32.mrf.mxu0
    %v685 = vadd.f32 %v110, %v684
    %v686 = vpop.f32.mrf.mxu0
    %687 = vdwg.mxu0
    %688 = vmatpush.bf16.msra.mxu0 0
    %689 = vmatpush.bf16.msra.mxu0 0
    %690 = vmatpush.bf16.msra.mxu0 0
    %691 = vmatpush.bf16.msra.mxu0 0
    %692 = vmatpush.bf16.msra.mxu0 0
    %693 = vmatpush.bf16.msra.mxu0 0
    %694 = vmatpush.bf16.msra.mxu0 %v149
    %695 = vmatpush.bf16.msra.mxu0 %v148
    %696 = vmatmul.bf16.gmra.mxu0 %v673
    %v697 = vpop.f32.mrf.mxu0
    %v698 = vadd.f32 %v138, %v697
    %v699 = vpop.f32.mrf.mxu0
    %700 = vdwg.mxu0
    %v701 = vpack.c.bf16 %v685, %v685
    %v702 = vpack.c.bf16 %v698, %v698
    %703 = vmatpush.bf16.xpose.msra.mxu0 0
    %704 = vmatpush.bf16.xpose.msra.mxu0 0
    %705 = vmatpush.bf16.xpose.msra.mxu0 0
    %706 = vmatpush.bf16.xpose.msra.mxu0 0
    %707 = vmatpush.bf16.xpose.msra.mxu0 0
    %708 = vmatpush.bf16.xpose.msra.mxu0 0
    %709 = vmatpush.bf16.xpose.msra.mxu0 0
    %710 = vmatpush.bf16.xpose.msra.mxu0 %v673
    %711 = vmatmul.bf16.gmra.mxu0 %v177
    %v712 = vpop.f32.mrf.mxu0
    %v713 = vadd.f32 %v174, %v712
    %v714 = vpop.f32.mrf.mxu0
    %715 = vdwg.mxu0
    %716 = vmatpush.bf16.msra.mxu0 0
    %717 = vmatpush.bf16.msra.mxu0 0
    %718 = vmatpush.bf16.msra.mxu0 0
    %719 = vmatpush.bf16.msra.mxu0 0
    %720 = vmatpush.bf16.msra.mxu0 0
    %721 = vmatpush.bf16.msra.mxu0 0
    %722 = vmatpush.bf16.msra.mxu0 %v211
    %723 = vmatpush.bf16.msra.mxu0 %v210
    %724 = vmatmul.bf16.gmra.mxu0 %v673
    %v725 = vpop.f32.mrf.mxu0
    %v726 = vadd.f32 %v200, %v725
    %v727 = vpop.f32.mrf.mxu0
    %728 = vdwg.mxu0
    %v729 = vpack.c.bf16 %v713, %v713
    %v730 = vpack.c.bf16 %v726, %v726
    %v732 = vsel %vm229, %v729, 0
    %v735 = vsel %vm233, %v730, 0
    %737 = vmatpush.bf16.msra.mxu0 0
    %738 = vmatpush.bf16.msra.mxu0 0
    %739 = vmatpush.bf16.msra.mxu0 0
    %740 = vmatpush.bf16.msra.mxu0 0
    %741 = vmatpush.bf16.msra.mxu0 0
    %742 = vmatpush.bf16.msra.mxu0 0
    %743 = vmatpush.bf16.msra.mxu0 0
    %744 = vmatpush.bf16.msra.mxu0 %v735
    %745 = vmatmul.bf16.gmra.mxu0 %v732
    %v746 = vpop.f32.mrf.mxu0
    %v747 = vadd.f32 0.0, %v746
    %v748 = vpop.f32.mrf.mxu0
    %749 = vdwg.mxu0
    %v751 = vsel %vm229, %v701, 0
    %v754 = vsel %vm233, %v702, 0
    %756 = vmatpush.bf16.msra.mxu0 0
    %757 = vmatpush.bf16.msra.mxu0 0
    %758 = vmatpush.bf16.msra.mxu0 0
    %759 = vmatpush.bf16.msra.mxu0 0
    %760 = vmatpush.bf16.msra.mxu0 0
    %761 = vmatpush.bf16.msra.mxu0 0
    %762 = vmatpush.bf16.msra.mxu0 0
    %763 = vmatpush.bf16.msra.mxu0 %v754
    %764 = vmatmul.bf16.gmra.mxu0 %v751
    %v765 = vpop.f32.mrf.mxu0
    %v766 = vadd.f32 %v747, %v765
    %v767 = vpop.f32.mrf.mxu0
    %768 = vdwg.mxu0
    %769 = vmatpush.bf16.xpose.msra.mxu0 0
    %770 = vmatpush.bf16.xpose.msra.mxu0 0
    %771 = vmatpush.bf16.xpose.msra.mxu0 0
    %772 = vmatpush.bf16.xpose.msra.mxu0 0
    %773 = vmatpush.bf16.xpose.msra.mxu0 0
    %774 = vmatpush.bf16.xpose.msra.mxu0 0
    %775 = vmatpush.bf16.xpose.msra.mxu0 0
    %776 = vmatpush.bf16.xpose.msra.mxu0 %v673
    %777 = vmatmul.bf16.gmra.mxu0 %v279
    %v778 = vpop.f32.mrf.mxu0
    %v779 = vadd.f32 %v276, %v778
    %v780 = vpop.f32.mrf.mxu0
    %781 = vdwg.mxu0
    %782 = vmatpush.bf16.msra.mxu0 0
    %783 = vmatpush.bf16.msra.mxu0 0
    %784 = vmatpush.bf16.msra.mxu0 0
    %785 = vmatpush.bf16.msra.mxu0 0
    %786 = vmatpush.bf16.msra.mxu0 0
    %787 = vmatpush.bf16.msra.mxu0 0
    %788 = vmatpush.bf16.msra.mxu0 %v313
    %789 = vmatpush.bf16.msra.mxu0 %v312
    %790 = vmatmul.bf16.gmra.mxu0 %v673
    %v791 = vpop.f32.mrf.mxu0
    %v792 = vadd.f32 %v302, %v791
    %v793 = vpop.f32.mrf.mxu0
    %794 = vdwg.mxu0
    %v795 = vpack.c.bf16 %v779, %v779
    %v796 = vpack.c.bf16 %v792, %v792
    %v798 = vsel %vm229, %v795, 0
    %v801 = vsel %vm233, %v796, 0
    %803 = vmatpush.bf16.msra.mxu0 0
    %804 = vmatpush.bf16.msra.mxu0 0
    %805 = vmatpush.bf16.msra.mxu0 0
    %806 = vmatpush.bf16.msra.mxu0 0
    %807 = vmatpush.bf16.msra.mxu0 0
    %808 = vmatpush.bf16.msra.mxu0 0
    %809 = vmatpush.bf16.msra.mxu0 0
    %810 = vmatpush.bf16.msra.mxu0 %v801
    %811 = vmatmul.bf16.gmra.mxu0 %v798
    %v812 = vpop.f32.mrf.mxu0
    %v813 = vadd.f32 0.0, %v812
    %v814 = vpop.f32.mrf.mxu0
    %815 = vdwg.mxu0
    %v816 = vadd.f32 %v766, %v813
    %817 = vmatpush.bf16.xpose.msra.mxu0 0
    %818 = vmatpush.bf16.xpose.msra.mxu0 0
    %819 = vmatpush.bf16.xpose.msra.mxu0 0
    %820 = vmatpush.bf16.xpose.msra.mxu0 0
    %821 = vmatpush.bf16.xpose.msra.mxu0 0
    %822 = vmatpush.bf16.xpose.msra.mxu0 0
    %823 = vmatpush.bf16.xpose.msra.mxu0 0
    %824 = vmatpush.bf16.xpose.msra.mxu0 %v673
    %825 = vmatmul.bf16.gmra.mxu0 %v361
    %v826 = vpop.f32.mrf.mxu0
    %v827 = vadd.f32 %v358, %v826
    %v828 = vpop.f32.mrf.mxu0
    %829 = vdwg.mxu0
    %830 = vmatpush.bf16.msra.mxu0 0
    %831 = vmatpush.bf16.msra.mxu0 0
    %832 = vmatpush.bf16.msra.mxu0 0
    %833 = vmatpush.bf16.msra.mxu0 0
    %834 = vmatpush.bf16.msra.mxu0 0
    %835 = vmatpush.bf16.msra.mxu0 0
    %836 = vmatpush.bf16.msra.mxu0 %v395
    %837 = vmatpush.bf16.msra.mxu0 %v394
    %838 = vmatmul.bf16.gmra.mxu0 %v673
    %v839 = vpop.f32.mrf.mxu0
    %v840 = vadd.f32 %v384, %v839
    %v841 = vpop.f32.mrf.mxu0
    %842 = vdwg.mxu0
    %v843 = vpack.c.bf16 %v827, %v827
    %v844 = vpack.c.bf16 %v840, %v840
    %v846 = vsel %vm229, %v843, 0
    %v849 = vsel %vm233, %v844, 0
    %851 = vmatpush.bf16.msra.mxu0 0
    %852 = vmatpush.bf16.msra.mxu0 0
    %853 = vmatpush.bf16.msra.mxu0 0
    %854 = vmatpush.bf16.msra.mxu0 0
    %855 = vmatpush.bf16.msra.mxu0 0
    %856 = vmatpush.bf16.msra.mxu0 0
    %857 = vmatpush.bf16.msra.mxu0 0
    %858 = vmatpush.bf16.msra.mxu0 %v849
    %859 = vmatmul.bf16.gmra.mxu0 %v846
    %v860 = vpop.f32.mrf.mxu0
    %v861 = vadd.f32 0.0, %v860
    %v862 = vpop.f32.mrf.mxu0
    %863 = vdwg.mxu0
    %v864 = vadd.f32 %v816, %v861
    %v865 = vmul.f32 %v864, 0.25
    %v866 = vadd.f32 %v865, %v96
    %v867 = vsel %vm435, %v866, -inf
    %868 = vmax.xlane.f32.xlu0 %v867
    %v869 = vpop.xlane.xlu0 %868
    %v870 = vsub.f32 %v866, %v869
    %v871 = vmul.f32 %v870, 1.442695
    %v872 = vpow.pop %v871
    %v873 = vsel %vm435, %v872, 0.0
    %874 = vadd.xlane.f32.xlu0 %v873
    %v875 = vpop.xlane.xlu0 %874
    %v876 = vrcp.pop %v875
    %v877 = vmul.f32 %v875, %v876
    %v878 = vsub.f32 1.0, %v877
    %v879 = vmul.f32 %v876, %v878
    %v880 = vadd.f32 %v876, %v879
    %vm881 = vweird.f32 %v875
    %vm882 = vweird.f32 %v876
    %vm883 = vmor %vm881, %vm882
    %v884 = vsel %vm883, %v876, %v880
    %v885 = vand.u32 2147483647, %v875
    %vm886 = vcmp.eq.f32.partialorder %v885, 8.507059e+37
    %v887 = vand.u32 %v875, 2147483648
    %v888 = vor.u32 1.1754944e-38, %v887
    %v889 = vsel %vm886, %v888, %v884
    %v890 = vmul.f32 %v872, %v889
    %891 = vmatpush.bf16.xpose.msra.mxu0 0
    %892 = vmatpush.bf16.xpose.msra.mxu0 0
    %893 = vmatpush.bf16.xpose.msra.mxu0 0
    %894 = vmatpush.bf16.xpose.msra.mxu0 0
    %895 = vmatpush.bf16.xpose.msra.mxu0 0
    %896 = vmatpush.bf16.xpose.msra.mxu0 0
    %897 = vmatpush.bf16.xpose.msra.mxu0 0
    %898 = vmatpush.bf16.xpose.msra.mxu0 %v673
    %899 = vmatmul.bf16.gmra.mxu0 %v468
    %v900 = vpop.f32.mrf.mxu0
    %v901 = vadd.f32 %v465, %v900
    %v902 = vpop.f32.mrf.mxu0
    %903 = vdwg.mxu0
    %s904 = scalar_lea.vmem %s8, 8
    %v905 = vld [vmem:[%s904] sm:$0x3]
    %v906 = vpack.c.bf16 %v901, %v901
    %907 = vmatpush.bf16.xpose.msra.mxu0 0
    %908 = vmatpush.bf16.xpose.msra.mxu0 0
    %909 = vmatpush.bf16.xpose.msra.mxu0 0
    %910 = vmatpush.bf16.xpose.msra.mxu0 0
    %911 = vmatpush.bf16.xpose.msra.mxu0 0
    %912 = vmatpush.bf16.xpose.msra.mxu0 0
    %913 = vmatpush.bf16.xpose.msra.mxu0 0
    %914 = vmatpush.bf16.xpose.msra.mxu0 %v673
    %915 = vmatmul.bf16.gmra.mxu0 %v495
    %v916 = vpop.f32.mrf.mxu0
    %v917 = vadd.f32 %v492, %v916
    %v918 = vpop.f32.mrf.mxu0
    %919 = vdwg.mxu0
    %s920 = scalar_lea.vmem %s8, 10
    %v921 = vld [vmem:[%s920] sm:$0x3]
    %v922 = vpack.c.bf16 %v917, %v917
    %v924 = vsel %vm229, %v922, 0
    %v927 = vsel %vm233, %v921, 0
    %929 = vmatpush.bf16.msra.mxu0 0
    %930 = vmatpush.bf16.msra.mxu0 0
    %931 = vmatpush.bf16.msra.mxu0 0
    %932 = vmatpush.bf16.msra.mxu0 0
    %933 = vmatpush.bf16.msra.mxu0 0
    %934 = vmatpush.bf16.msra.mxu0 0
    %935 = vmatpush.bf16.msra.mxu0 0
    %936 = vmatpush.bf16.msra.mxu0 %v927
    %937 = vmatmul.bf16.gmra.mxu0 %v924
    %v938 = vpop.f32.mrf.mxu0
    %v939 = vadd.f32 0.0, %v938
    %v940 = vpop.f32.mrf.mxu0
    %941 = vdwg.mxu0
    %v943 = vsel %vm229, %v906, 0
    %v946 = vsel %vm233, %v905, 0
    %948 = vmatpush.bf16.msra.mxu0 0
    %949 = vmatpush.bf16.msra.mxu0 0
    %950 = vmatpush.bf16.msra.mxu0 0
    %951 = vmatpush.bf16.msra.mxu0 0
    %952 = vmatpush.bf16.msra.mxu0 0
    %953 = vmatpush.bf16.msra.mxu0 0
    %954 = vmatpush.bf16.msra.mxu0 0
    %955 = vmatpush.bf16.msra.mxu0 %v946
    %956 = vmatmul.bf16.gmra.mxu0 %v943
    %v957 = vpop.f32.mrf.mxu0
    %v958 = vadd.f32 %v939, %v957
    %v959 = vpop.f32.mrf.mxu0
    %960 = vdwg.mxu0
    %961 = vmatpush.bf16.xpose.msra.mxu0 0
    %962 = vmatpush.bf16.xpose.msra.mxu0 0
    %963 = vmatpush.bf16.xpose.msra.mxu0 0
    %964 = vmatpush.bf16.xpose.msra.mxu0 0
    %965 = vmatpush.bf16.xpose.msra.mxu0 0
    %966 = vmatpush.bf16.xpose.msra.mxu0 0
    %967 = vmatpush.bf16.xpose.msra.mxu0 0
    %968 = vmatpush.bf16.xpose.msra.mxu0 %v673
    %969 = vmatmul.bf16.gmra.mxu0 %v561
    %v970 = vpop.f32.mrf.mxu0
    %v971 = vadd.f32 %v558, %v970
    %v972 = vpop.f32.mrf.mxu0
    %973 = vdwg.mxu0
    %s974 = scalar_lea.vmem %s8, 12
    %v975 = vld [vmem:[%s974] sm:$0x3]
    %v976 = vpack.c.bf16 %v971, %v971
    %v978 = vsel %vm229, %v976, 0
    %v981 = vsel %vm233, %v975, 0
    %983 = vmatpush.bf16.msra.mxu0 0
    %984 = vmatpush.bf16.msra.mxu0 0
    %985 = vmatpush.bf16.msra.mxu0 0
    %986 = vmatpush.bf16.msra.mxu0 0
    %987 = vmatpush.bf16.msra.mxu0 0
    %988 = vmatpush.bf16.msra.mxu0 0
    %989 = vmatpush.bf16.msra.mxu0 0
    %990 = vmatpush.bf16.msra.mxu0 %v981
    %991 = vmatmul.bf16.gmra.mxu0 %v978
    %v992 = vpop.f32.mrf.mxu0
    %v993 = vadd.f32 0.0, %v992
    %v994 = vpop.f32.mrf.mxu0
    %995 = vdwg.mxu0
    %v996 = vadd.f32 %v958, %v993
    %997 = vmatpush.bf16.xpose.msra.mxu0 0
    %998 = vmatpush.bf16.xpose.msra.mxu0 0
    %999 = vmatpush.bf16.xpose.msra.mxu0 0
    %1000 = vmatpush.bf16.xpose.msra.mxu0 0
    %1001 = vmatpush.bf16.xpose.msra.mxu0 0
    %1002 = vmatpush.bf16.xpose.msra.mxu0 0
    %1003 = vmatpush.bf16.xpose.msra.mxu0 0
    %1004 = vmatpush.bf16.xpose.msra.mxu0 %v673
    %1005 = vmatmul.bf16.gmra.mxu0 %v609
    %v1006 = vpop.f32.mrf.mxu0
    %v1007 = vadd.f32 %v606, %v1006
    %v1008 = vpop.f32.mrf.mxu0
    %1009 = vdwg.mxu0
    %s1010 = scalar_lea.vmem %s8, 14
    %v1011 = vld [vmem:[%s1010] sm:$0x3]
    %v1012 = vpack.c.bf16 %v1007, %v1007
    %v1014 = vsel %vm229, %v1012, 0
    %v1017 = vsel %vm233, %v1011, 0
    %1019 = vmatpush.bf16.msra.mxu0 0
    %1020 = vmatpush.bf16.msra.mxu0 0
    %1021 = vmatpush.bf16.msra.mxu0 0
    %1022 = vmatpush.bf16.msra.mxu0 0
    %1023 = vmatpush.bf16.msra.mxu0 0
    %1024 = vmatpush.bf16.msra.mxu0 0
    %1025 = vmatpush.bf16.msra.mxu0 0
    %1026 = vmatpush.bf16.msra.mxu0 %v1017
    %1027 = vmatmul.bf16.gmra.mxu0 %v1014
    %v1028 = vpop.f32.mrf.mxu0
    %v1029 = vadd.f32 0.0, %v1028
    %v1030 = vpop.f32.mrf.mxu0
    %1031 = vdwg.mxu0
    %v1032 = vadd.f32 %v996, %v1029
    %v1033 = vpack.c.bf16 %v890, %v890
    %v1034 = vpack.c.bf16 %v1032, %v1032
    %v1036 = vsel %vm435, %v1033, 0
    %v1039 = vsel %vm652, %v1034, 0
    %1041 = vmatpush.bf16.msra.mxu0 0
    %1042 = vmatpush.bf16.msra.mxu0 0
    %1043 = vmatpush.bf16.msra.mxu0 0
    %1044 = vmatpush.bf16.msra.mxu0 0
    %1045 = vmatpush.bf16.msra.mxu0 0
    %1046 = vmatpush.bf16.msra.mxu0 0
    %1047 = vmatpush.bf16.msra.mxu0 0
    %1048 = vmatpush.bf16.msra.mxu0 %v1039
    %1049 = vmatmul.bf16.gmra.mxu0 %v1036
    %v1050 = vpop.f32.mrf.mxu0
    %v1051 = vadd.f32 0.0, %v1050
    %v1052 = vpop.f32.mrf.mxu0
    %1053 = vdwg.mxu0
    %v1054 = vadd.f32 %v669, %v1051
    %v1055 = vld [vmem:[%s10] sm:$0x1]
    %v1056 = vld [vmem:[%s11] sm:$0x1]
    %v1057 = vsel %vm112, %v1054, 0.0
    %1058 = vadd.xlane.f32.xlu0 %v1057
    %v1059 = vpop.xlane.xlu0 %1058
    %v1060 = vrcp.pop 32.0
    %v1061 = vmul.f32 32.0, %v1060
    %v1062 = vsub.f32 1.0, %v1061
    %v1063 = vmul.f32 %v1060, %v1062
    %v1064 = vadd.f32 %v1060, %v1063
    %vm1065 = vweird.f32 %v1060
    %v1066 = vsel %vm1065, %v1060, %v1064
    %v1067 = vmul.f32 %v1059, %v1066
    %v1068 = vsub.f32 %v1054, %v1067
    %v1069 = vmul.f32 %v1068, %v1068
    %v1070 = vsel %vm112, %v1069, 0.0
    %1071 = vadd.xlane.f32.xlu0 %v1070
    %v1072 = vpop.xlane.xlu0 %1071
    %v1073 = vmul.f32 %v1072, %v1066
    %v1074 = vadd.f32 %v1073, 1e-05
    %v1075 = vrsqrt.pop %v1074
    %v1076 = vmul.f32 %v1075, %v1074
    %v1077 = vmul.f32 %v1076, %v1075
    %v1078 = vmul.f32 0.5, %v1077
    %v1079 = vsub.f32 1.5, %v1078
    %v1080 = vmul.f32 %v1075, %v1079
    %vm1081 = vweird.f32 %v1074
    %vm1082 = vweird.f32 %v1075
    %vm1083 = vmor %vm1081, %vm1082
    %v1084 = vsel %vm1083, %v1075, %v1080
    %v1085 = vmul.f32 %v1068, %v1084
    %v1087 = vperm.slane %v1055, 0
    %v1089 = vmul.f32 %v1085, %v1087
    %v1091 = vperm.slane %v1056, 0
    %v1093 = vadd.f32 %v1089, %v1091
    %1094 = vst.msk [vmem:[#allocation2] sm:$0xff] %vm112, %v1093
    %v1095 = vld [vmem:[%s19] sm:$0x1]
    %v1097 = vperm.slane %v1095, 0
    %v1099 = vadd.f32 %v1093, %v1097
    %v1100 = vld [vmem:[%s1] sm:$0xf]
    %v1101 = vpack.c.bf16 %v1100, %v1100
    %v1102 = vld [vmem:[#allocation2] sm:$0xf]
    %v1103 = vpack.c.bf16 %v1102, %v1102
    %v1104 = vld [vmem:[%s12] sm:$0xf]
    %v1105 = vld [vmem:[%s13] sm:$0xff]
    %1107 = vset.pattern.permute.xlu0 0
    %1108 = vperm.xlu0 %1107, %v1105
    %v1109 = vpop.permute.xlu0 %1108
    %v1112 = vsel %vm112, %v1104, 0
    %v1115 = vsel %vm112, %v1101, 0
    %1117 = vmatpush.bf16.xpose.msra.mxu0 0
    %1118 = vmatpush.bf16.xpose.msra.mxu0 0
    %1119 = vmatpush.bf16.xpose.msra.mxu0 0
    %1120 = vmatpush.bf16.xpose.msra.mxu0 0
    %1121 = vmatpush.bf16.xpose.msra.mxu0 0
    %1122 = vmatpush.bf16.xpose.msra.mxu0 0
    %1123 = vmatpush.bf16.xpose.msra.mxu0 0
    %1124 = vmatpush.bf16.xpose.msra.mxu0 %v1115
    %1125 = vmatmul.bf16.gmra.mxu0 %v1112
    %v1126 = vpop.f32.mrf.mxu0
    %v1127 = vadd.f32 %v1109, %v1126
    %v1128 = vpop.f32.mrf.mxu0
    %1129 = vdwg.mxu0
    %v1130 = vld [vmem:[%s14] sm:$0xf]
    %v1131 = vld [vmem:[%s14 + $0x4] sm:$0xf]
    %v1132 = vld [vmem:[%s14 + $0x8] sm:$0xf]
    %v1133 = vld [vmem:[%s14 + $0xc] sm:$0xf]
    %v1134 = vld [vmem:[%s15] sm:$0x1]
    %v1136 = vperm.slane %v1134, 0
    %v1142 = vunpack.c.l.b16 %v1130
    %v1143 = vunpack.c.l.b16 %v1131
    %v1144 = vunpack.c.l.b16 %v1132
    %v1145 = vunpack.c.l.b16 %v1133
    %v1146 = vpack.c.b16 %v1143, %v1142
    %v1147 = vpack.c.b16 %v1145, %v1144
    %1150 = vmatpush.bf16.msra.mxu0 0
    %1151 = vmatpush.bf16.msra.mxu0 0
    %1152 = vmatpush.bf16.msra.mxu0 0
    %1153 = vmatpush.bf16.msra.mxu0 0
    %1154 = vmatpush.bf16.msra.mxu0 0
    %1155 = vmatpush.bf16.msra.mxu0 0
    %1156 = vmatpush.bf16.msra.mxu0 %v1147
    %1157 = vmatpush.bf16.msra.mxu0 %v1146
    %1158 = vmatmul.bf16.gmra.mxu0 %v1115
    %v1159 = vpop.f32.mrf.mxu0
    %v1160 = vadd.f32 %v1136, %v1159
    %v1161 = vpop.f32.mrf.mxu0
    %1162 = vdwg.mxu0
    %v1163 = vpack.c.bf16 %v1127, %v1127
    %v1164 = vpack.c.bf16 %v1160, %v1160
    %s1165 = scalar_lea.vmem %s12, 4
    %v1166 = vld [vmem:[%s1165] sm:$0xf]
    %s1167 = scalar_lea.vmem %s13, 8
    %v1168 = vld [vmem:[%s1167] sm:$0xff]
    %1170 = vset.pattern.permute.xlu0 0
    %1171 = vperm.xlu0 %1170, %v1168
    %v1172 = vpop.permute.xlu0 %1171
    %v1175 = vsel %vm112, %v1166, 0
    %1177 = vmatpush.bf16.xpose.msra.mxu0 0
    %1178 = vmatpush.bf16.xpose.msra.mxu0 0
    %1179 = vmatpush.bf16.xpose.msra.mxu0 0
    %1180 = vmatpush.bf16.xpose.msra.mxu0 0
    %1181 = vmatpush.bf16.xpose.msra.mxu0 0
    %1182 = vmatpush.bf16.xpose.msra.mxu0 0
    %1183 = vmatpush.bf16.xpose.msra.mxu0 0
    %1184 = vmatpush.bf16.xpose.msra.mxu0 %v1115
    %1185 = vmatmul.bf16.gmra.mxu0 %v1175
    %v1186 = vpop.f32.mrf.mxu0
    %v1187 = vadd.f32 %v1172, %v1186
    %v1188 = vpop.f32.mrf.mxu0
    %1189 = vdwg.mxu0
    %s1190 = scalar_lea.vmem %s14, 16
    %v1191 = vld [vmem:[%s1190] sm:$0xf]
    %v1192 = vld [vmem:[%s1190 + $0x4] sm:$0xf]
    %v1193 = vld [vmem:[%s1190 + $0x8] sm:$0xf]
    %v1194 = vld [vmem:[%s1190 + $0xc] sm:$0xf]
    %s1195 = scalar_lea.vmem %s15, 1
    %v1196 = vld [vmem:[%s1195] sm:$0x1]
    %v1198 = vperm.slane %v1196, 0
    %v1204 = vunpack.c.l.b16 %v1191
    %v1205 = vunpack.c.l.b16 %v1192
    %v1206 = vunpack.c.l.b16 %v1193
    %v1207 = vunpack.c.l.b16 %v1194
    %v1208 = vpack.c.b16 %v1205, %v1204
    %v1209 = vpack.c.b16 %v1207, %v1206
    %1212 = vmatpush.bf16.msra.mxu0 0
    %1213 = vmatpush.bf16.msra.mxu0 0
    %1214 = vmatpush.bf16.msra.mxu0 0
    %1215 = vmatpush.bf16.msra.mxu0 0
    %1216 = vmatpush.bf16.msra.mxu0 0
    %1217 = vmatpush.bf16.msra.mxu0 0
    %1218 = vmatpush.bf16.msra.mxu0 %v1209
    %1219 = vmatpush.bf16.msra.mxu0 %v1208
    %1220 = vmatmul.bf16.gmra.mxu0 %v1115
    %v1221 = vpop.f32.mrf.mxu0
    %v1222 = vadd.f32 %v1198, %v1221
    %v1223 = vpop.f32.mrf.mxu0
    %1224 = vdwg.mxu0
    %v1225 = vpack.c.bf16 %v1187, %v1187
    %v1226 = vpack.c.bf16 %v1222, %v1222
    %v1228 = vsel %vm229, %v1225, 0
    %v1231 = vsel %vm233, %v1226, 0
    %1233 = vmatpush.bf16.msra.mxu0 0
    %1234 = vmatpush.bf16.msra.mxu0 0
    %1235 = vmatpush.bf16.msra.mxu0 0
    %1236 = vmatpush.bf16.msra.mxu0 0
    %1237 = vmatpush.bf16.msra.mxu0 0
    %1238 = vmatpush.bf16.msra.mxu0 0
    %1239 = vmatpush.bf16.msra.mxu0 0
    %1240 = vmatpush.bf16.msra.mxu0 %v1231
    %1241 = vmatmul.bf16.gmra.mxu0 %v1228
    %v1242 = vpop.f32.mrf.mxu0
    %v1243 = vadd.f32 0.0, %v1242
    %v1244 = vpop.f32.mrf.mxu0
    %1245 = vdwg.mxu0
    %v1247 = vsel %vm229, %v1163, 0
    %v1250 = vsel %vm233, %v1164, 0
    %1252 = vmatpush.bf16.msra.mxu0 0
    %1253 = vmatpush.bf16.msra.mxu0 0
    %1254 = vmatpush.bf16.msra.mxu0 0
    %1255 = vmatpush.bf16.msra.mxu0 0
    %1256 = vmatpush.bf16.msra.mxu0 0
    %1257 = vmatpush.bf16.msra.mxu0 0
    %1258 = vmatpush.bf16.msra.mxu0 0
    %1259 = vmatpush.bf16.msra.mxu0 %v1250
    %1260 = vmatmul.bf16.gmra.mxu0 %v1247
    %v1261 = vpop.f32.mrf.mxu0
    %v1262 = vadd.f32 %v1243, %v1261
    %v1263 = vpop.f32.mrf.mxu0
    %1264 = vdwg.mxu0
    %s1265 = scalar_lea.vmem %s12, 8
    %v1266 = vld [vmem:[%s1265] sm:$0xf]
    %s1267 = scalar_lea.vmem %s13, 16
    %v1268 = vld [vmem:[%s1267] sm:$0xff]
    %1270 = vset.pattern.permute.xlu0 0
    %1271 = vperm.xlu0 %1270, %v1268
    %v1272 = vpop.permute.xlu0 %1271
    %v1275 = vsel %vm112, %v1266, 0
    %1277 = vmatpush.bf16.xpose.msra.mxu0 0
    %1278 = vmatpush.bf16.xpose.msra.mxu0 0
    %1279 = vmatpush.bf16.xpose.msra.mxu0 0
    %1280 = vmatpush.bf16.xpose.msra.mxu0 0
    %1281 = vmatpush.bf16.xpose.msra.mxu0 0
    %1282 = vmatpush.bf16.xpose.msra.mxu0 0
    %1283 = vmatpush.bf16.xpose.msra.mxu0 0
    %1284 = vmatpush.bf16.xpose.msra.mxu0 %v1115
    %1285 = vmatmul.bf16.gmra.mxu0 %v1275
    %v1286 = vpop.f32.mrf.mxu0
    %v1287 = vadd.f32 %v1272, %v1286
    %v1288 = vpop.f32.mrf.mxu0
    %1289 = vdwg.mxu0
    %s1290 = scalar_lea.vmem %s14, 32
    %v1291 = vld [vmem:[%s1290] sm:$0xf]
    %v1292 = vld [vmem:[%s1290 + $0x4] sm:$0xf]
    %v1293 = vld [vmem:[%s1290 + $0x8] sm:$0xf]
    %v1294 = vld [vmem:[%s1290 + $0xc] sm:$0xf]
    %s1295 = scalar_lea.vmem %s15, 2
    %v1296 = vld [vmem:[%s1295] sm:$0x1]
    %v1298 = vperm.slane %v1296, 0
    %v1304 = vunpack.c.l.b16 %v1291
    %v1305 = vunpack.c.l.b16 %v1292
    %v1306 = vunpack.c.l.b16 %v1293
    %v1307 = vunpack.c.l.b16 %v1294
    %v1308 = vpack.c.b16 %v1305, %v1304
    %v1309 = vpack.c.b16 %v1307, %v1306
    %1312 = vmatpush.bf16.msra.mxu0 0
    %1313 = vmatpush.bf16.msra.mxu0 0
    %1314 = vmatpush.bf16.msra.mxu0 0
    %1315 = vmatpush.bf16.msra.mxu0 0
    %1316 = vmatpush.bf16.msra.mxu0 0
    %1317 = vmatpush.bf16.msra.mxu0 0
    %1318 = vmatpush.bf16.msra.mxu0 %v1309
    %1319 = vmatpush.bf16.msra.mxu0 %v1308
    %1320 = vmatmul.bf16.gmra.mxu0 %v1115
    %v1321 = vpop.f32.mrf.mxu0
    %v1322 = vadd.f32 %v1298, %v1321
    %v1323 = vpop.f32.mrf.mxu0
    %1324 = vdwg.mxu0
    %v1325 = vpack.c.bf16 %v1287, %v1287
    %v1326 = vpack.c.bf16 %v1322, %v1322
    %v1328 = vsel %vm229, %v1325, 0
    %v1331 = vsel %vm233, %v1326, 0
    %1333 = vmatpush.bf16.msra.mxu0 0
    %1334 = vmatpush.bf16.msra.mxu0 0
    %1335 = vmatpush.bf16.msra.mxu0 0
    %1336 = vmatpush.bf16.msra.mxu0 0
    %1337 = vmatpush.bf16.msra.mxu0 0
    %1338 = vmatpush.bf16.msra.mxu0 0
    %1339 = vmatpush.bf16.msra.mxu0 0
    %1340 = vmatpush.bf16.msra.mxu0 %v1331
    %1341 = vmatmul.bf16.gmra.mxu0 %v1328
    %v1342 = vpop.f32.mrf.mxu0
    %v1343 = vadd.f32 0.0, %v1342
    %v1344 = vpop.f32.mrf.mxu0
    %1345 = vdwg.mxu0
    %v1346 = vadd.f32 %v1262, %v1343
    %s1347 = scalar_lea.vmem %s12, 12
    %v1348 = vld [vmem:[%s1347] sm:$0xf]
    %s1349 = scalar_lea.vmem %s13, 24
    %v1350 = vld [vmem:[%s1349] sm:$0xff]
    %1352 = vset.pattern.permute.xlu0 0
    %1353 = vperm.xlu0 %1352, %v1350
    %v1354 = vpop.permute.xlu0 %1353
    %v1357 = vsel %vm112, %v1348, 0
    %1359 = vmatpush.bf16.xpose.msra.mxu0 0
    %1360 = vmatpush.bf16.xpose.msra.mxu0 0
    %1361 = vmatpush.bf16.xpose.msra.mxu0 0
    %1362 = vmatpush.bf16.xpose.msra.mxu0 0
    %1363 = vmatpush.bf16.xpose.msra.mxu0 0
    %1364 = vmatpush.bf16.xpose.msra.mxu0 0
    %1365 = vmatpush.bf16.xpose.msra.mxu0 0
    %1366 = vmatpush.bf16.xpose.msra.mxu0 %v1115
    %1367 = vmatmul.bf16.gmra.mxu0 %v1357
    %v1368 = vpop.f32.mrf.mxu0
    %v1369 = vadd.f32 %v1354, %v1368
    %v1370 = vpop.f32.mrf.mxu0
    %1371 = vdwg.mxu0
    %s1372 = scalar_lea.vmem %s14, 48
    %v1373 = vld [vmem:[%s1372] sm:$0xf]
    %v1374 = vld [vmem:[%s1372 + $0x4] sm:$0xf]
    %v1375 = vld [vmem:[%s1372 + $0x8] sm:$0xf]
    %v1376 = vld [vmem:[%s1372 + $0xc] sm:$0xf]
    %s1377 = scalar_lea.vmem %s15, 3
    %v1378 = vld [vmem:[%s1377] sm:$0x1]
    %v1380 = vperm.slane %v1378, 0
    %v1386 = vunpack.c.l.b16 %v1373
    %v1387 = vunpack.c.l.b16 %v1374
    %v1388 = vunpack.c.l.b16 %v1375
    %v1389 = vunpack.c.l.b16 %v1376
    %v1390 = vpack.c.b16 %v1387, %v1386
    %v1391 = vpack.c.b16 %v1389, %v1388
    %1394 = vmatpush.bf16.msra.mxu0 0
    %1395 = vmatpush.bf16.msra.mxu0 0
    %1396 = vmatpush.bf16.msra.mxu0 0
    %1397 = vmatpush.bf16.msra.mxu0 0
    %1398 = vmatpush.bf16.msra.mxu0 0
    %1399 = vmatpush.bf16.msra.mxu0 0
    %1400 = vmatpush.bf16.msra.mxu0 %v1391
    %1401 = vmatpush.bf16.msra.mxu0 %v1390
    %1402 = vmatmul.bf16.gmra.mxu0 %v1115
    %v1403 = vpop.f32.mrf.mxu0
    %v1404 = vadd.f32 %v1380, %v1403
    %v1405 = vpop.f32.mrf.mxu0
    %1406 = vdwg.mxu0
    %v1407 = vpack.c.bf16 %v1369, %v1369
    %v1408 = vpack.c.bf16 %v1404, %v1404
    %v1410 = vsel %vm229, %v1407, 0
    %v1413 = vsel %vm233, %v1408, 0
    %1415 = vmatpush.bf16.msra.mxu0 0
    %1416 = vmatpush.bf16.msra.mxu0 0
    %1417 = vmatpush.bf16.msra.mxu0 0
    %1418 = vmatpush.bf16.msra.mxu0 0
    %1419 = vmatpush.bf16.msra.mxu0 0
    %1420 = vmatpush.bf16.msra.mxu0 0
    %1421 = vmatpush.bf16.msra.mxu0 0
    %1422 = vmatpush.bf16.msra.mxu0 %v1413
    %1423 = vmatmul.bf16.gmra.mxu0 %v1410
    %v1424 = vpop.f32.mrf.mxu0
    %v1425 = vadd.f32 0.0, %v1424
    %v1426 = vpop.f32.mrf.mxu0
    %1427 = vdwg.mxu0
    %v1428 = vadd.f32 %v1346, %v1425
    %v1429 = vmul.f32 %v1428, 0.25
    %v1430 = vsel %vm435, %v1429, -inf
    %1431 = vmax.xlane.f32.xlu0 %v1430
    %v1432 = vpop.xlane.xlu0 %1431
    %v1433 = vsub.f32 %v1429, %v1432
    %v1434 = vmul.f32 %v1433, 1.442695
    %v1435 = vpow.pop %v1434
    %v1436 = vsel %vm435, %v1435, 0.0
    %1437 = vadd.xlane.f32.xlu0 %v1436
    %v1438 = vpop.xlane.xlu0 %1437
    %v1439 = vrcp.pop %v1438
    %v1440 = vmul.f32 %v1438, %v1439
    %v1441 = vsub.f32 1.0, %v1440
    %v1442 = vmul.f32 %v1439, %v1441
    %v1443 = vadd.f32 %v1439, %v1442
    %vm1444 = vweird.f32 %v1438
    %vm1445 = vweird.f32 %v1439
    %vm1446 = vmor %vm1444, %vm1445
    %v1447 = vsel %vm1446, %v1439, %v1443
    %v1448 = vand.u32 2147483647, %v1438
    %vm1449 = vcmp.eq.f32.partialorder %v1448, 8.507059e+37
    %v1450 = vand.u32 %v1438, 2147483648
    %v1451 = vor.u32 1.1754944e-38, %v1450
    %v1452 = vsel %vm1449, %v1451, %v1447
    %v1453 = vmul.f32 %v1435, %v1452
    %v1454 = vld [vmem:[%s16] sm:$0xf]
    %v1455 = vld [vmem:[%s17] sm:$0xff]
    %1457 = vset.pattern.permute.xlu0 0
    %1458 = vperm.xlu0 %1457, %v1455
    %v1459 = vpop.permute.xlu0 %1458
    %v1462 = vsel %vm112, %v1454, 0
    %v1465 = vsel %vm112, %v1103, 0
    %1467 = vmatpush.bf16.xpose.msra.mxu0 0
    %1468 = vmatpush.bf16.xpose.msra.mxu0 0
    %1469 = vmatpush.bf16.xpose.msra.mxu0 0
    %1470 = vmatpush.bf16.xpose.msra.mxu0 0
    %1471 = vmatpush.bf16.xpose.msra.mxu0 0
    %1472 = vmatpush.bf16.xpose.msra.mxu0 0
    %1473 = vmatpush.bf16.xpose.msra.mxu0 0
    %1474 = vmatpush.bf16.xpose.msra.mxu0 %v1465
    %1475 = vmatmul.bf16.gmra.mxu0 %v1462
    %v1476 = vpop.f32.mrf.mxu0
    %v1477 = vadd.f32 %v1459, %v1476
    %v1478 = vpop.f32.mrf.mxu0
    %1479 = vdwg.mxu0
    %v1480 = vld [vmem:[%s18] sm:$0x3]
    %v1481 = vpack.c.bf16 %v1477, %v1477
    %s1482 = scalar_lea.vmem %s16, 4
    %v1483 = vld [vmem:[%s1482] sm:$0xf]
    %s1484 = scalar_lea.vmem %s17, 8
    %v1485 = vld [vmem:[%s1484] sm:$0xff]
    %1487 = vset.pattern.permute.xlu0 0
    %1488 = vperm.xlu0 %1487, %v1485
    %v1489 = vpop.permute.xlu0 %1488
    %v1492 = vsel %vm112, %v1483, 0
    %1494 = vmatpush.bf16.xpose.msra.mxu0 0
    %1495 = vmatpush.bf16.xpose.msra.mxu0 0
    %1496 = vmatpush.bf16.xpose.msra.mxu0 0
    %1497 = vmatpush.bf16.xpose.msra.mxu0 0
    %1498 = vmatpush.bf16.xpose.msra.mxu0 0
    %1499 = vmatpush.bf16.xpose.msra.mxu0 0
    %1500 = vmatpush.bf16.xpose.msra.mxu0 0
    %1501 = vmatpush.bf16.xpose.msra.mxu0 %v1465
    %1502 = vmatmul.bf16.gmra.mxu0 %v1492
    %v1503 = vpop.f32.mrf.mxu0
    %v1504 = vadd.f32 %v1489, %v1503
    %v1505 = vpop.f32.mrf.mxu0
    %1506 = vdwg.mxu0
    %s1507 = scalar_lea.vmem %s18, 2
    %v1508 = vld [vmem:[%s1507] sm:$0x3]
    %v1509 = vpack.c.bf16 %v1504, %v1504
    %v1511 = vsel %vm229, %v1509, 0
    %v1514 = vsel %vm233, %v1508, 0
    %1516 = vmatpush.bf16.msra.mxu0 0
    %1517 = vmatpush.bf16.msra.mxu0 0
    %1518 = vmatpush.bf16.msra.mxu0 0
    %1519 = vmatpush.bf16.msra.mxu0 0
    %1520 = vmatpush.bf16.msra.mxu0 0
    %1521 = vmatpush.bf16.msra.mxu0 0
    %1522 = vmatpush.bf16.msra.mxu0 0
    %1523 = vmatpush.bf16.msra.mxu0 %v1514
    %1524 = vmatmul.bf16.gmra.mxu0 %v1511
    %v1525 = vpop.f32.mrf.mxu0
    %v1526 = vadd.f32 0.0, %v1525
    %v1527 = vpop.f32.mrf.mxu0
    %1528 = vdwg.mxu0
    %v1530 = vsel %vm229, %v1481, 0
    %v1533 = vsel %vm233, %v1480, 0
    %1535 = vmatpush.bf16.msra.mxu0 0
    %1536 = vmatpush.bf16.msra.mxu0 0
    %1537 = vmatpush.bf16.msra.mxu0 0
    %1538 = vmatpush.bf16.msra.mxu0 0
    %1539 = vmatpush.bf16.msra.mxu0 0
    %1540 = vmatpush.bf16.msra.mxu0 0
    %1541 = vmatpush.bf16.msra.mxu0 0
    %1542 = vmatpush.bf16.msra.mxu0 %v1533
    %1543 = vmatmul.bf16.gmra.mxu0 %v1530
    %v1544 = vpop.f32.mrf.mxu0
    %v1545 = vadd.f32 %v1526, %v1544
    %v1546 = vpop.f32.mrf.mxu0
    %1547 = vdwg.mxu0
    %s1548 = scalar_lea.vmem %s16, 8
    %v1549 = vld [vmem:[%s1548] sm:$0xf]
    %s1550 = scalar_lea.vmem %s17, 16
    %v1551 = vld [vmem:[%s1550] sm:$0xff]
    %1553 = vset.pattern.permute.xlu0 0
    %1554 = vperm.xlu0 %1553, %v1551
    %v1555 = vpop.permute.xlu0 %1554
    %v1558 = vsel %vm112, %v1549, 0
    %1560 = vmatpush.bf16.xpose.msra.mxu0 0
    %1561 = vmatpush.bf16.xpose.msra.mxu0 0
    %1562 = vmatpush.bf16.xpose.msra.mxu0 0
    %1563 = vmatpush.bf16.xpose.msra.mxu0 0
    %1564 = vmatpush.bf16.xpose.msra.mxu0 0
    %1565 = vmatpush.bf16.xpose.msra.mxu0 0
    %1566 = vmatpush.bf16.xpose.msra.mxu0 0
    %1567 = vmatpush.bf16.xpose.msra.mxu0 %v1465
    %1568 = vmatmul.bf16.gmra.mxu0 %v1558
    %v1569 = vpop.f32.mrf.mxu0
    %v1570 = vadd.f32 %v1555, %v1569
    %v1571 = vpop.f32.mrf.mxu0
    %1572 = vdwg.mxu0
    %s1573 = scalar_lea.vmem %s18, 4
    %v1574 = vld [vmem:[%s1573] sm:$0x3]
    %v1575 = vpack.c.bf16 %v1570, %v1570
    %v1577 = vsel %vm229, %v1575, 0
    %v1580 = vsel %vm233, %v1574, 0
    %1582 = vmatpush.bf16.msra.mxu0 0
    %1583 = vmatpush.bf16.msra.mxu0 0
    %1584 = vmatpush.bf16.msra.mxu0 0
    %1585 = vmatpush.bf16.msra.mxu0 0
    %1586 = vmatpush.bf16.msra.mxu0 0
    %1587 = vmatpush.bf16.msra.mxu0 0
    %1588 = vmatpush.bf16.msra.mxu0 0
    %1589 = vmatpush.bf16.msra.mxu0 %v1580
    %1590 = vmatmul.bf16.gmra.mxu0 %v1577
    %v1591 = vpop.f32.mrf.mxu0
    %v1592 = vadd.f32 0.0, %v1591
    %v1593 = vpop.f32.mrf.mxu0
    %1594 = vdwg.mxu0
    %v1595 = vadd.f32 %v1545, %v1592
    %s1596 = scalar_lea.vmem %s16, 12
    %v1597 = vld [vmem:[%s1596] sm:$0xf]
    %s1598 = scalar_lea.vmem %s17, 24
    %v1599 = vld [vmem:[%s1598] sm:$0xff]
    %1601 = vset.pattern.permute.xlu0 0
    %1602 = vperm.xlu0 %1601, %v1599
    %v1603 = vpop.permute.xlu0 %1602
    %v1606 = vsel %vm112, %v1597, 0
    %1608 = vmatpush.bf16.xpose.msra.mxu0 0
    %1609 = vmatpush.bf16.xpose.msra.mxu0 0
    %1610 = vmatpush.bf16.xpose.msra.mxu0 0
    %1611 = vmatpush.bf16.xpose.msra.mxu0 0
    %1612 = vmatpush.bf16.xpose.msra.mxu0 0
    %1613 = vmatpush.bf16.xpose.msra.mxu0 0
    %1614 = vmatpush.bf16.xpose.msra.mxu0 0
    %1615 = vmatpush.bf16.xpose.msra.mxu0 %v1465
    %1616 = vmatmul.bf16.gmra.mxu0 %v1606
    %v1617 = vpop.f32.mrf.mxu0
    %v1618 = vadd.f32 %v1603, %v1617
    %v1619 = vpop.f32.mrf.mxu0
    %1620 = vdwg.mxu0
    %s1621 = scalar_lea.vmem %s18, 6
    %v1622 = vld [vmem:[%s1621] sm:$0x3]
    %v1623 = vpack.c.bf16 %v1618, %v1618
    %v1625 = vsel %vm229, %v1623, 0
    %v1628 = vsel %vm233, %v1622, 0
    %1630 = vmatpush.bf16.msra.mxu0 0
    %1631 = vmatpush.bf16.msra.mxu0 0
    %1632 = vmatpush.bf16.msra.mxu0 0
    %1633 = vmatpush.bf16.msra.mxu0 0
    %1634 = vmatpush.bf16.msra.mxu0 0
    %1635 = vmatpush.bf16.msra.mxu0 0
    %1636 = vmatpush.bf16.msra.mxu0 0
    %1637 = vmatpush.bf16.msra.mxu0 %v1628
    %1638 = vmatmul.bf16.gmra.mxu0 %v1625
    %v1639 = vpop.f32.mrf.mxu0
    %v1640 = vadd.f32 0.0, %v1639
    %v1641 = vpop.f32.mrf.mxu0
    %1642 = vdwg.mxu0
    %v1643 = vadd.f32 %v1595, %v1640
    %v1644 = vpack.c.bf16 %v1453, %v1453
    %v1645 = vpack.c.bf16 %v1643, %v1643
    %v1647 = vsel %vm435, %v1644, 0
    %v1650 = vsel %vm652, %v1645, 0
    %1652 = vmatpush.bf16.msra.mxu0 0
    %1653 = vmatpush.bf16.msra.mxu0 0
    %1654 = vmatpush.bf16.msra.mxu0 0
    %1655 = vmatpush.bf16.msra.mxu0 0
    %1656 = vmatpush.bf16.msra.mxu0 0
    %1657 = vmatpush.bf16.msra.mxu0 0
    %1658 = vmatpush.bf16.msra.mxu0 0
    %1659 = vmatpush.bf16.msra.mxu0 %v1650
    %1660 = vmatmul.bf16.gmra.mxu0 %v1647
    %v1661 = vpop.f32.mrf.mxu0
    %v1662 = vadd.f32 0.0, %v1661
    %v1663 = vpop.f32.mrf.mxu0
    %1664 = vdwg.mxu0
    %v1665 = vadd.f32 %v1099, %v1662
    %v1666 = vld [vmem:[%s1 + $0x4] sm:$0xf]
    %v1667 = vpack.c.bf16 %v1666, %v1666
    %v1668 = vld [vmem:[#allocation2 + $0x4] sm:$0xf]
    %v1669 = vpack.c.bf16 %v1668, %v1668
    %v1671 = vsel %vm112, %v1667, 0
    %1673 = vmatpush.bf16.xpose.msra.mxu0 0
    %1674 = vmatpush.bf16.xpose.msra.mxu0 0
    %1675 = vmatpush.bf16.xpose.msra.mxu0 0
    %1676 = vmatpush.bf16.xpose.msra.mxu0 0
    %1677 = vmatpush.bf16.xpose.msra.mxu0 0
    %1678 = vmatpush.bf16.xpose.msra.mxu0 0
    %1679 = vmatpush.bf16.xpose.msra.mxu0 0
    %1680 = vmatpush.bf16.xpose.msra.mxu0 %v1671
    %1681 = vmatmul.bf16.gmra.mxu0 %v1112
    %v1682 = vpop.f32.mrf.mxu0
    %v1683 = vadd.f32 %v1109, %v1682
    %v1684 = vpop.f32.mrf.mxu0
    %1685 = vdwg.mxu0
    %1686 = vmatpush.bf16.msra.mxu0 0
    %1687 = vmatpush.bf16.msra.mxu0 0
    %1688 = vmatpush.bf16.msra.mxu0 0
    %1689 = vmatpush.bf16.msra.mxu0 0
    %1690 = vmatpush.bf16.msra.mxu0 0
    %1691 = vmatpush.bf16.msra.mxu0 0
    %1692 = vmatpush.bf16.msra.mxu0 %v1147
    %1693 = vmatpush.bf16.msra.mxu0 %v1146
    %1694 = vmatmul.bf16.gmra.mxu0 %v1671
    %v1695 = vpop.f32.mrf.mxu0
    %v1696 = vadd.f32 %v1136, %v1695
    %v1697 = vpop.f32.mrf.mxu0
    %1698 = vdwg.mxu0
    %v1699 = vpack.c.bf16 %v1683, %v1683
    %v1700 = vpack.c.bf16 %v1696, %v1696
    %1701 = vmatpush.bf16.xpose.msra.mxu0 0
    %1702 = vmatpush.bf16.xpose.msra.mxu0 0
    %1703 = vmatpush.bf16.xpose.msra.mxu0 0
    %1704 = vmatpush.bf16.xpose.msra.mxu0 0
    %1705 = vmatpush.bf16.xpose.msra.mxu0 0
    %1706 = vmatpush.bf16.xpose.msra.mxu0 0
    %1707 = vmatpush.bf16.xpose.msra.mxu0 0
    %1708 = vmatpush.bf16.xpose.msra.mxu0 %v1671
    %1709 = vmatmul.bf16.gmra.mxu0 %v1175
    %v1710 = vpop.f32.mrf.mxu0
    %v1711 = vadd.f32 %v1172, %v1710
    %v1712 = vpop.f32.mrf.mxu0
    %1713 = vdwg.mxu0
    %1714 = vmatpush.bf16.msra.mxu0 0
    %1715 = vmatpush.bf16.msra.mxu0 0
    %1716 = vmatpush.bf16.msra.mxu0 0
    %1717 = vmatpush.bf16.msra.mxu0 0
    %1718 = vmatpush.bf16.msra.mxu0 0
    %1719 = vmatpush.bf16.msra.mxu0 0
    %1720 = vmatpush.bf16.msra.mxu0 %v1209
    %1721 = vmatpush.bf16.msra.mxu0 %v1208
    %1722 = vmatmul.bf16.gmra.mxu0 %v1671
    %v1723 = vpop.f32.mrf.mxu0
    %v1724 = vadd.f32 %v1198, %v1723
    %v1725 = vpop.f32.mrf.mxu0
    %1726 = vdwg.mxu0
    %v1727 = vpack.c.bf16 %v1711, %v1711
    %v1728 = vpack.c.bf16 %v1724, %v1724
    %v1730 = vsel %vm229, %v1727, 0
    %v1733 = vsel %vm233, %v1728, 0
    %1735 = vmatpush.bf16.msra.mxu0 0
    %1736 = vmatpush.bf16.msra.mxu0 0
    %1737 = vmatpush.bf16.msra.mxu0 0
    %1738 = vmatpush.bf16.msra.mxu0 0
    %1739 = vmatpush.bf16.msra.mxu0 0
    %1740 = vmatpush.bf16.msra.mxu0 0
    %1741 = vmatpush.bf16.msra.mxu0 0
    %1742 = vmatpush.bf16.msra.mxu0 %v1733
    %1743 = vmatmul.bf16.gmra.mxu0 %v1730
    %v1744 = vpop.f32.mrf.mxu0
    %v1745 = vadd.f32 0.0, %v1744
    %v1746 = vpop.f32.mrf.mxu0
    %1747 = vdwg.mxu0
    %v1749 = vsel %vm229, %v1699, 0
    %v1752 = vsel %vm233, %v1700, 0
    %1754 = vmatpush.bf16.msra.mxu0 0
    %1755 = vmatpush.bf16.msra.mxu0 0
    %1756 = vmatpush.bf16.msra.mxu0 0
    %1757 = vmatpush.bf16.msra.mxu0 0
    %1758 = vmatpush.bf16.msra.mxu0 0
    %1759 = vmatpush.bf16.msra.mxu0 0
    %1760 = vmatpush.bf16.msra.mxu0 0
    %1761 = vmatpush.bf16.msra.mxu0 %v1752
    %1762 = vmatmul.bf16.gmra.mxu0 %v1749
    %v1763 = vpop.f32.mrf.mxu0
    %v1764 = vadd.f32 %v1745, %v1763
    %v1765 = vpop.f32.mrf.mxu0
    %1766 = vdwg.mxu0
    %1767 = vmatpush.bf16.xpose.msra.mxu0 0
    %1768 = vmatpush.bf16.xpose.msra.mxu0 0
    %1769 = vmatpush.bf16.xpose.msra.mxu0 0
    %1770 = vmatpush.bf16.xpose.msra.mxu0 0
    %1771 = vmatpush.bf16.xpose.msra.mxu0 0
    %1772 = vmatpush.bf16.xpose.msra.mxu0 0
    %1773 = vmatpush.bf16.xpose.msra.mxu0 0
    %1774 = vmatpush.bf16.xpose.msra.mxu0 %v1671
    %1775 = vmatmul.bf16.gmra.mxu0 %v1275
    %v1776 = vpop.f32.mrf.mxu0
    %v1777 = vadd.f32 %v1272, %v1776
    %v1778 = vpop.f32.mrf.mxu0
    %1779 = vdwg.mxu0
    %1780 = vmatpush.bf16.msra.mxu0 0
    %1781 = vmatpush.bf16.msra.mxu0 0
    %1782 = vmatpush.bf16.msra.mxu0 0
    %1783 = vmatpush.bf16.msra.mxu0 0
    %1784 = vmatpush.bf16.msra.mxu0 0
    %1785 = vmatpush.bf16.msra.mxu0 0
    %1786 = vmatpush.bf16.msra.mxu0 %v1309
    %1787 = vmatpush.bf16.msra.mxu0 %v1308
    %1788 = vmatmul.bf16.gmra.mxu0 %v1671
    %v1789 = vpop.f32.mrf.mxu0
    %v1790 = vadd.f32 %v1298, %v1789
    %v1791 = vpop.f32.mrf.mxu0
    %1792 = vdwg.mxu0
    %v1793 = vpack.c.bf16 %v1777, %v1777
    %v1794 = vpack.c.bf16 %v1790, %v1790
    %v1796 = vsel %vm229, %v1793, 0
    %v1799 = vsel %vm233, %v1794, 0
    %1801 = vmatpush.bf16.msra.mxu0 0
    %1802 = vmatpush.bf16.msra.mxu0 0
    %1803 = vmatpush.bf16.msra.mxu0 0
    %1804 = vmatpush.bf16.msra.mxu0 0
    %1805 = vmatpush.bf16.msra.mxu0 0
    %1806 = vmatpush.bf16.msra.mxu0 0
    %1807 = vmatpush.bf16.msra.mxu0 0
    %1808 = vmatpush.bf16.msra.mxu0 %v1799
    %1809 = vmatmul.bf16.gmra.mxu0 %v1796
    %v1810 = vpop.f32.mrf.mxu0
    %v1811 = vadd.f32 0.0, %v1810
    %v1812 = vpop.f32.mrf.mxu0
    %1813 = vdwg.mxu0
    %v1814 = vadd.f32 %v1764, %v1811
    %1815 = vmatpush.bf16.xpose.msra.mxu0 0
    %1816 = vmatpush.bf16.xpose.msra.mxu0 0
    %1817 = vmatpush.bf16.xpose.msra.mxu0 0
    %1818 = vmatpush.bf16.xpose.msra.mxu0 0
    %1819 = vmatpush.bf16.xpose.msra.mxu0 0
    %1820 = vmatpush.bf16.xpose.msra.mxu0 0
    %1821 = vmatpush.bf16.xpose.msra.mxu0 0
    %1822 = vmatpush.bf16.xpose.msra.mxu0 %v1671
    %1823 = vmatmul.bf16.gmra.mxu0 %v1357
    %v1824 = vpop.f32.mrf.mxu0
    %v1825 = vadd.f32 %v1354, %v1824
    %v1826 = vpop.f32.mrf.mxu0
    %1827 = vdwg.mxu0
    %1828 = vmatpush.bf16.msra.mxu0 0
    %1829 = vmatpush.bf16.msra.mxu0 0
    %1830 = vmatpush.bf16.msra.mxu0 0
    %1831 = vmatpush.bf16.msra.mxu0 0
    %1832 = vmatpush.bf16.msra.mxu0 0
    %1833 = vmatpush.bf16.msra.mxu0 0
    %1834 = vmatpush.bf16.msra.mxu0 %v1391
    %1835 = vmatpush.bf16.msra.mxu0 %v1390
    %1836 = vmatmul.bf16.gmra.mxu0 %v1671
    %v1837 = vpop.f32.mrf.mxu0
    %v1838 = vadd.f32 %v1380, %v1837
    %v1839 = vpop.f32.mrf.mxu0
    %1840 = vdwg.mxu0
    %v1841 = vpack.c.bf16 %v1825, %v1825
    %v1842 = vpack.c.bf16 %v1838, %v1838
    %v1844 = vsel %vm229, %v1841, 0
    %v1847 = vsel %vm233, %v1842, 0
    %1849 = vmatpush.bf16.msra.mxu0 0
    %1850 = vmatpush.bf16.msra.mxu0 0
    %1851 = vmatpush.bf16.msra.mxu0 0
    %1852 = vmatpush.bf16.msra.mxu0 0
    %1853 = vmatpush.bf16.msra.mxu0 0
    %1854 = vmatpush.bf16.msra.mxu0 0
    %1855 = vmatpush.bf16.msra.mxu0 0
    %1856 = vmatpush.bf16.msra.mxu0 %v1847
    %1857 = vmatmul.bf16.gmra.mxu0 %v1844
    %v1858 = vpop.f32.mrf.mxu0
    %v1859 = vadd.f32 0.0, %v1858
    %v1860 = vpop.f32.mrf.mxu0
    %1861 = vdwg.mxu0
    %v1862 = vadd.f32 %v1814, %v1859
    %v1863 = vmul.f32 %v1862, 0.25
    %v1864 = vsel %vm435, %v1863, -inf
    %1865 = vmax.xlane.f32.xlu0 %v1864
    %v1866 = vpop.xlane.xlu0 %1865
    %v1867 = vsub.f32 %v1863, %v1866
    %v1868 = vmul.f32 %v1867, 1.442695
    %v1869 = vpow.pop %v1868
    %v1870 = vsel %vm435, %v1869, 0.0
    %1871 = vadd.xlane.f32.xlu0 %v1870
    %v1872 = vpop.xlane.xlu0 %1871
    %v1873 = vrcp.pop %v1872
    %v1874 = vmul.f32 %v1872, %v1873
    %v1875 = vsub.f32 1.0, %v1874
    %v1876 = vmul.f32 %v1873, %v1875
    %v1877 = vadd.f32 %v1873, %v1876
    %vm1878 = vweird.f32 %v1872
    %vm1879 = vweird.f32 %v1873
    %vm1880 = vmor %vm1878, %vm1879
    %v1881 = vsel %vm1880, %v1873, %v1877
    %v1882 = vand.u32 2147483647, %v1872
    %vm1883 = vcmp.eq.f32.partialorder %v1882, 8.507059e+37
    %v1884 = vand.u32 %v1872, 2147483648
    %v1885 = vor.u32 1.1754944e-38, %v1884
    %v1886 = vsel %vm1883, %v1885, %v1881
    %v1887 = vmul.f32 %v1869, %v1886
    %v1889 = vsel %vm112, %v1669, 0
    %1891 = vmatpush.bf16.xpose.msra.mxu0 0
    %1892 = vmatpush.bf16.xpose.msra.mxu0 0
    %1893 = vmatpush.bf16.xpose.msra.mxu0 0
    %1894 = vmatpush.bf16.xpose.msra.mxu0 0
    %1895 = vmatpush.bf16.xpose.msra.mxu0 0
    %1896 = vmatpush.bf16.xpose.msra.mxu0 0
    %1897 = vmatpush.bf16.xpose.msra.mxu0 0
    %1898 = vmatpush.bf16.xpose.msra.mxu0 %v1889
    %1899 = vmatmul.bf16.gmra.mxu0 %v1462
    %v1900 = vpop.f32.mrf.mxu0
    %v1901 = vadd.f32 %v1459, %v1900
    %v1902 = vpop.f32.mrf.mxu0
    %1903 = vdwg.mxu0
    %s1904 = scalar_lea.vmem %s18, 8
    %v1905 = vld [vmem:[%s1904] sm:$0x3]
    %v1906 = vpack.c.bf16 %v1901, %v1901
    %1907 = vmatpush.bf16.xpose.msra.mxu0 0
    %1908 = vmatpush.bf16.xpose.msra.mxu0 0
    %1909 = vmatpush.bf16.xpose.msra.mxu0 0
    %1910 = vmatpush.bf16.xpose.msra.mxu0 0
    %1911 = vmatpush.bf16.xpose.msra.mxu0 0
    %1912 = vmatpush.bf16.xpose.msra.mxu0 0
    %1913 = vmatpush.bf16.xpose.msra.mxu0 0
    %1914 = vmatpush.bf16.xpose.msra.mxu0 %v1889
    %1915 = vmatmul.bf16.gmra.mxu0 %v1492
    %v1916 = vpop.f32.mrf.mxu0
    %v1917 = vadd.f32 %v1489, %v1916
    %v1918 = vpop.f32.mrf.mxu0
    %1919 = vdwg.mxu0
    %s1920 = scalar_lea.vmem %s18, 10
    %v1921 = vld [vmem:[%s1920] sm:$0x3]
    %v1922 = vpack.c.bf16 %v1917, %v1917
    %v1924 = vsel %vm229, %v1922, 0
    %v1927 = vsel %vm233, %v1921, 0
    %1929 = vmatpush.bf16.msra.mxu0 0
    %1930 = vmatpush.bf16.msra.mxu0 0
    %1931 = vmatpush.bf16.msra.mxu0 0
    %1932 = vmatpush.bf16.msra.mxu0 0
    %1933 = vmatpush.bf16.msra.mxu0 0
    %1934 = vmatpush.bf16.msra.mxu0 0
    %1935 = vmatpush.bf16.msra.mxu0 0
    %1936 = vmatpush.bf16.msra.mxu0 %v1927
    %1937 = vmatmul.bf16.gmra.mxu0 %v1924
    %v1938 = vpop.f32.mrf.mxu0
    %v1939 = vadd.f32 0.0, %v1938
    %v1940 = vpop.f32.mrf.mxu0
    %1941 = vdwg.mxu0
    %v1943 = vsel %vm229, %v1906, 0
    %v1946 = vsel %vm233, %v1905, 0
    %1948 = vmatpush.bf16.msra.mxu0 0
    %1949 = vmatpush.bf16.msra.mxu0 0
    %1950 = vmatpush.bf16.msra.mxu0 0
    %1951 = vmatpush.bf16.msra.mxu0 0
    %1952 = vmatpush.bf16.msra.mxu0 0
    %1953 = vmatpush.bf16.msra.mxu0 0
    %1954 = vmatpush.bf16.msra.mxu0 0
    %1955 = vmatpush.bf16.msra.mxu0 %v1946
    %1956 = vmatmul.bf16.gmra.mxu0 %v1943
    %v1957 = vpop.f32.mrf.mxu0
    %v1958 = vadd.f32 %v1939, %v1957
    %v1959 = vpop.f32.mrf.mxu0
    %1960 = vdwg.mxu0
    %1961 = vmatpush.bf16.xpose.msra.mxu0 0
    %1962 = vmatpush.bf16.xpose.msra.mxu0 0
    %1963 = vmatpush.bf16.xpose.msra.mxu0 0
    %1964 = vmatpush.bf16.xpose.msra.mxu0 0
    %1965 = vmatpush.bf16.xpose.msra.mxu0 0
    %1966 = vmatpush.bf16.xpose.msra.mxu0 0
    %1967 = vmatpush.bf16.xpose.msra.mxu0 0
    %1968 = vmatpush.bf16.xpose.msra.mxu0 %v1889
    %1969 = vmatmul.bf16.gmra.mxu0 %v1558
    %v1970 = vpop.f32.mrf.mxu0
    %v1971 = vadd.f32 %v1555, %v1970
    %v1972 = vpop.f32.mrf.mxu0
    %1973 = vdwg.mxu0
    %s1974 = scalar_lea.vmem %s18, 12
    %v1975 = vld [vmem:[%s1974] sm:$0x3]
    %v1976 = vpack.c.bf16 %v1971, %v1971
    %v1978 = vsel %vm229, %v1976, 0
    %v1981 = vsel %vm233, %v1975, 0
    %1983 = vmatpush.bf16.msra.mxu0 0
    %1984 = vmatpush.bf16.msra.mxu0 0
    %1985 = vmatpush.bf16.msra.mxu0 0
    %1986 = vmatpush.bf16.msra.mxu0 0
    %1987 = vmatpush.bf16.msra.mxu0 0
    %1988 = vmatpush.bf16.msra.mxu0 0
    %1989 = vmatpush.bf16.msra.mxu0 0
    %1990 = vmatpush.bf16.msra.mxu0 %v1981
    %1991 = vmatmul.bf16.gmra.mxu0 %v1978
    %v1992 = vpop.f32.mrf.mxu0
    %v1993 = vadd.f32 0.0, %v1992
    %v1994 = vpop.f32.mrf.mxu0
    %1995 = vdwg.mxu0
    %v1996 = vadd.f32 %v1958, %v1993
    %1997 = vmatpush.bf16.xpose.msra.mxu0 0
    %1998 = vmatpush.bf16.xpose.msra.mxu0 0
    %1999 = vmatpush.bf16.xpose.msra.mxu0 0
    %2000 = vmatpush.bf16.xpose.msra.mxu0 0
    %2001 = vmatpush.bf16.xpose.msra.mxu0 0
    %2002 = vmatpush.bf16.xpose.msra.mxu0 0
    %2003 = vmatpush.bf16.xpose.msra.mxu0 0
    %2004 = vmatpush.bf16.xpose.msra.mxu0 %v1889
    %2005 = vmatmul.bf16.gmra.mxu0 %v1606
    %v2006 = vpop.f32.mrf.mxu0
    %v2007 = vadd.f32 %v1603, %v2006
    %v2008 = vpop.f32.mrf.mxu0
    %2009 = vdwg.mxu0
    %s2010 = scalar_lea.vmem %s18, 14
    %v2011 = vld [vmem:[%s2010] sm:$0x3]
    %v2012 = vpack.c.bf16 %v2007, %v2007
    %v2014 = vsel %vm229, %v2012, 0
    %v2017 = vsel %vm233, %v2011, 0
    %2019 = vmatpush.bf16.msra.mxu0 0
    %2020 = vmatpush.bf16.msra.mxu0 0
    %2021 = vmatpush.bf16.msra.mxu0 0
    %2022 = vmatpush.bf16.msra.mxu0 0
    %2023 = vmatpush.bf16.msra.mxu0 0
    %2024 = vmatpush.bf16.msra.mxu0 0
    %2025 = vmatpush.bf16.msra.mxu0 0
    %2026 = vmatpush.bf16.msra.mxu0 %v2017
    %2027 = vmatmul.bf16.gmra.mxu0 %v2014
    %v2028 = vpop.f32.mrf.mxu0
    %v2029 = vadd.f32 0.0, %v2028
    %v2030 = vpop.f32.mrf.mxu0
    %2031 = vdwg.mxu0
    %v2032 = vadd.f32 %v1996, %v2029
    %v2033 = vpack.c.bf16 %v1887, %v1887
    %v2034 = vpack.c.bf16 %v2032, %v2032
    %v2036 = vsel %vm435, %v2033, 0
    %v2039 = vsel %vm652, %v2034, 0
    %2041 = vmatpush.bf16.msra.mxu0 0
    %2042 = vmatpush.bf16.msra.mxu0 0
    %2043 = vmatpush.bf16.msra.mxu0 0
    %2044 = vmatpush.bf16.msra.mxu0 0
    %2045 = vmatpush.bf16.msra.mxu0 0
    %2046 = vmatpush.bf16.msra.mxu0 0
    %2047 = vmatpush.bf16.msra.mxu0 0
    %2048 = vmatpush.bf16.msra.mxu0 %v2039
    %2049 = vmatmul.bf16.gmra.mxu0 %v2036
    %v2050 = vpop.f32.mrf.mxu0
    %v2051 = vadd.f32 0.0, %v2050
    %v2052 = vpop.f32.mrf.mxu0
    %2053 = vdwg.mxu0
    %v2054 = vadd.f32 %v1665, %v2051
    %v2055 = vld [vmem:[%s20] sm:$0x1]
    %v2056 = vld [vmem:[%s21] sm:$0x1]
    %v2057 = vsel %vm112, %v2054, 0.0
    %2058 = vadd.xlane.f32.xlu0 %v2057
    %v2059 = vpop.xlane.xlu0 %2058
    %v2060 = vmul.f32 %v2059, %v1066
    %v2061 = vsub.f32 %v2054, %v2060
    %v2062 = vmul.f32 %v2061, %v2061
    %v2063 = vsel %vm112, %v2062, 0.0
    %2064 = vadd.xlane.f32.xlu0 %v2063
    %v2065 = vpop.xlane.xlu0 %2064
    %v2066 = vmul.f32 %v2065, %v1066
    %v2067 = vadd.f32 %v2066, 1e-05
    %v2068 = vrsqrt.pop %v2067
    %v2069 = vmul.f32 %v2068, %v2067
    %v2070 = vmul.f32 %v2069, %v2068
    %v2071 = vmul.f32 0.5, %v2070
    %v2072 = vsub.f32 1.5, %v2071
    %v2073 = vmul.f32 %v2068, %v2072
    %vm2074 = vweird.f32 %v2067
    %vm2075 = vweird.f32 %v2068
    %vm2076 = vmor %vm2074, %vm2075
    %v2077 = vsel %vm2076, %v2068, %v2073
    %v2078 = vmul.f32 %v2061, %v2077
    %v2080 = vperm.slane %v2055, 0
    %v2082 = vmul.f32 %v2078, %v2080
    %v2084 = vperm.slane %v2056, 0
    %v2086 = vadd.f32 %v2082, %v2084
    %v2087 = vld [vmem:[%s22] sm:$0xf]
    %v2088 = vld [vmem:[%s22 + $0x4] sm:$0xf]
    %v2089 = vld [vmem:[%s22 + $0x8] sm:$0xf]
    %v2090 = vld [vmem:[%s22 + $0xc] sm:$0xf]
    %v2091 = vpack.c.bf16 %v2086, %v2086
    %v2092 = vld [vmem:[%s23] sm:$0x1]
    %v2094 = vperm.slane %v2092, 0
    %v2100 = vunpack.c.l.b16 %v2087
    %v2101 = vunpack.c.l.b16 %v2088
    %v2102 = vunpack.c.l.b16 %v2089
    %v2103 = vunpack.c.l.b16 %v2090
    %v2104 = vpack.c.b16 %v2101, %v2100
    %v2105 = vpack.c.b16 %v2103, %v2102
    %v2109 = vsel %vm112, %v2091, 0
    %2111 = vmatpush.bf16.msra.mxu0 0
    %2112 = vmatpush.bf16.msra.mxu0 0
    %2113 = vmatpush.bf16.msra.mxu0 0
    %2114 = vmatpush.bf16.msra.mxu0 0
    %2115 = vmatpush.bf16.msra.mxu0 0
    %2116 = vmatpush.bf16.msra.mxu0 0
    %2117 = vmatpush.bf16.msra.mxu0 %v2105
    %2118 = vmatpush.bf16.msra.mxu0 %v2104
    %2119 = vmatmul.bf16.gmra.mxu0 %v2109
    %v2120 = vpop.f32.mrf.mxu0
    %v2121 = vadd.f32 %v2094, %v2120
    %v2122 = vpop.f32.mrf.mxu0
    %2123 = vdwg.mxu0
    %v2124 = vmax.f32 %v2121, 0.0
    %v2125 = vld [vmem:[%s24] sm:$0xf]
    %v2126 = vld [vmem:[%s24 + $0x4] sm:$0xf]
    %v2127 = vld [vmem:[%s24 + $0x8] sm:$0xf]
    %v2128 = vld [vmem:[%s24 + $0xc] sm:$0xf]
    %v2129 = vld [vmem:[%s24 + $0x10] sm:$0xf]
    %v2130 = vld [vmem:[%s24 + $0x14] sm:$0xf]
    %v2131 = vld [vmem:[%s24 + $0x18] sm:$0xf]
    %v2132 = vld [vmem:[%s24 + $0x1c] sm:$0xf]
    %v2133 = vpack.c.bf16 %v2124, %v2124
    %v2134 = vld [vmem:[%s25] sm:$0x1]
    %v2136 = vperm.slane %v2134, 0
    %v2146 = vunpack.c.l.b16 %v2125
    %v2147 = vunpack.c.l.b16 %v2126
    %v2148 = vunpack.c.l.b16 %v2127
    %v2149 = vunpack.c.l.b16 %v2128
    %v2150 = vunpack.c.l.b16 %v2129
    %v2151 = vunpack.c.l.b16 %v2130
    %v2152 = vunpack.c.l.b16 %v2131
    %v2153 = vunpack.c.l.b16 %v2132
    %v2154 = vpack.c.b16 %v2147, %v2146
    %v2155 = vpack.c.b16 %v2149, %v2148
    %v2156 = vpack.c.b16 %v2151, %v2150
    %v2157 = vpack.c.b16 %v2153, %v2152
    %vm2162 = vcmask 523264
    %v2164 = vsel %vm2162, %v2133, 0
    %2166 = vmatpush.bf16.msra.mxu0 0
    %2167 = vmatpush.bf16.msra.mxu0 0
    %2168 = vmatpush.bf16.msra.mxu0 0
    %2169 = vmatpush.bf16.msra.mxu0 0
    %2170 = vmatpush.bf16.msra.mxu0 %v2157
    %2171 = vmatpush.bf16.msra.mxu0 %v2156
    %2172 = vmatpush.bf16.msra.mxu0 %v2155
    %2173 = vmatpush.bf16.msra.mxu0 %v2154
    %2174 = vmatmul.bf16.gmra.mxu0 %v2164
    %v2175 = vpop.f32.mrf.mxu0
    %v2176 = vadd.f32 %v2136, %v2175
    %v2177 = vpop.f32.mrf.mxu0
    %2178 = vdwg.mxu0
    %v2179 = vadd.f32 %v2176, %v2086
    %v2180 = vld [vmem:[%s26] sm:$0x1]
    %v2181 = vld [vmem:[%s27] sm:$0x1]
    %v2182 = vsel %vm112, %v2179, 0.0
    %2183 = vadd.xlane.f32.xlu0 %v2182
    %v2184 = vpop.xlane.xlu0 %2183
    %v2185 = vmul.f32 %v2184, %v1066
    %v2186 = vsub.f32 %v2179, %v2185
    %v2187 = vmul.f32 %v2186, %v2186
    %v2188 = vsel %vm112, %v2187, 0.0
    %2189 = vadd.xlane.f32.xlu0 %v2188
    %v2190 = vpop.xlane.xlu0 %2189
    %v2191 = vmul.f32 %v2190, %v1066
    %v2192 = vadd.f32 %v2191, 1e-05
    %v2193 = vrsqrt.pop %v2192
    %v2194 = vmul.f32 %v2193, %v2192
    %v2195 = vmul.f32 %v2194, %v2193
    %v2196 = vmul.f32 0.5, %v2195
    %v2197 = vsub.f32 1.5, %v2196
    %v2198 = vmul.f32 %v2193, %v2197
    %vm2199 = vweird.f32 %v2192
    %vm2200 = vweird.f32 %v2193
    %vm2201 = vmor %vm2199, %vm2200
    %v2202 = vsel %vm2201, %v2193, %v2198
    %v2203 = vmul.f32 %v2186, %v2202
    %v2205 = vperm.slane %v2180, 0
    %v2207 = vmul.f32 %v2203, %v2205
    %v2209 = vperm.slane %v2181, 0
    %v2211 = vadd.f32 %v2207, %v2209
    %2212 = vst.msk [vmem:[#allocation3] sm:$0xff] %vm112, %v2211
    // Predicated region
    $region114: #{decoder_layer_forward.1} parent=1 // pred_check
      _
    $region115: #{decoder_layer_forward.1} parent=1 // pred_check_branch
      %2214 = sbr.rel (0) target = $region117
    $region116: #{decoder_layer_forward.1} parent=1 // pred_region
      %2216 = vsyncadd [#allocation4], 0
      %s2218 = sshll.u32 [#allocation3], 4
      %s2219 = int_to_ptr.vmem [resolvable:$true] %s2218
      %s2220 = sshll.u32 %s28, 4
      %s2221 = int_to_ptr.hbm [resolvable:$true] %s2220
      %2223 = dma.vmem_to_hbm [thread:$0]  %s2219, 128, %s2221, [#allocation4]
    $region117: #{decoder_layer_forward.1} parent=1 // pred_fallthru
      _
    // Predicated region
    $region118: #{decoder_layer_forward.1} parent=1 // pred_check
      _
    $region119: #{decoder_layer_forward.1} parent=1 // pred_check_branch
      %2225 = sbr.rel (0) target = $region121
    $region120: #{decoder_layer_forward.1} parent=1 // pred_region
      %2227 = dma.done [#allocation4], 128
    $region121: #{decoder_layer_forward.1} parent=1 // pred_fallthru
      _
    %2228 = vsyncpa [#allocation4], 1

</llo_original>
